<compile_context>
chip_gen: v6e
topology: v6e:2x2x1
jax: 0.10.0
libtpu: 0.0.40
codegen_flags: <defaults>
</compile_context>

<pallas_src>
import numpy as np
import jax
import jax.numpy as jnp
from jax import lax
from jax.experimental import pallas as pl
from jax.experimental.pallas import tpu as pltpu

# ---------------------------------------------------------------------------
# Static network dimensions (LeNet on 3x32x32 input, as implied by fc1 = 16*5*5).
# ---------------------------------------------------------------------------
K = 5                      # conv kernel size
C0, H0, W0 = 3, 32, 32     # network input
C1, H1, W1 = 6, 28, 28     # conv1 output
P1H, P1W = 14, 14          # pool1 output
C2, H2, W2 = 16, 10, 10    # conv2 output
P2H, P2W = 5, 5            # pool2 output
F1_IN, F1_OUT = 16 * 5 * 5, 120
F2_OUT, F3_OUT = 84, 10


# ---------------------------------------------------------------------------
# The single fused kernel
# ---------------------------------------------------------------------------
def _lenet_kernel(x_ref,
                  a1_ref, b1_ref, r1_ref, s1_ref,
                  a2_ref, b2_ref, r2_ref, s2_ref,
                  wf1_ref, bf1_ref, wf2_ref, bf2_ref, wf3_ref, bf3_ref,
                  out_ref,
                  c1_ref, p1_ref, c2_ref, p2_ref, flat_ref):
    f32 = jnp.float32
    bf16 = jnp.bfloat16
    n_batch = x_ref.shape[0]

    for n in range(n_batch):                       # static unroll (tiny batch)
        # ---- conv1 + bias + ReLU: K banded matmuls (one per kernel row) ----
        acc = jnp.zeros((H1, W1 * C1), f32)
        for ky in range(K):
            lhs = x_ref[n, ky:ky + H1, :].astype(bf16)          # (28, 96)
            acc = acc + jnp.dot(lhs, a1_ref[ky],
                                preferred_element_type=f32)      # (28, 168)
        c1_ref[...] = jnp.maximum(acc + b1_ref[...], 0.0)

        # ---- 2x2 max-pool #1: max of 4 shifted windows, then select ----
        vcols = (W1 - 1) * C1                                    # 162
        v = jnp.maximum(
            jnp.maximum(c1_ref[0:H1 - 1, 0:vcols],
                        c1_ref[0:H1 - 1, C1:W1 * C1]),
            jnp.maximum(c1_ref[1:H1, 0:vcols],
                        c1_ref[1:H1, C1:W1 * C1]))               # (27, 162)
        p1_ref[...] = jnp.dot(
            jnp.dot(r1_ref[...], v, preferred_element_type=f32),
            s1_ref[...], preferred_element_type=f32)             # (14, 84)

        # ---- conv2 + bias + ReLU ----
        acc = jnp.zeros((H2, W2 * C2), f32)
        for ky in range(K):
            lhs = p1_ref[ky:ky + H2, :].astype(bf16)             # (10, 84)
            acc = acc + jnp.dot(lhs, a2_ref[ky],
                                preferred_element_type=f32)      # (10, 160)
        c2_ref[...] = jnp.maximum(acc + b2_ref[...], 0.0)

        # ---- 2x2 max-pool #2 ----
        vcols = (W2 - 1) * C2                                    # 144
        v = jnp.maximum(
            jnp.maximum(c2_ref[0:H2 - 1, 0:vcols],
                        c2_ref[0:H2 - 1, C2:W2 * C2]),
            jnp.maximum(c2_ref[1:H2, 0:vcols],
                        c2_ref[1:H2, C2:W2 * C2]))               # (9, 144)
        p2_ref[...] = jnp.dot(
            jnp.dot(r2_ref[...], v, preferred_element_type=f32),
            s2_ref[...], preferred_element_type=f32)             # (5, 80)

        # ---- flatten into this batch element's fc1 input row ----
        row_w = P2W * C2                                         # 80
        for h in range(P2H):
            flat_ref[n:n + 1, h * row_w:(h + 1) * row_w] = p2_ref[h:h + 1, :]

    # ---- fully-connected stack, batched over all rows at once ----
    h1 = jnp.maximum(
        jnp.dot(flat_ref[...].astype(bf16), wf1_ref[...],
                preferred_element_type=f32) + bf1_ref[...], 0.0)  # (N, 120)
    h2 = jnp.maximum(
        jnp.dot(h1.astype(bf16), wf2_ref[...],
                preferred_element_type=f32) + bf2_ref[...], 0.0)  # (N, 84)
    out_ref[...] = (jnp.dot(h2.astype(bf16), wf3_ref[...],
                            preferred_element_type=f32) + bf3_ref[...])


# ---------------------------------------------------------------------------
# Host-side, parameter-only preprocessing (runs once; no activation work)
# ---------------------------------------------------------------------------
def _banded_conv_mats(w, in_w, out_w):
    """w: (Cout, Cin, K, K) PyTorch conv weight.  Returns A of shape
    (K, in_w*Cin, out_w*Cout) with
       A[ky, (ow+kx)*Cin + ci, ow*Cout + co] = w[co, ci, ky, kx],
    so that conv_out[oh, ow*Cout+co] = sum_ky X[oh+ky, :] @ A[ky]
    for activations laid out as X[h, w*Cin + ci]."""
    cout, cin, k, _ = w.shape
    a = np.zeros((k, in_w * cin, out_w * cout), np.float32)
    for ky in range(k):
        for kx in range(k):
            blk = w[:, :, ky, kx].T                              # (Cin, Cout)
            for ow in range(out_w):
                iw = ow + kx
                a[ky, iw * cin:(iw + 1) * cin, ow * cout:(ow + 1) * cout] = blk
    return a


def _pool_select_mats(oh, ow, c):
    """0/1 matrices R (oh//2, oh-1) and S ((ow-1)*c, (ow//2)*c) that pick even
    rows / even (w,c)-blocks out of the 4-window max (= 2x2/2 max pooling)."""
    r = np.zeros((oh // 2, oh - 1), np.float32)
    for i in range(oh // 2):
        r[i, 2 * i] = 1.0
    s = np.zeros(((ow - 1) * c, (ow // 2) * c), np.float32)
    for p in range(ow // 2):
        for cc in range(c):
            s[2 * p * c + cc, p * c + cc] = 1.0
    return r, s


def pack_params(params):
    """Banded conv matrices, tiled biases, pooling selection matrices and the
    fc1 row permutation (absorbs torch.flatten's NCHW order). bf16 weights."""
    w1 = np.asarray(params["w1"], np.float32)
    b1 = np.asarray(params["b1"], np.float32)
    w2 = np.asarray(params["w2"], np.float32)
    b2 = np.asarray(params["b2"], np.float32)
    fw1 = np.asarray(params["fw1"], np.float32)    # (400,120), rows in torch-flatten order
    fb1 = np.asarray(params["fb1"], np.float32)
    fw2 = np.asarray(params["fw2"], np.float32)
    fb2 = np.asarray(params["fb2"], np.float32)
    fw3 = np.asarray(params["fw3"], np.float32)
    fb3 = np.asarray(params["fb3"], np.float32)

    r1, s1 = _pool_select_mats(H1, W1, C1)
    r2, s2 = _pool_select_mats(H2, W2, C2)

    # kernel flat index h*80 + w*16 + co  <->  torch flatten index co*25 + h*5 + w
    perm = np.zeros((F1_IN,), np.int64)
    for h in range(P2H):
        for w in range(P2W):
            for co in range(C2):
                perm[h * (P2W * C2) + w * C2 + co] = co * (P2H * P2W) + h * P2W + w

    as_bf16 = lambda a: jnp.asarray(a, jnp.bfloat16)
    as_f32 = lambda a: jnp.asarray(a, jnp.float32)
    return {
        "a1": as_bf16(_banded_conv_mats(w1, W0, W1)),            # (5, 96, 168)
        "b1": as_f32(np.tile(b1, W1)[None, :]),                  # (1, 168)
        "r1": as_f32(r1), "s1": as_f32(s1),                      # (14,27), (162,84)
        "a2": as_bf16(_banded_conv_mats(w2, P1W, W2)),           # (5, 84, 160)
        "b2": as_f32(np.tile(b2, W2)[None, :]),                  # (1, 160)
        "r2": as_f32(r2), "s2": as_f32(s2),                      # (5,9), (144,80)
        "wf1": as_bf16(fw1[perm, :]), "bf1": as_f32(fb1[None, :]),
        "wf2": as_bf16(fw2), "bf2": as_f32(fb2[None, :]),
        "wf3": as_bf16(fw3), "bf3": as_f32(fb3[None, :]),
    }


# ---------------------------------------------------------------------------
# Forward wrapper: one pallas_call for the whole network
# ---------------------------------------------------------------------------
def net_forward(x, packed):
    n = x.shape[0]
    # NCHW -> (N, H, W*Cin) "rows x (w, c)" layout; tiny input-layout glue only.
    x_rows = x.astype(jnp.float32).transpose(0, 2, 3, 1).reshape(n, H0, W0 * C0)
    return pl.pallas_call(
        _lenet_kernel,
        out_shape=jax.ShapeDtypeStruct((n, F3_OUT), jnp.float32),
        # No grid / no BlockSpecs: every operand is a whole-array block resident
        # in VMEM for the single kernel invocation (<1 MiB total, fits all gens
        # including v7x's 64 MiB).
        scratch_shapes=[
            pltpu.VMEM((H1, W1 * C1), jnp.float32),    # conv1 output (per image)
            pltpu.VMEM((P1H, P1W * C1), jnp.float32),  # pool1 output
            pltpu.VMEM((H2, W2 * C2), jnp.float32),    # conv2 output
            pltpu.VMEM((P2H, P2W * C2), jnp.float32),  # pool2 output
            pltpu.VMEM((n, F1_IN), jnp.float32),       # flattened fc1 input
        ],
    )(x_rows,
      packed["a1"], packed["b1"], packed["r1"], packed["s1"],
      packed["a2"], packed["b2"], packed["r2"], packed["s2"],
      packed["wf1"], packed["bf1"], packed["wf2"], packed["bf2"],
      packed["wf3"], packed["bf3"])


# ---------------------------------------------------------------------------
# Pure-JAX f32 reference (sanity check) and init
# ---------------------------------------------------------------------------
def net_reference(x, params):
    def conv(y, w, b):
        y = lax.conv_general_dilated(y, w, (1, 1), "VALID",
                                     dimension_numbers=("NCHW", "OIHW", "NCHW"))
        return jax.nn.relu(y + b[None, :, None, None])

    def pool(y):
        return lax.reduce_window(y, -jnp.inf, lax.max,
                                 (1, 1, 2, 2), (1, 1, 2, 2), "VALID")

    y = pool(conv(x, params["w1"], params["b1"]))
    y = pool(conv(y, params["w2"], params["b2"]))
    y = y.reshape(y.shape[0], -1)
    y = jax.nn.relu(y @ params["fw1"] + params["fb1"])
    y = jax.nn.relu(y @ params["fw2"] + params["fb2"])
    return y @ params["fw3"] + params["fb3"]


def init_params(key):
    """Deterministic PyTorch-style uniform(-1/sqrt(fan_in), 1/sqrt(fan_in)) init."""
    ks = jax.random.split(key, 10)

    def u(k, shape, fan_in):
        bound = 1.0 / (fan_in ** 0.5)
        return jax.random.uniform(k, shape, jnp.float32, -bound, bound)

    return {
        "w1": u(ks[0], (6, 3, 5, 5), 3 * 5 * 5),
        "b1": u(ks[1], (6,), 3 * 5 * 5),
        "w2": u(ks[2], (16, 6, 5, 5), 6 * 5 * 5),
        "b2": u(ks[3], (16,), 6 * 5 * 5),
        # fc weights stored (in, out) because the kernel computes x @ w
        "fw1": u(ks[4], (16 * 5 * 5, 120), 16 * 5 * 5),
        "fb1": u(ks[5], (120,), 16 * 5 * 5),
        "fw2": u(ks[6], (120, 84), 120),
        "fb2": u(ks[7], (84,), 120),
        "fw3": u(ks[8], (84, 10), 84),
        "fb3": u(ks[9], (10,), 84),
    }


if __name__ == "__main__":
    key = jax.random.PRNGKey(0)
    k_x, k_p = jax.random.split(key)
    # Net's fc1 (16*5*5 inputs) implies 32x32 spatial input, 3 channels (CIFAR-10).
    x = jax.random.normal(k_x, (2, 3, 32, 32), dtype=jnp.float32)
    params = init_params(k_p)
    packed = pack_params(params)          # one-time host-side weight repack

    out = jax.jit(net_forward)(x, packed)
    out = jax.block_until_ready(out)

    assert out.shape == (2, 10), out.shape
    assert out.dtype == jnp.float32
    assert bool(jnp.all(jnp.isfinite(out)))

    # bf16 MXU operands => allow a small tolerance vs the f32 XLA reference.
    ref = net_reference(x, params)
    max_err = float(jnp.max(jnp.abs(out - ref)))
    assert max_err < 1e-1, f"kernel mismatch vs reference (max |err| = {max_err})"
    print("KERNEL_OK")
</pallas_src>

<mosaic_0001>
module attributes {stable_mosaic.version = 11 : i64} {
  func.func @_lenet_kernel(%arg0: memref<2x32x96xf32, #tpu.memory_space<vmem>>, %arg1: memref<5x96x168xbf16, #tpu.memory_space<vmem>>, %arg2: memref<1x168xf32, #tpu.memory_space<vmem>>, %arg3: memref<14x27xf32, #tpu.memory_space<vmem>>, %arg4: memref<162x84xf32, #tpu.memory_space<vmem>>, %arg5: memref<5x84x160xbf16, #tpu.memory_space<vmem>>, %arg6: memref<1x160xf32, #tpu.memory_space<vmem>>, %arg7: memref<5x9xf32, #tpu.memory_space<vmem>>, %arg8: memref<144x80xf32, #tpu.memory_space<vmem>>, %arg9: memref<400x120xbf16, #tpu.memory_space<vmem>>, %arg10: memref<1x120xf32, #tpu.memory_space<vmem>>, %arg11: memref<120x84xbf16, #tpu.memory_space<vmem>>, %arg12: memref<1x84xf32, #tpu.memory_space<vmem>>, %arg13: memref<84x10xbf16, #tpu.memory_space<vmem>>, %arg14: memref<1x10xf32, #tpu.memory_space<vmem>>, %arg15: memref<2x10xf32, #tpu.memory_space<vmem>>, %arg16: memref<28x168xf32, #tpu.memory_space<vmem>>, %arg17: memref<14x84xf32, #tpu.memory_space<vmem>>, %arg18: memref<10x160xf32, #tpu.memory_space<vmem>>, %arg19: memref<5x80xf32, #tpu.memory_space<vmem>>, %arg20: memref<2x400xf32, #tpu.memory_space<vmem>>) attributes {dimension_semantics = [], scalar_prefetch = 0 : i64, scratch_operands = 5 : i64, tpu.core_type = #tpu.core_type<tc>} {
    %cst = arith.constant 0.000000e+00 : f32
    %0 = vector.broadcast %cst : f32 to vector<28x168xf32>
    %c0 = arith.constant 0 : index
    %c0_0 = arith.constant 0 : index
    %c0_1 = arith.constant 0 : index
    %1 = vector.load %arg0[%c0, %c0_0, %c0_1] : memref<2x32x96xf32, #tpu.memory_space<vmem>>, vector<1x28x96xf32>
    %2 = vector.shape_cast %1 : vector<1x28x96xf32> to vector<28x96xf32>
    %3 = arith.truncf %2 : vector<28x96xf32> to vector<28x96xbf16>
    %c0_2 = arith.constant 0 : index
    %c0_3 = arith.constant 0 : index
    %c0_4 = arith.constant 0 : index
    %4 = vector.load %arg1[%c0_2, %c0_3, %c0_4] : memref<5x96x168xbf16, #tpu.memory_space<vmem>>, vector<1x96x168xbf16>
    %5 = vector.shape_cast %4 : vector<1x96x168xbf16> to vector<96x168xbf16>
    %cst_5 = arith.constant dense<0.000000e+00> : vector<28x168xf32>
    %6 = tpu.matmul %3, %5, %cst_5 {dimension_numbers = #tpu.dot_dimension_numbers<[1], [0], [0], [1], [0, 0, 1, 1], [], []>} : vector<28x96xbf16>, vector<96x168xbf16>, vector<28x168xf32> -> vector<28x168xf32>
    %7 = arith.addf %0, %6 : vector<28x168xf32>
    %c0_6 = arith.constant 0 : index
    %c1 = arith.constant 1 : index
    %c0_7 = arith.constant 0 : index
    %8 = vector.load %arg0[%c0_6, %c1, %c0_7] : memref<2x32x96xf32, #tpu.memory_space<vmem>>, vector<1x28x96xf32>
    %9 = vector.shape_cast %8 : vector<1x28x96xf32> to vector<28x96xf32>
    %10 = arith.truncf %9 : vector<28x96xf32> to vector<28x96xbf16>
    %c1_8 = arith.constant 1 : index
    %c0_9 = arith.constant 0 : index
    %c0_10 = arith.constant 0 : index
    %11 = vector.load %arg1[%c1_8, %c0_9, %c0_10] : memref<5x96x168xbf16, #tpu.memory_space<vmem>>, vector<1x96x168xbf16>
    %12 = vector.shape_cast %11 : vector<1x96x168xbf16> to vector<96x168xbf16>
    %cst_11 = arith.constant dense<0.000000e+00> : vector<28x168xf32>
    %13 = tpu.matmul %10, %12, %cst_11 {dimension_numbers = #tpu.dot_dimension_numbers<[1], [0], [0], [1], [0, 0, 1, 1], [], []>} : vector<28x96xbf16>, vector<96x168xbf16>, vector<28x168xf32> -> vector<28x168xf32>
    %14 = arith.addf %7, %13 : vector<28x168xf32>
    %c0_12 = arith.constant 0 : index
    %c2 = arith.constant 2 : index
    %c0_13 = arith.constant 0 : index
    %15 = vector.load %arg0[%c0_12, %c2, %c0_13] : memref<2x32x96xf32, #tpu.memory_space<vmem>>, vector<1x28x96xf32>
    %16 = vector.shape_cast %15 : vector<1x28x96xf32> to vector<28x96xf32>
    %17 = arith.truncf %16 : vector<28x96xf32> to vector<28x96xbf16>
    %c2_14 = arith.constant 2 : index
    %c0_15 = arith.constant 0 : index
    %c0_16 = arith.constant 0 : index
    %18 = vector.load %arg1[%c2_14, %c0_15, %c0_16] : memref<5x96x168xbf16, #tpu.memory_space<vmem>>, vector<1x96x168xbf16>
    %19 = vector.shape_cast %18 : vector<1x96x168xbf16> to vector<96x168xbf16>
    %cst_17 = arith.constant dense<0.000000e+00> : vector<28x168xf32>
    %20 = tpu.matmul %17, %19, %cst_17 {dimension_numbers = #tpu.dot_dimension_numbers<[1], [0], [0], [1], [0, 0, 1, 1], [], []>} : vector<28x96xbf16>, vector<96x168xbf16>, vector<28x168xf32> -> vector<28x168xf32>
    %21 = arith.addf %14, %20 : vector<28x168xf32>
    %c0_18 = arith.constant 0 : index
    %c3 = arith.constant 3 : index
    %c0_19 = arith.constant 0 : index
    %22 = vector.load %arg0[%c0_18, %c3, %c0_19] : memref<2x32x96xf32, #tpu.memory_space<vmem>>, vector<1x28x96xf32>
    %23 = vector.shape_cast %22 : vector<1x28x96xf32> to vector<28x96xf32>
    %24 = arith.truncf %23 : vector<28x96xf32> to vector<28x96xbf16>
    %c3_20 = arith.constant 3 : index
    %c0_21 = arith.constant 0 : index
    %c0_22 = arith.constant 0 : index
    %25 = vector.load %arg1[%c3_20, %c0_21, %c0_22] : memref<5x96x168xbf16, #tpu.memory_space<vmem>>, vector<1x96x168xbf16>
    %26 = vector.shape_cast %25 : vector<1x96x168xbf16> to vector<96x168xbf16>
    %cst_23 = arith.constant dense<0.000000e+00> : vector<28x168xf32>
    %27 = tpu.matmul %24, %26, %cst_23 {dimension_numbers = #tpu.dot_dimension_numbers<[1], [0], [0], [1], [0, 0, 1, 1], [], []>} : vector<28x96xbf16>, vector<96x168xbf16>, vector<28x168xf32> -> vector<28x168xf32>
    %28 = arith.addf %21, %27 : vector<28x168xf32>
    %c0_24 = arith.constant 0 : index
    %c4 = arith.constant 4 : index
    %c0_25 = arith.constant 0 : index
    %29 = vector.load %arg0[%c0_24, %c4, %c0_25] : memref<2x32x96xf32, #tpu.memory_space<vmem>>, vector<1x28x96xf32>
    %30 = vector.shape_cast %29 : vector<1x28x96xf32> to vector<28x96xf32>
    %31 = arith.truncf %30 : vector<28x96xf32> to vector<28x96xbf16>
    %c4_26 = arith.constant 4 : index
    %c0_27 = arith.constant 0 : index
    %c0_28 = arith.constant 0 : index
    %32 = vector.load %arg1[%c4_26, %c0_27, %c0_28] : memref<5x96x168xbf16, #tpu.memory_space<vmem>>, vector<1x96x168xbf16>
    %33 = vector.shape_cast %32 : vector<1x96x168xbf16> to vector<96x168xbf16>
    %cst_29 = arith.constant dense<0.000000e+00> : vector<28x168xf32>
    %34 = tpu.matmul %31, %33, %cst_29 {dimension_numbers = #tpu.dot_dimension_numbers<[1], [0], [0], [1], [0, 0, 1, 1], [], []>} : vector<28x96xbf16>, vector<96x168xbf16>, vector<28x168xf32> -> vector<28x168xf32>
    %35 = arith.addf %28, %34 : vector<28x168xf32>
    %c0_30 = arith.constant 0 : index
    %c0_31 = arith.constant 0 : index
    %36 = vector.load %arg2[%c0_30, %c0_31] : memref<1x168xf32, #tpu.memory_space<vmem>>, vector<1x168xf32>
    %37 = vector.broadcast %36 : vector<1x168xf32> to vector<28x168xf32>
    %38 = arith.addf %35, %37 : vector<28x168xf32>
    %cst_32 = arith.constant 0.000000e+00 : f32
    %39 = vector.broadcast %cst_32 : f32 to vector<28x168xf32>
    %40 = arith.maximumf %38, %39 : vector<28x168xf32>
    %c0_33 = arith.constant 0 : index
    %c0_34 = arith.constant 0 : index
    %41 = vector.load %arg16[%c0_33, %c0_34] : memref<28x168xf32, #tpu.memory_space<vmem>>, vector<28x168xf32>
    tpu.vector_store %arg16[%c0_33, %c0_34], %40 {strides = array<i32>} : memref<28x168xf32, #tpu.memory_space<vmem>>, vector<28x168xf32>,
    %c0_35 = arith.constant 0 : index
    %c0_36 = arith.constant 0 : index
    %42 = vector.load %arg16[%c0_35, %c0_36] : memref<28x168xf32, #tpu.memory_space<vmem>>, vector<27x162xf32>
    %c0_37 = arith.constant 0 : index
    %c6 = arith.constant 6 : index
    %43 = vector.load %arg16[%c0_37, %c6] : memref<28x168xf32, #tpu.memory_space<vmem>>, vector<27x162xf32>
    %44 = arith.maximumf %42, %43 : vector<27x162xf32>
    %c1_38 = arith.constant 1 : index
    %c0_39 = arith.constant 0 : index
    %45 = vector.load %arg16[%c1_38, %c0_39] : memref<28x168xf32, #tpu.memory_space<vmem>>, vector<27x162xf32>
    %c1_40 = arith.constant 1 : index
    %c6_41 = arith.constant 6 : index
    %46 = vector.load %arg16[%c1_40, %c6_41] : memref<28x168xf32, #tpu.memory_space<vmem>>, vector<27x162xf32>
    %47 = arith.maximumf %45, %46 : vector<27x162xf32>
    %48 = arith.maximumf %44, %47 : vector<27x162xf32>
    %c0_42 = arith.constant 0 : index
    %c0_43 = arith.constant 0 : index
    %49 = vector.load %arg3[%c0_42, %c0_43] : memref<14x27xf32, #tpu.memory_space<vmem>>, vector<14x27xf32>
    %cst_44 = arith.constant dense<0.000000e+00> : vector<14x162xf32>
    %50 = tpu.matmul %49, %48, %cst_44 {dimension_numbers = #tpu.dot_dimension_numbers<[1], [0], [0], [1], [0, 0, 1, 1], [], []>} : vector<14x27xf32>, vector<27x162xf32>, vector<14x162xf32> -> vector<14x162xf32>
    %c0_45 = arith.constant 0 : index
    %c0_46 = arith.constant 0 : index
    %51 = vector.load %arg4[%c0_45, %c0_46] : memref<162x84xf32, #tpu.memory_space<vmem>>, vector<162x84xf32>
    %cst_47 = arith.constant dense<0.000000e+00> : vector<14x84xf32>
    %52 = tpu.matmul %50, %51, %cst_47 {dimension_numbers = #tpu.dot_dimension_numbers<[1], [0], [0], [1], [0, 0, 1, 1], [], []>} : vector<14x162xf32>, vector<162x84xf32>, vector<14x84xf32> -> vector<14x84xf32>
    %c0_48 = arith.constant 0 : index
    %c0_49 = arith.constant 0 : index
    %53 = vector.load %arg17[%c0_48, %c0_49] : memref<14x84xf32, #tpu.memory_space<vmem>>, vector<14x84xf32>
    tpu.vector_store %arg17[%c0_48, %c0_49], %52 {strides = array<i32>} : memref<14x84xf32, #tpu.memory_space<vmem>>, vector<14x84xf32>,
    %cst_50 = arith.constant 0.000000e+00 : f32
    %54 = vector.broadcast %cst_50 : f32 to vector<10x160xf32>
    %c0_51 = arith.constant 0 : index
    %c0_52 = arith.constant 0 : index
    %55 = vector.load %arg17[%c0_51, %c0_52] : memref<14x84xf32, #tpu.memory_space<vmem>>, vector<10x84xf32>
    %56 = arith.truncf %55 : vector<10x84xf32> to vector<10x84xbf16>
    %c0_53 = arith.constant 0 : index
    %c0_54 = arith.constant 0 : index
    %c0_55 = arith.constant 0 : index
    %57 = vector.load %arg5[%c0_53, %c0_54, %c0_55] : memref<5x84x160xbf16, #tpu.memory_space<vmem>>, vector<1x84x160xbf16>
    %58 = vector.shape_cast %57 : vector<1x84x160xbf16> to vector<84x160xbf16>
    %cst_56 = arith.constant dense<0.000000e+00> : vector<10x160xf32>
    %59 = tpu.matmul %56, %58, %cst_56 {dimension_numbers = #tpu.dot_dimension_numbers<[1], [0], [0], [1], [0, 0, 1, 1], [], []>} : vector<10x84xbf16>, vector<84x160xbf16>, vector<10x160xf32> -> vector<10x160xf32>
    %60 = arith.addf %54, %59 : vector<10x160xf32>
    %c1_57 = arith.constant 1 : index
    %c0_58 = arith.constant 0 : index
    %61 = vector.load %arg17[%c1_57, %c0_58] : memref<14x84xf32, #tpu.memory_space<vmem>>, vector<10x84xf32>
    %62 = arith.truncf %61 : vector<10x84xf32> to vector<10x84xbf16>
    %c1_59 = arith.constant 1 : index
    %c0_60 = arith.constant 0 : index
    %c0_61 = arith.constant 0 : index
    %63 = vector.load %arg5[%c1_59, %c0_60, %c0_61] : memref<5x84x160xbf16, #tpu.memory_space<vmem>>, vector<1x84x160xbf16>
    %64 = vector.shape_cast %63 : vector<1x84x160xbf16> to vector<84x160xbf16>
    %cst_62 = arith.constant dense<0.000000e+00> : vector<10x160xf32>
    %65 = tpu.matmul %62, %64, %cst_62 {dimension_numbers = #tpu.dot_dimension_numbers<[1], [0], [0], [1], [0, 0, 1, 1], [], []>} : vector<10x84xbf16>, vector<84x160xbf16>, vector<10x160xf32> -> vector<10x160xf32>
    %66 = arith.addf %60, %65 : vector<10x160xf32>
    %c2_63 = arith.constant 2 : index
    %c0_64 = arith.constant 0 : index
    %67 = vector.load %arg17[%c2_63, %c0_64] : memref<14x84xf32, #tpu.memory_space<vmem>>, vector<10x84xf32>
    %68 = arith.truncf %67 : vector<10x84xf32> to vector<10x84xbf16>
    %c2_65 = arith.constant 2 : index
    %c0_66 = arith.constant 0 : index
    %c0_67 = arith.constant 0 : index
    %69 = vector.load %arg5[%c2_65, %c0_66, %c0_67] : memref<5x84x160xbf16, #tpu.memory_space<vmem>>, vector<1x84x160xbf16>
    %70 = vector.shape_cast %69 : vector<1x84x160xbf16> to vector<84x160xbf16>
    %cst_68 = arith.constant dense<0.000000e+00> : vector<10x160xf32>
    %71 = tpu.matmul %68, %70, %cst_68 {dimension_numbers = #tpu.dot_dimension_numbers<[1], [0], [0], [1], [0, 0, 1, 1], [], []>} : vector<10x84xbf16>, vector<84x160xbf16>, vector<10x160xf32> -> vector<10x160xf32>
    %72 = arith.addf %66, %71 : vector<10x160xf32>
    %c3_69 = arith.constant 3 : index
    %c0_70 = arith.constant 0 : index
    %73 = vector.load %arg17[%c3_69, %c0_70] : memref<14x84xf32, #tpu.memory_space<vmem>>, vector<10x84xf32>
    %74 = arith.truncf %73 : vector<10x84xf32> to vector<10x84xbf16>
    %c3_71 = arith.constant 3 : index
    %c0_72 = arith.constant 0 : index
    %c0_73 = arith.constant 0 : index
    %75 = vector.load %arg5[%c3_71, %c0_72, %c0_73] : memref<5x84x160xbf16, #tpu.memory_space<vmem>>, vector<1x84x160xbf16>
    %76 = vector.shape_cast %75 : vector<1x84x160xbf16> to vector<84x160xbf16>
    %cst_74 = arith.constant dense<0.000000e+00> : vector<10x160xf32>
    %77 = tpu.matmul %74, %76, %cst_74 {dimension_numbers = #tpu.dot_dimension_numbers<[1], [0], [0], [1], [0, 0, 1, 1], [], []>} : vector<10x84xbf16>, vector<84x160xbf16>, vector<10x160xf32> -> vector<10x160xf32>
    %78 = arith.addf %72, %77 : vector<10x160xf32>
    %c4_75 = arith.constant 4 : index
    %c0_76 = arith.constant 0 : index
    %79 = vector.load %arg17[%c4_75, %c0_76] : memref<14x84xf32, #tpu.memory_space<vmem>>, vector<10x84xf32>
    %80 = arith.truncf %79 : vector<10x84xf32> to vector<10x84xbf16>
    %c4_77 = arith.constant 4 : index
    %c0_78 = arith.constant 0 : index
    %c0_79 = arith.constant 0 : index
    %81 = vector.load %arg5[%c4_77, %c0_78, %c0_79] : memref<5x84x160xbf16, #tpu.memory_space<vmem>>, vector<1x84x160xbf16>
    %82 = vector.shape_cast %81 : vector<1x84x160xbf16> to vector<84x160xbf16>
    %cst_80 = arith.constant dense<0.000000e+00> : vector<10x160xf32>
    %83 = tpu.matmul %80, %82, %cst_80 {dimension_numbers = #tpu.dot_dimension_numbers<[1], [0], [0], [1], [0, 0, 1, 1], [], []>} : vector<10x84xbf16>, vector<84x160xbf16>, vector<10x160xf32> -> vector<10x160xf32>
    %84 = arith.addf %78, %83 : vector<10x160xf32>
    %c0_81 = arith.constant 0 : index
    %c0_82 = arith.constant 0 : index
    %85 = vector.load %arg6[%c0_81, %c0_82] : memref<1x160xf32, #tpu.memory_space<vmem>>, vector<1x160xf32>
    %86 = vector.broadcast %85 : vector<1x160xf32> to vector<10x160xf32>
    %87 = arith.addf %84, %86 : vector<10x160xf32>
    %cst_83 = arith.constant 0.000000e+00 : f32
    %88 = vector.broadcast %cst_83 : f32 to vector<10x160xf32>
    %89 = arith.maximumf %87, %88 : vector<10x160xf32>
    %c0_84 = arith.constant 0 : index
    %c0_85 = arith.constant 0 : index
    %90 = vector.load %arg18[%c0_84, %c0_85] : memref<10x160xf32, #tpu.memory_space<vmem>>, vector<10x160xf32>
    tpu.vector_store %arg18[%c0_84, %c0_85], %89 {strides = array<i32>} : memref<10x160xf32, #tpu.memory_space<vmem>>, vector<10x160xf32>,
    %c0_86 = arith.constant 0 : index
    %c0_87 = arith.constant 0 : index
    %91 = vector.load %arg18[%c0_86, %c0_87] : memref<10x160xf32, #tpu.memory_space<vmem>>, vector<9x144xf32>
    %c0_88 = arith.constant 0 : index
    %c16 = arith.constant 16 : index
    %92 = vector.load %arg18[%c0_88, %c16] : memref<10x160xf32, #tpu.memory_space<vmem>>, vector<9x144xf32>
    %93 = arith.maximumf %91, %92 : vector<9x144xf32>
    %c1_89 = arith.constant 1 : index
    %c0_90 = arith.constant 0 : index
    %94 = vector.load %arg18[%c1_89, %c0_90] : memref<10x160xf32, #tpu.memory_space<vmem>>, vector<9x144xf32>
    %c1_91 = arith.constant 1 : index
    %c16_92 = arith.constant 16 : index
    %95 = vector.load %arg18[%c1_91, %c16_92] : memref<10x160xf32, #tpu.memory_space<vmem>>, vector<9x144xf32>
    %96 = arith.maximumf %94, %95 : vector<9x144xf32>
    %97 = arith.maximumf %93, %96 : vector<9x144xf32>
    %c0_93 = arith.constant 0 : index
    %c0_94 = arith.constant 0 : index
    %98 = vector.load %arg7[%c0_93, %c0_94] : memref<5x9xf32, #tpu.memory_space<vmem>>, vector<5x9xf32>
    %cst_95 = arith.constant dense<0.000000e+00> : vector<5x144xf32>
    %99 = tpu.matmul %98, %97, %cst_95 {dimension_numbers = #tpu.dot_dimension_numbers<[1], [0], [0], [1], [0, 0, 1, 1], [], []>} : vector<5x9xf32>, vector<9x144xf32>, vector<5x144xf32> -> vector<5x144xf32>
    %c0_96 = arith.constant 0 : index
    %c0_97 = arith.constant 0 : index
    %100 = vector.load %arg8[%c0_96, %c0_97] : memref<144x80xf32, #tpu.memory_space<vmem>>, vector<144x80xf32>
    %cst_98 = arith.constant dense<0.000000e+00> : vector<5x80xf32>
    %101 = tpu.matmul %99, %100, %cst_98 {dimension_numbers = #tpu.dot_dimension_numbers<[1], [0], [0], [1], [0, 0, 1, 1], [], []>} : vector<5x144xf32>, vector<144x80xf32>, vector<5x80xf32> -> vector<5x80xf32>
    %c0_99 = arith.constant 0 : index
    %c0_100 = arith.constant 0 : index
    %102 = vector.load %arg19[%c0_99, %c0_100] : memref<5x80xf32, #tpu.memory_space<vmem>>, vector<5x80xf32>
    tpu.vector_store %arg19[%c0_99, %c0_100], %101 {strides = array<i32>} : memref<5x80xf32, #tpu.memory_space<vmem>>, vector<5x80xf32>,
    %c0_101 = arith.constant 0 : index
    %c0_102 = arith.constant 0 : index
    %103 = vector.load %arg19[%c0_101, %c0_102] : memref<5x80xf32, #tpu.memory_space<vmem>>, vector<1x80xf32>
    %c0_103 = arith.constant 0 : index
    %c0_104 = arith.constant 0 : index
    %104 = vector.load %arg20[%c0_103, %c0_104] : memref<2x400xf32, #tpu.memory_space<vmem>>, vector<1x80xf32>
    tpu.vector_store %arg20[%c0_103, %c0_104], %103 {strides = array<i32>} : memref<2x400xf32, #tpu.memory_space<vmem>>, vector<1x80xf32>,
    %c1_105 = arith.constant 1 : index
    %c0_106 = arith.constant 0 : index
    %105 = vector.load %arg19[%c1_105, %c0_106] : memref<5x80xf32, #tpu.memory_space<vmem>>, vector<1x80xf32>
    %c0_107 = arith.constant 0 : index
    %c80 = arith.constant 80 : index
    %106 = vector.load %arg20[%c0_107, %c80] : memref<2x400xf32, #tpu.memory_space<vmem>>, vector<1x80xf32>
    tpu.vector_store %arg20[%c0_107, %c80], %105 {strides = array<i32>} : memref<2x400xf32, #tpu.memory_space<vmem>>, vector<1x80xf32>,
    %c2_108 = arith.constant 2 : index
    %c0_109 = arith.constant 0 : index
    %107 = vector.load %arg19[%c2_108, %c0_109] : memref<5x80xf32, #tpu.memory_space<vmem>>, vector<1x80xf32>
    %c0_110 = arith.constant 0 : index
    %c160 = arith.constant 160 : index
    %108 = vector.load %arg20[%c0_110, %c160] : memref<2x400xf32, #tpu.memory_space<vmem>>, vector<1x80xf32>
    tpu.vector_store %arg20[%c0_110, %c160], %107 {strides = array<i32>} : memref<2x400xf32, #tpu.memory_space<vmem>>, vector<1x80xf32>,
    %c3_111 = arith.constant 3 : index
    %c0_112 = arith.constant 0 : index
    %109 = vector.load %arg19[%c3_111, %c0_112] : memref<5x80xf32, #tpu.memory_space<vmem>>, vector<1x80xf32>
    %c0_113 = arith.constant 0 : index
    %c240 = arith.constant 240 : index
    %110 = vector.load %arg20[%c0_113, %c240] : memref<2x400xf32, #tpu.memory_space<vmem>>, vector<1x80xf32>
    tpu.vector_store %arg20[%c0_113, %c240], %109 {strides = array<i32>} : memref<2x400xf32, #tpu.memory_space<vmem>>, vector<1x80xf32>,
    %c4_114 = arith.constant 4 : index
    %c0_115 = arith.constant 0 : index
    %111 = vector.load %arg19[%c4_114, %c0_115] : memref<5x80xf32, #tpu.memory_space<vmem>>, vector<1x80xf32>
    %c0_116 = arith.constant 0 : index
    %c320 = arith.constant 320 : index
    %112 = vector.load %arg20[%c0_116, %c320] : memref<2x400xf32, #tpu.memory_space<vmem>>, vector<1x80xf32>
    tpu.vector_store %arg20[%c0_116, %c320], %111 {strides = array<i32>} : memref<2x400xf32, #tpu.memory_space<vmem>>, vector<1x80xf32>,
    %cst_117 = arith.constant 0.000000e+00 : f32
    %113 = vector.broadcast %cst_117 : f32 to vector<28x168xf32>
    %c1_118 = arith.constant 1 : index
    %c0_119 = arith.constant 0 : index
    %c0_120 = arith.constant 0 : index
    %114 = vector.load %arg0[%c1_118, %c0_119, %c0_120] : memref<2x32x96xf32, #tpu.memory_space<vmem>>, vector<1x28x96xf32>
    %115 = vector.shape_cast %114 : vector<1x28x96xf32> to vector<28x96xf32>
    %116 = arith.truncf %115 : vector<28x96xf32> to vector<28x96xbf16>
    %c0_121 = arith.constant 0 : index
    %c0_122 = arith.constant 0 : index
    %c0_123 = arith.constant 0 : index
    %117 = vector.load %arg1[%c0_121, %c0_122, %c0_123] : memref<5x96x168xbf16, #tpu.memory_space<vmem>>, vector<1x96x168xbf16>
    %118 = vector.shape_cast %117 : vector<1x96x168xbf16> to vector<96x168xbf16>
    %cst_124 = arith.constant dense<0.000000e+00> : vector<28x168xf32>
    %119 = tpu.matmul %116, %118, %cst_124 {dimension_numbers = #tpu.dot_dimension_numbers<[1], [0], [0], [1], [0, 0, 1, 1], [], []>} : vector<28x96xbf16>, vector<96x168xbf16>, vector<28x168xf32> -> vector<28x168xf32>
    %120 = arith.addf %113, %119 : vector<28x168xf32>
    %c1_125 = arith.constant 1 : index
    %c1_126 = arith.constant 1 : index
    %c0_127 = arith.constant 0 : index
    %121 = vector.load %arg0[%c1_125, %c1_126, %c0_127] : memref<2x32x96xf32, #tpu.memory_space<vmem>>, vector<1x28x96xf32>
    %122 = vector.shape_cast %121 : vector<1x28x96xf32> to vector<28x96xf32>
    %123 = arith.truncf %122 : vector<28x96xf32> to vector<28x96xbf16>
    %c1_128 = arith.constant 1 : index
    %c0_129 = arith.constant 0 : index
    %c0_130 = arith.constant 0 : index
    %124 = vector.load %arg1[%c1_128, %c0_129, %c0_130] : memref<5x96x168xbf16, #tpu.memory_space<vmem>>, vector<1x96x168xbf16>
    %125 = vector.shape_cast %124 : vector<1x96x168xbf16> to vector<96x168xbf16>
    %cst_131 = arith.constant dense<0.000000e+00> : vector<28x168xf32>
    %126 = tpu.matmul %123, %125, %cst_131 {dimension_numbers = #tpu.dot_dimension_numbers<[1], [0], [0], [1], [0, 0, 1, 1], [], []>} : vector<28x96xbf16>, vector<96x168xbf16>, vector<28x168xf32> -> vector<28x168xf32>
    %127 = arith.addf %120, %126 : vector<28x168xf32>
    %c1_132 = arith.constant 1 : index
    %c2_133 = arith.constant 2 : index
    %c0_134 = arith.constant 0 : index
    %128 = vector.load %arg0[%c1_132, %c2_133, %c0_134] : memref<2x32x96xf32, #tpu.memory_space<vmem>>, vector<1x28x96xf32>
    %129 = vector.shape_cast %128 : vector<1x28x96xf32> to vector<28x96xf32>
    %130 = arith.truncf %129 : vector<28x96xf32> to vector<28x96xbf16>
    %c2_135 = arith.constant 2 : index
    %c0_136 = arith.constant 0 : index
    %c0_137 = arith.constant 0 : index
    %131 = vector.load %arg1[%c2_135, %c0_136, %c0_137] : memref<5x96x168xbf16, #tpu.memory_space<vmem>>, vector<1x96x168xbf16>
    %132 = vector.shape_cast %131 : vector<1x96x168xbf16> to vector<96x168xbf16>
    %cst_138 = arith.constant dense<0.000000e+00> : vector<28x168xf32>
    %133 = tpu.matmul %130, %132, %cst_138 {dimension_numbers = #tpu.dot_dimension_numbers<[1], [0], [0], [1], [0, 0, 1, 1], [], []>} : vector<28x96xbf16>, vector<96x168xbf16>, vector<28x168xf32> -> vector<28x168xf32>
    %134 = arith.addf %127, %133 : vector<28x168xf32>
    %c1_139 = arith.constant 1 : index
    %c3_140 = arith.constant 3 : index
    %c0_141 = arith.constant 0 : index
    %135 = vector.load %arg0[%c1_139, %c3_140, %c0_141] : memref<2x32x96xf32, #tpu.memory_space<vmem>>, vector<1x28x96xf32>
    %136 = vector.shape_cast %135 : vector<1x28x96xf32> to vector<28x96xf32>
    %137 = arith.truncf %136 : vector<28x96xf32> to vector<28x96xbf16>
    %c3_142 = arith.constant 3 : index
    %c0_143 = arith.constant 0 : index
    %c0_144 = arith.constant 0 : index
    %138 = vector.load %arg1[%c3_142, %c0_143, %c0_144] : memref<5x96x168xbf16, #tpu.memory_space<vmem>>, vector<1x96x168xbf16>
    %139 = vector.shape_cast %138 : vector<1x96x168xbf16> to vector<96x168xbf16>
    %cst_145 = arith.constant dense<0.000000e+00> : vector<28x168xf32>
    %140 = tpu.matmul %137, %139, %cst_145 {dimension_numbers = #tpu.dot_dimension_numbers<[1], [0], [0], [1], [0, 0, 1, 1], [], []>} : vector<28x96xbf16>, vector<96x168xbf16>, vector<28x168xf32> -> vector<28x168xf32>
    %141 = arith.addf %134, %140 : vector<28x168xf32>
    %c1_146 = arith.constant 1 : index
    %c4_147 = arith.constant 4 : index
    %c0_148 = arith.constant 0 : index
    %142 = vector.load %arg0[%c1_146, %c4_147, %c0_148] : memref<2x32x96xf32, #tpu.memory_space<vmem>>, vector<1x28x96xf32>
    %143 = vector.shape_cast %142 : vector<1x28x96xf32> to vector<28x96xf32>
    %144 = arith.truncf %143 : vector<28x96xf32> to vector<28x96xbf16>
    %c4_149 = arith.constant 4 : index
    %c0_150 = arith.constant 0 : index
    %c0_151 = arith.constant 0 : index
    %145 = vector.load %arg1[%c4_149, %c0_150, %c0_151] : memref<5x96x168xbf16, #tpu.memory_space<vmem>>, vector<1x96x168xbf16>
    %146 = vector.shape_cast %145 : vector<1x96x168xbf16> to vector<96x168xbf16>
    %cst_152 = arith.constant dense<0.000000e+00> : vector<28x168xf32>
    %147 = tpu.matmul %144, %146, %cst_152 {dimension_numbers = #tpu.dot_dimension_numbers<[1], [0], [0], [1], [0, 0, 1, 1], [], []>} : vector<28x96xbf16>, vector<96x168xbf16>, vector<28x168xf32> -> vector<28x168xf32>
    %148 = arith.addf %141, %147 : vector<28x168xf32>
    %c0_153 = arith.constant 0 : index
    %c0_154 = arith.constant 0 : index
    %149 = vector.load %arg2[%c0_153, %c0_154] : memref<1x168xf32, #tpu.memory_space<vmem>>, vector<1x168xf32>
    %150 = vector.broadcast %149 : vector<1x168xf32> to vector<28x168xf32>
    %151 = arith.addf %148, %150 : vector<28x168xf32>
    %cst_155 = arith.constant 0.000000e+00 : f32
    %152 = vector.broadcast %cst_155 : f32 to vector<28x168xf32>
    %153 = arith.maximumf %151, %152 : vector<28x168xf32>
    %c0_156 = arith.constant 0 : index
    %c0_157 = arith.constant 0 : index
    %154 = vector.load %arg16[%c0_156, %c0_157] : memref<28x168xf32, #tpu.memory_space<vmem>>, vector<28x168xf32>
    tpu.vector_store %arg16[%c0_156, %c0_157], %153 {strides = array<i32>} : memref<28x168xf32, #tpu.memory_space<vmem>>, vector<28x168xf32>,
    %c0_158 = arith.constant 0 : index
    %c0_159 = arith.constant 0 : index
    %155 = vector.load %arg16[%c0_158, %c0_159] : memref<28x168xf32, #tpu.memory_space<vmem>>, vector<27x162xf32>
    %c0_160 = arith.constant 0 : index
    %c6_161 = arith.constant 6 : index
    %156 = vector.load %arg16[%c0_160, %c6_161] : memref<28x168xf32, #tpu.memory_space<vmem>>, vector<27x162xf32>
    %157 = arith.maximumf %155, %156 : vector<27x162xf32>
    %c1_162 = arith.constant 1 : index
    %c0_163 = arith.constant 0 : index
    %158 = vector.load %arg16[%c1_162, %c0_163] : memref<28x168xf32, #tpu.memory_space<vmem>>, vector<27x162xf32>
    %c1_164 = arith.constant 1 : index
    %c6_165 = arith.constant 6 : index
    %159 = vector.load %arg16[%c1_164, %c6_165] : memref<28x168xf32, #tpu.memory_space<vmem>>, vector<27x162xf32>
    %160 = arith.maximumf %158, %159 : vector<27x162xf32>
    %161 = arith.maximumf %157, %160 : vector<27x162xf32>
    %c0_166 = arith.constant 0 : index
    %c0_167 = arith.constant 0 : index
    %162 = vector.load %arg3[%c0_166, %c0_167] : memref<14x27xf32, #tpu.memory_space<vmem>>, vector<14x27xf32>
    %cst_168 = arith.constant dense<0.000000e+00> : vector<14x162xf32>
    %163 = tpu.matmul %162, %161, %cst_168 {dimension_numbers = #tpu.dot_dimension_numbers<[1], [0], [0], [1], [0, 0, 1, 1], [], []>} : vector<14x27xf32>, vector<27x162xf32>, vector<14x162xf32> -> vector<14x162xf32>
    %c0_169 = arith.constant 0 : index
    %c0_170 = arith.constant 0 : index
    %164 = vector.load %arg4[%c0_169, %c0_170] : memref<162x84xf32, #tpu.memory_space<vmem>>, vector<162x84xf32>
    %cst_171 = arith.constant dense<0.000000e+00> : vector<14x84xf32>
    %165 = tpu.matmul %163, %164, %cst_171 {dimension_numbers = #tpu.dot_dimension_numbers<[1], [0], [0], [1], [0, 0, 1, 1], [], []>} : vector<14x162xf32>, vector<162x84xf32>, vector<14x84xf32> -> vector<14x84xf32>
    %c0_172 = arith.constant 0 : index
    %c0_173 = arith.constant 0 : index
    %166 = vector.load %arg17[%c0_172, %c0_173] : memref<14x84xf32, #tpu.memory_space<vmem>>, vector<14x84xf32>
    tpu.vector_store %arg17[%c0_172, %c0_173], %165 {strides = array<i32>} : memref<14x84xf32, #tpu.memory_space<vmem>>, vector<14x84xf32>,
    %cst_174 = arith.constant 0.000000e+00 : f32
    %167 = vector.broadcast %cst_174 : f32 to vector<10x160xf32>
    %c0_175 = arith.constant 0 : index
    %c0_176 = arith.constant 0 : index
    %168 = vector.load %arg17[%c0_175, %c0_176] : memref<14x84xf32, #tpu.memory_space<vmem>>, vector<10x84xf32>
    %169 = arith.truncf %168 : vector<10x84xf32> to vector<10x84xbf16>
    %c0_177 = arith.constant 0 : index
    %c0_178 = arith.constant 0 : index
    %c0_179 = arith.constant 0 : index
    %170 = vector.load %arg5[%c0_177, %c0_178, %c0_179] : memref<5x84x160xbf16, #tpu.memory_space<vmem>>, vector<1x84x160xbf16>
    %171 = vector.shape_cast %170 : vector<1x84x160xbf16> to vector<84x160xbf16>
    %cst_180 = arith.constant dense<0.000000e+00> : vector<10x160xf32>
    %172 = tpu.matmul %169, %171, %cst_180 {dimension_numbers = #tpu.dot_dimension_numbers<[1], [0], [0], [1], [0, 0, 1, 1], [], []>} : vector<10x84xbf16>, vector<84x160xbf16>, vector<10x160xf32> -> vector<10x160xf32>
    %173 = arith.addf %167, %172 : vector<10x160xf32>
    %c1_181 = arith.constant 1 : index
    %c0_182 = arith.constant 0 : index
    %174 = vector.load %arg17[%c1_181, %c0_182] : memref<14x84xf32, #tpu.memory_space<vmem>>, vector<10x84xf32>
    %175 = arith.truncf %174 : vector<10x84xf32> to vector<10x84xbf16>
    %c1_183 = arith.constant 1 : index
    %c0_184 = arith.constant 0 : index
    %c0_185 = arith.constant 0 : index
    %176 = vector.load %arg5[%c1_183, %c0_184, %c0_185] : memref<5x84x160xbf16, #tpu.memory_space<vmem>>, vector<1x84x160xbf16>
    %177 = vector.shape_cast %176 : vector<1x84x160xbf16> to vector<84x160xbf16>
    %cst_186 = arith.constant dense<0.000000e+00> : vector<10x160xf32>
    %178 = tpu.matmul %175, %177, %cst_186 {dimension_numbers = #tpu.dot_dimension_numbers<[1], [0], [0], [1], [0, 0, 1, 1], [], []>} : vector<10x84xbf16>, vector<84x160xbf16>, vector<10x160xf32> -> vector<10x160xf32>
    %179 = arith.addf %173, %178 : vector<10x160xf32>
    %c2_187 = arith.constant 2 : index
    %c0_188 = arith.constant 0 : index
    %180 = vector.load %arg17[%c2_187, %c0_188] : memref<14x84xf32, #tpu.memory_space<vmem>>, vector<10x84xf32>
    %181 = arith.truncf %180 : vector<10x84xf32> to vector<10x84xbf16>
    %c2_189 = arith.constant 2 : index
    %c0_190 = arith.constant 0 : index
    %c0_191 = arith.constant 0 : index
    %182 = vector.load %arg5[%c2_189, %c0_190, %c0_191] : memref<5x84x160xbf16, #tpu.memory_space<vmem>>, vector<1x84x160xbf16>
    %183 = vector.shape_cast %182 : vector<1x84x160xbf16> to vector<84x160xbf16>
    %cst_192 = arith.constant dense<0.000000e+00> : vector<10x160xf32>
    %184 = tpu.matmul %181, %183, %cst_192 {dimension_numbers = #tpu.dot_dimension_numbers<[1], [0], [0], [1], [0, 0, 1, 1], [], []>} : vector<10x84xbf16>, vector<84x160xbf16>, vector<10x160xf32> -> vector<10x160xf32>
    %185 = arith.addf %179, %184 : vector<10x160xf32>
    %c3_193 = arith.constant 3 : index
    %c0_194 = arith.constant 0 : index
    %186 = vector.load %arg17[%c3_193, %c0_194] : memref<14x84xf32, #tpu.memory_space<vmem>>, vector<10x84xf32>
    %187 = arith.truncf %186 : vector<10x84xf32> to vector<10x84xbf16>
    %c3_195 = arith.constant 3 : index
    %c0_196 = arith.constant 0 : index
    %c0_197 = arith.constant 0 : index
    %188 = vector.load %arg5[%c3_195, %c0_196, %c0_197] : memref<5x84x160xbf16, #tpu.memory_space<vmem>>, vector<1x84x160xbf16>
    %189 = vector.shape_cast %188 : vector<1x84x160xbf16> to vector<84x160xbf16>
    %cst_198 = arith.constant dense<0.000000e+00> : vector<10x160xf32>
    %190 = tpu.matmul %187, %189, %cst_198 {dimension_numbers = #tpu.dot_dimension_numbers<[1], [0], [0], [1], [0, 0, 1, 1], [], []>} : vector<10x84xbf16>, vector<84x160xbf16>, vector<10x160xf32> -> vector<10x160xf32>
    %191 = arith.addf %185, %190 : vector<10x160xf32>
    %c4_199 = arith.constant 4 : index
    %c0_200 = arith.constant 0 : index
    %192 = vector.load %arg17[%c4_199, %c0_200] : memref<14x84xf32, #tpu.memory_space<vmem>>, vector<10x84xf32>
    %193 = arith.truncf %192 : vector<10x84xf32> to vector<10x84xbf16>
    %c4_201 = arith.constant 4 : index
    %c0_202 = arith.constant 0 : index
    %c0_203 = arith.constant 0 : index
    %194 = vector.load %arg5[%c4_201, %c0_202, %c0_203] : memref<5x84x160xbf16, #tpu.memory_space<vmem>>, vector<1x84x160xbf16>
    %195 = vector.shape_cast %194 : vector<1x84x160xbf16> to vector<84x160xbf16>
    %cst_204 = arith.constant dense<0.000000e+00> : vector<10x160xf32>
    %196 = tpu.matmul %193, %195, %cst_204 {dimension_numbers = #tpu.dot_dimension_numbers<[1], [0], [0], [1], [0, 0, 1, 1], [], []>} : vector<10x84xbf16>, vector<84x160xbf16>, vector<10x160xf32> -> vector<10x160xf32>
    %197 = arith.addf %191, %196 : vector<10x160xf32>
    %c0_205 = arith.constant 0 : index
    %c0_206 = arith.constant 0 : index
    %198 = vector.load %arg6[%c0_205, %c0_206] : memref<1x160xf32, #tpu.memory_space<vmem>>, vector<1x160xf32>
    %199 = vector.broadcast %198 : vector<1x160xf32> to vector<10x160xf32>
    %200 = arith.addf %197, %199 : vector<10x160xf32>
    %cst_207 = arith.constant 0.000000e+00 : f32
    %201 = vector.broadcast %cst_207 : f32 to vector<10x160xf32>
    %202 = arith.maximumf %200, %201 : vector<10x160xf32>
    %c0_208 = arith.constant 0 : index
    %c0_209 = arith.constant 0 : index
    %203 = vector.load %arg18[%c0_208, %c0_209] : memref<10x160xf32, #tpu.memory_space<vmem>>, vector<10x160xf32>
    tpu.vector_store %arg18[%c0_208, %c0_209], %202 {strides = array<i32>} : memref<10x160xf32, #tpu.memory_space<vmem>>, vector<10x160xf32>,
    %c0_210 = arith.constant 0 : index
    %c0_211 = arith.constant 0 : index
    %204 = vector.load %arg18[%c0_210, %c0_211] : memref<10x160xf32, #tpu.memory_space<vmem>>, vector<9x144xf32>
    %c0_212 = arith.constant 0 : index
    %c16_213 = arith.constant 16 : index
    %205 = vector.load %arg18[%c0_212, %c16_213] : memref<10x160xf32, #tpu.memory_space<vmem>>, vector<9x144xf32>
    %206 = arith.maximumf %204, %205 : vector<9x144xf32>
    %c1_214 = arith.constant 1 : index
    %c0_215 = arith.constant 0 : index
    %207 = vector.load %arg18[%c1_214, %c0_215] : memref<10x160xf32, #tpu.memory_space<vmem>>, vector<9x144xf32>
    %c1_216 = arith.constant 1 : index
    %c16_217 = arith.constant 16 : index
    %208 = vector.load %arg18[%c1_216, %c16_217] : memref<10x160xf32, #tpu.memory_space<vmem>>, vector<9x144xf32>
    %209 = arith.maximumf %207, %208 : vector<9x144xf32>
    %210 = arith.maximumf %206, %209 : vector<9x144xf32>
    %c0_218 = arith.constant 0 : index
    %c0_219 = arith.constant 0 : index
    %211 = vector.load %arg7[%c0_218, %c0_219] : memref<5x9xf32, #tpu.memory_space<vmem>>, vector<5x9xf32>
    %cst_220 = arith.constant dense<0.000000e+00> : vector<5x144xf32>
    %212 = tpu.matmul %211, %210, %cst_220 {dimension_numbers = #tpu.dot_dimension_numbers<[1], [0], [0], [1], [0, 0, 1, 1], [], []>} : vector<5x9xf32>, vector<9x144xf32>, vector<5x144xf32> -> vector<5x144xf32>
    %c0_221 = arith.constant 0 : index
    %c0_222 = arith.constant 0 : index
    %213 = vector.load %arg8[%c0_221, %c0_222] : memref<144x80xf32, #tpu.memory_space<vmem>>, vector<144x80xf32>
    %cst_223 = arith.constant dense<0.000000e+00> : vector<5x80xf32>
    %214 = tpu.matmul %212, %213, %cst_223 {dimension_numbers = #tpu.dot_dimension_numbers<[1], [0], [0], [1], [0, 0, 1, 1], [], []>} : vector<5x144xf32>, vector<144x80xf32>, vector<5x80xf32> -> vector<5x80xf32>
    %c0_224 = arith.constant 0 : index
    %c0_225 = arith.constant 0 : index
    %215 = vector.load %arg19[%c0_224, %c0_225] : memref<5x80xf32, #tpu.memory_space<vmem>>, vector<5x80xf32>
    tpu.vector_store %arg19[%c0_224, %c0_225], %214 {strides = array<i32>} : memref<5x80xf32, #tpu.memory_space<vmem>>, vector<5x80xf32>,
    %c0_226 = arith.constant 0 : index
    %c0_227 = arith.constant 0 : index
    %216 = vector.load %arg19[%c0_226, %c0_227] : memref<5x80xf32, #tpu.memory_space<vmem>>, vector<1x80xf32>
    %c1_228 = arith.constant 1 : index
    %c0_229 = arith.constant 0 : index
    %217 = vector.load %arg20[%c1_228, %c0_229] : memref<2x400xf32, #tpu.memory_space<vmem>>, vector<1x80xf32>
    tpu.vector_store %arg20[%c1_228, %c0_229], %216 {strides = array<i32>} : memref<2x400xf32, #tpu.memory_space<vmem>>, vector<1x80xf32>,
    %c1_230 = arith.constant 1 : index
    %c0_231 = arith.constant 0 : index
    %218 = vector.load %arg19[%c1_230, %c0_231] : memref<5x80xf32, #tpu.memory_space<vmem>>, vector<1x80xf32>
    %c1_232 = arith.constant 1 : index
    %c80_233 = arith.constant 80 : index
    %219 = vector.load %arg20[%c1_232, %c80_233] : memref<2x400xf32, #tpu.memory_space<vmem>>, vector<1x80xf32>
    tpu.vector_store %arg20[%c1_232, %c80_233], %218 {strides = array<i32>} : memref<2x400xf32, #tpu.memory_space<vmem>>, vector<1x80xf32>,
    %c2_234 = arith.constant 2 : index
    %c0_235 = arith.constant 0 : index
    %220 = vector.load %arg19[%c2_234, %c0_235] : memref<5x80xf32, #tpu.memory_space<vmem>>, vector<1x80xf32>
    %c1_236 = arith.constant 1 : index
    %c160_237 = arith.constant 160 : index
    %221 = vector.load %arg20[%c1_236, %c160_237] : memref<2x400xf32, #tpu.memory_space<vmem>>, vector<1x80xf32>
    tpu.vector_store %arg20[%c1_236, %c160_237], %220 {strides = array<i32>} : memref<2x400xf32, #tpu.memory_space<vmem>>, vector<1x80xf32>,
    %c3_238 = arith.constant 3 : index
    %c0_239 = arith.constant 0 : index
    %222 = vector.load %arg19[%c3_238, %c0_239] : memref<5x80xf32, #tpu.memory_space<vmem>>, vector<1x80xf32>
    %c1_240 = arith.constant 1 : index
    %c240_241 = arith.constant 240 : index
    %223 = vector.load %arg20[%c1_240, %c240_241] : memref<2x400xf32, #tpu.memory_space<vmem>>, vector<1x80xf32>
    tpu.vector_store %arg20[%c1_240, %c240_241], %222 {strides = array<i32>} : memref<2x400xf32, #tpu.memory_space<vmem>>, vector<1x80xf32>,
    %c4_242 = arith.constant 4 : index
    %c0_243 = arith.constant 0 : index
    %224 = vector.load %arg19[%c4_242, %c0_243] : memref<5x80xf32, #tpu.memory_space<vmem>>, vector<1x80xf32>
    %c1_244 = arith.constant 1 : index
    %c320_245 = arith.constant 320 : index
    %225 = vector.load %arg20[%c1_244, %c320_245] : memref<2x400xf32, #tpu.memory_space<vmem>>, vector<1x80xf32>
    tpu.vector_store %arg20[%c1_244, %c320_245], %224 {strides = array<i32>} : memref<2x400xf32, #tpu.memory_space<vmem>>, vector<1x80xf32>,
    %c0_246 = arith.constant 0 : index
    %c0_247 = arith.constant 0 : index
    %226 = vector.load %arg20[%c0_246, %c0_247] : memref<2x400xf32, #tpu.memory_space<vmem>>, vector<2x400xf32>
    %227 = arith.truncf %226 : vector<2x400xf32> to vector<2x400xbf16>
    %c0_248 = arith.constant 0 : index
    %c0_249 = arith.constant 0 : index
    %228 = vector.load %arg9[%c0_248, %c0_249] : memref<400x120xbf16, #tpu.memory_space<vmem>>, vector<400x120xbf16>
    %cst_250 = arith.constant dense<0.000000e+00> : vector<2x120xf32>
    %229 = tpu.matmul %227, %228, %cst_250 {dimension_numbers = #tpu.dot_dimension_numbers<[1], [0], [0], [1], [0, 0, 1, 1], [], []>} : vector<2x400xbf16>, vector<400x120xbf16>, vector<2x120xf32> -> vector<2x120xf32>
    %c0_251 = arith.constant 0 : index
    %c0_252 = arith.constant 0 : index
    %230 = vector.load %arg10[%c0_251, %c0_252] : memref<1x120xf32, #tpu.memory_space<vmem>>, vector<1x120xf32>
    %231 = vector.broadcast %230 : vector<1x120xf32> to vector<2x120xf32>
    %232 = arith.addf %229, %231 : vector<2x120xf32>
    %cst_253 = arith.constant 0.000000e+00 : f32
    %233 = vector.broadcast %cst_253 : f32 to vector<2x120xf32>
    %234 = arith.maximumf %232, %233 : vector<2x120xf32>
    %235 = arith.truncf %234 : vector<2x120xf32> to vector<2x120xbf16>
    %c0_254 = arith.constant 0 : index
    %c0_255 = arith.constant 0 : index
    %236 = vector.load %arg11[%c0_254, %c0_255] : memref<120x84xbf16, #tpu.memory_space<vmem>>, vector<120x84xbf16>
    %cst_256 = arith.constant dense<0.000000e+00> : vector<2x84xf32>
    %237 = tpu.matmul %235, %236, %cst_256 {dimension_numbers = #tpu.dot_dimension_numbers<[1], [0], [0], [1], [0, 0, 1, 1], [], []>} : vector<2x120xbf16>, vector<120x84xbf16>, vector<2x84xf32> -> vector<2x84xf32>
    %c0_257 = arith.constant 0 : index
    %c0_258 = arith.constant 0 : index
    %238 = vector.load %arg12[%c0_257, %c0_258] : memref<1x84xf32, #tpu.memory_space<vmem>>, vector<1x84xf32>
    %239 = vector.broadcast %238 : vector<1x84xf32> to vector<2x84xf32>
    %240 = arith.addf %237, %239 : vector<2x84xf32>
    %cst_259 = arith.constant 0.000000e+00 : f32
    %241 = vector.broadcast %cst_259 : f32 to vector<2x84xf32>
    %242 = arith.maximumf %240, %241 : vector<2x84xf32>
    %243 = arith.truncf %242 : vector<2x84xf32> to vector<2x84xbf16>
    %c0_260 = arith.constant 0 : index
    %c0_261 = arith.constant 0 : index
    %244 = vector.load %arg13[%c0_260, %c0_261] : memref<84x10xbf16, #tpu.memory_space<vmem>>, vector<84x10xbf16>
    %cst_262 = arith.constant dense<0.000000e+00> : vector<2x10xf32>
    %245 = tpu.matmul %243, %244, %cst_262 {dimension_numbers = #tpu.dot_dimension_numbers<[1], [0], [0], [1], [0, 0, 1, 1], [], []>} : vector<2x84xbf16>, vector<84x10xbf16>, vector<2x10xf32> -> vector<2x10xf32>
    %c0_263 = arith.constant 0 : index
    %c0_264 = arith.constant 0 : index
    %246 = vector.load %arg14[%c0_263, %c0_264] : memref<1x10xf32, #tpu.memory_space<vmem>>, vector<1x10xf32>
    %247 = vector.broadcast %246 : vector<1x10xf32> to vector<2x10xf32>
    %248 = arith.addf %245, %247 : vector<2x10xf32>
    %c0_265 = arith.constant 0 : index
    %c0_266 = arith.constant 0 : index
    %249 = vector.load %arg15[%c0_265, %c0_266] : memref<2x10xf32, #tpu.memory_space<vmem>>, vector<2x10xf32>
    tpu.vector_store %arg15[%c0_265, %c0_266], %248 {strides = array<i32>} : memref<2x10xf32, #tpu.memory_space<vmem>>, vector<2x10xf32>,
    return
  }
}

</mosaic_0001>

<llo_original>
// kernel: net_forward.1
$region0: #{net_forward.1}
  #allocation0 [shape = 'u32[]', space=smem, size = 0x4, offset = 0x4, fixed_abs, tag = 'smem constant byte address 0x4 - core index']
  #allocation1 [shape = 'u32[144,128]{1,0:T(1,128)}', space=vmem, size = 0x12000, scoped, tag = 'internal scratch']
  #allocation2 [shape = 'f32[28,168]{1,0:T(8,128)}', space=vmem, size = 0x8000, scoped, tag = 'scratch operand']
  #allocation3 [shape = 'f32[14,84]{1,0:T(8,128)}', space=vmem, size = 0x2000, scoped, tag = 'scratch operand']
  #allocation4 [shape = 'f32[10,160]{1,0:T(8,128)}', space=vmem, size = 0x4000, scoped, tag = 'scratch operand']
  #allocation5 [shape = 'f32[5,80]{1,0:T(8,128)}', space=vmem, size = 0x1000, scoped, tag = 'scratch operand']
  #allocation6 [shape = 'f32[2,400]{1,0:T(2,128)}', space=vmem, size = 0x1000, scoped, tag = 'scratch operand']
  %s0 = inlined_call_operand.vmem [shape: f32[2,32,96], index: 0, kind: input, shape index: {}]
  %s1 = inlined_call_operand.vmem [shape: bf16[5,96,168], index: 1, kind: input, shape index: {}]
  %s2 = inlined_call_operand.vmem [shape: f32[1,168], index: 2, kind: input, shape index: {}]
  %s3 = inlined_call_operand.vmem [shape: f32[14,27], index: 3, kind: input, shape index: {}]
  %s4 = inlined_call_operand.vmem [shape: f32[162,84], index: 4, kind: input, shape index: {}]
  %s5 = inlined_call_operand.vmem [shape: bf16[5,84,160], index: 5, kind: input, shape index: {}]
  %s6 = inlined_call_operand.vmem [shape: f32[1,160], index: 6, kind: input, shape index: {}]
  %s7 = inlined_call_operand.vmem [shape: f32[5,9], index: 7, kind: input, shape index: {}]
  %s8 = inlined_call_operand.vmem [shape: f32[144,80], index: 8, kind: input, shape index: {}]
  %s9 = inlined_call_operand.vmem [shape: bf16[400,120], index: 9, kind: input, shape index: {}]
  %s10 = inlined_call_operand.vmem [shape: f32[1,120], index: 10, kind: input, shape index: {}]
  %s11 = inlined_call_operand.vmem [shape: bf16[120,84], index: 11, kind: input, shape index: {}]
  %s12 = inlined_call_operand.vmem [shape: f32[1,84], index: 12, kind: input, shape index: {}]
  %s13 = inlined_call_operand.vmem [shape: bf16[84,10], index: 13, kind: input, shape index: {}]
  %s14 = inlined_call_operand.vmem [shape: f32[1,10], index: 14, kind: input, shape index: {}]
  %s15 = inlined_call_operand.hbm [shape: f32[2,10], index: 15, kind: output, shape index: {}]
  %s16 = sld [smem:[#allocation0]]
  $region70: #{net_forward.1} parent=0
    _
  %s18 = ssub.s32 1, %s16
  %s19 = scalar_select 0, %s18, %s16
  $region1: #{net_forward.1} parent=0
    #allocation7 [shape = 'u8[1024]{0}', space=vmem, size = 0x400, scoped, tag = 'output window, operand 0, single buffered']
    #allocation8 [shape = 's32[1]{0}', space=sflag, size = 0x4, scoped, tag = 'scoped memory for net_forward.1']
    %20 = vsyncpa [#allocation8], 0
    // Predicated region
    $region2: #{net_forward.1} parent=1 // pred_check
      _
    $region3: #{net_forward.1} parent=1 // pred_check_branch
      %22 = sbr.rel (0) target = $region5
    $region4: #{net_forward.1} parent=1 // pred_region
      _
    $region5: #{net_forward.1} parent=1 // pred_fallthru
      _
    // Predicated region
    $region6: #{net_forward.1} parent=1 // pred_check
      _
    $region7: #{net_forward.1} parent=1 // pred_check_branch
      %24 = sbr.rel (0) target = $region9
    $region8: #{net_forward.1} parent=1 // pred_region
      _
    $region9: #{net_forward.1} parent=1 // pred_fallthru
      _
    // Predicated region
    $region10: #{net_forward.1} parent=1 // pred_check
      _
    $region11: #{net_forward.1} parent=1 // pred_check_branch
      %26 = sbr.rel (0) target = $region13
    $region12: #{net_forward.1} parent=1 // pred_region
      _
    $region13: #{net_forward.1} parent=1 // pred_fallthru
      _
    // Predicated region
    $region14: #{net_forward.1} parent=1 // pred_check
      _
    $region15: #{net_forward.1} parent=1 // pred_check_branch
      %28 = sbr.rel (0) target = $region17
    $region16: #{net_forward.1} parent=1 // pred_region
      _
    $region17: #{net_forward.1} parent=1 // pred_fallthru
      _
    // Predicated region
    $region18: #{net_forward.1} parent=1 // pred_check
      _
    $region19: #{net_forward.1} parent=1 // pred_check_branch
      %30 = sbr.rel (0) target = $region21
    $region20: #{net_forward.1} parent=1 // pred_region
      _
    $region21: #{net_forward.1} parent=1 // pred_fallthru
      _
    // Predicated region
    $region22: #{net_forward.1} parent=1 // pred_check
      _
    $region23: #{net_forward.1} parent=1 // pred_check_branch
      %32 = sbr.rel (0) target = $region25
    $region24: #{net_forward.1} parent=1 // pred_region
      _
    $region25: #{net_forward.1} parent=1 // pred_fallthru
      _
    // Predicated region
    $region26: #{net_forward.1} parent=1 // pred_check
      _
    $region27: #{net_forward.1} parent=1 // pred_check_branch
      %34 = sbr.rel (0) target = $region29
    $region28: #{net_forward.1} parent=1 // pred_region
      _
    $region29: #{net_forward.1} parent=1 // pred_fallthru
      _
    // Predicated region
    $region30: #{net_forward.1} parent=1 // pred_check
      _
    $region31: #{net_forward.1} parent=1 // pred_check_branch
      %36 = sbr.rel (0) target = $region33
    $region32: #{net_forward.1} parent=1 // pred_region
      _
    $region33: #{net_forward.1} parent=1 // pred_fallthru
      _
    // Predicated region
    $region34: #{net_forward.1} parent=1 // pred_check
      _
    $region35: #{net_forward.1} parent=1 // pred_check_branch
      %38 = sbr.rel (0) target = $region37
    $region36: #{net_forward.1} parent=1 // pred_region
      _
    $region37: #{net_forward.1} parent=1 // pred_fallthru
      _
    // Predicated region
    $region38: #{net_forward.1} parent=1 // pred_check
      _
    $region39: #{net_forward.1} parent=1 // pred_check_branch
      %40 = sbr.rel (0) target = $region41
    $region40: #{net_forward.1} parent=1 // pred_region
      _
    $region41: #{net_forward.1} parent=1 // pred_fallthru
      _
    // Predicated region
    $region42: #{net_forward.1} parent=1 // pred_check
      _
    $region43: #{net_forward.1} parent=1 // pred_check_branch
      %42 = sbr.rel (0) target = $region45
    $region44: #{net_forward.1} parent=1 // pred_region
      _
    $region45: #{net_forward.1} parent=1 // pred_fallthru
      _
    // Predicated region
    $region46: #{net_forward.1} parent=1 // pred_check
      _
    $region47: #{net_forward.1} parent=1 // pred_check_branch
      %44 = sbr.rel (0) target = $region49
    $region48: #{net_forward.1} parent=1 // pred_region
      _
    $region49: #{net_forward.1} parent=1 // pred_fallthru
      _
    // Predicated region
    $region50: #{net_forward.1} parent=1 // pred_check
      _
    $region51: #{net_forward.1} parent=1 // pred_check_branch
      %46 = sbr.rel (0) target = $region53
    $region52: #{net_forward.1} parent=1 // pred_region
      _
    $region53: #{net_forward.1} parent=1 // pred_fallthru
      _
    // Predicated region
    $region54: #{net_forward.1} parent=1 // pred_check
      _
    $region55: #{net_forward.1} parent=1 // pred_check_branch
      %48 = sbr.rel (0) target = $region57
    $region56: #{net_forward.1} parent=1 // pred_region
      _
    $region57: #{net_forward.1} parent=1 // pred_fallthru
      _
    // Predicated region
    $region58: #{net_forward.1} parent=1 // pred_check
      _
    $region59: #{net_forward.1} parent=1 // pred_check_branch
      %50 = sbr.rel (0) target = $region61
    $region60: #{net_forward.1} parent=1 // pred_region
      _
    $region61: #{net_forward.1} parent=1 // pred_fallthru
      _
    %v52 = vld [vmem:[%s0] sm:$0xff]
    %v53 = vld [vmem:[%s0 + $0x8] sm:$0xff]
    %v54 = vld [vmem:[%s0 + $0x10] sm:$0xff]
    %v55 = vld [vmem:[%s0 + $0x18] sm:$0xf]
    %v56 = vpack.c.bf16 %v53, %v52
    %v57 = vpack.c.bf16 %v55, %v54
    %v58 = vld [vmem:[%s1] sm:$0xff]
    %v59 = vld [vmem:[%s1 + $0x8] sm:$0xff]
    %v60 = vld [vmem:[%s1 + $0x10] sm:$0xff]
    %v61 = vld [vmem:[%s1 + $0x18] sm:$0xff]
    %v62 = vld [vmem:[%s1 + $0x20] sm:$0xff]
    %v63 = vld [vmem:[%s1 + $0x28] sm:$0xff]
    %v64 = vld [vmem:[%s1 + $0x30] sm:$0xff]
    %v65 = vld [vmem:[%s1 + $0x38] sm:$0xff]
    %v66 = vld [vmem:[%s1 + $0x40] sm:$0xff]
    %v67 = vld [vmem:[%s1 + $0x48] sm:$0xff]
    %v68 = vld [vmem:[%s1 + $0x50] sm:$0xff]
    %v69 = vld [vmem:[%s1 + $0x58] sm:$0xff]
    %v70 = vld [vmem:[%s0 + $0x1] sm:$0xff]
    %v71 = vld [vmem:[%s0 + $0x9] sm:$0xff]
    %v72 = vld [vmem:[%s0 + $0x11] sm:$0xff]
    %v73 = vld [vmem:[%s0 + $0x19] sm:$0xf]
    %v74 = vpack.c.bf16 %v71, %v70
    %v75 = vpack.c.bf16 %v73, %v72
    %s76 = scalar_lea.vmem %s1, 96
    %v77 = vld [vmem:[%s76] sm:$0xff]
    %v78 = vld [vmem:[%s76 + $0x8] sm:$0xff]
    %v79 = vld [vmem:[%s76 + $0x10] sm:$0xff]
    %v80 = vld [vmem:[%s76 + $0x18] sm:$0xff]
    %v81 = vld [vmem:[%s76 + $0x20] sm:$0xff]
    %v82 = vld [vmem:[%s76 + $0x28] sm:$0xff]
    %v83 = vld [vmem:[%s76 + $0x30] sm:$0xff]
    %v84 = vld [vmem:[%s76 + $0x38] sm:$0xff]
    %v85 = vld [vmem:[%s76 + $0x40] sm:$0xff]
    %v86 = vld [vmem:[%s76 + $0x48] sm:$0xff]
    %v87 = vld [vmem:[%s76 + $0x50] sm:$0xff]
    %v88 = vld [vmem:[%s76 + $0x58] sm:$0xff]
    %v101 = vunpack.c.l.b16 %v77
    %v102 = vunpack.c.h.b16 %v77
    %v103 = vunpack.c.l.b16 %v78
    %v104 = vunpack.c.h.b16 %v78
    %v105 = vunpack.c.l.b16 %v79
    %v106 = vunpack.c.h.b16 %v79
    %v107 = vunpack.c.l.b16 %v80
    %v108 = vunpack.c.h.b16 %v80
    %v109 = vunpack.c.l.b16 %v81
    %v110 = vunpack.c.h.b16 %v81
    %v111 = vunpack.c.l.b16 %v82
    %v112 = vunpack.c.h.b16 %v82
    %v113 = vunpack.c.l.b16 %v83
    %v114 = vunpack.c.h.b16 %v83
    %v115 = vunpack.c.l.b16 %v84
    %v116 = vunpack.c.h.b16 %v84
    %v117 = vunpack.c.l.b16 %v85
    %v118 = vunpack.c.h.b16 %v85
    %v119 = vunpack.c.l.b16 %v86
    %v120 = vunpack.c.h.b16 %v86
    %v121 = vunpack.c.l.b16 %v87
    %v122 = vunpack.c.h.b16 %v87
    %v123 = vunpack.c.l.b16 %v88
    %v124 = vunpack.c.h.b16 %v88
    %v125 = vpack.c.b16 %v103, %v101
    %v126 = vpack.c.b16 %v104, %v102
    %v127 = vpack.c.b16 %v107, %v105
    %v128 = vpack.c.b16 %v108, %v106
    %v129 = vpack.c.b16 %v111, %v109
    %v130 = vpack.c.b16 %v112, %v110
    %v131 = vpack.c.b16 %v115, %v113
    %v132 = vpack.c.b16 %v116, %v114
    %v133 = vpack.c.b16 %v119, %v117
    %v134 = vpack.c.b16 %v120, %v118
    %v135 = vpack.c.b16 %v123, %v121
    %v136 = vpack.c.b16 %v124, %v122
    %vm149 = vcmask 785408
    %v151 = vsel %vm149, %v74, 0
    %v154 = vsel %vm149, %v75, 0
    %156 = vmatprep.subr.bf16.mxu0 0
    %157 = vmatpush1.bf16.msra.mxu0 0
    %158 = vmatprep.subr.bf16.mxu0 0
    %159 = vmatpush1.bf16.msra.mxu0 0
    %160 = vmatprep.subr.bf16.mxu0 %v136
    %161 = vmatpush1.bf16.msra.mxu0 %v135
    %162 = vmatprep.subr.bf16.mxu0 %v134
    %163 = vmatpush1.bf16.msra.mxu0 %v133
    %164 = vmatprep.subr.bf16.mxu0 %v132
    %165 = vmatpush1.bf16.msra.mxu0 %v131
    %166 = vmatprep.subr.bf16.mxu0 %v130
    %167 = vmatpush1.bf16.msra.mxu0 %v129
    %168 = vmatprep.subr.bf16.mxu0 %v128
    %169 = vmatpush1.bf16.msra.mxu0 %v127
    %170 = vmatprep.subr.bf16.mxu0 %v126
    %171 = vmatpush1.bf16.msra.mxu0 %v125
    %172 = vmatprep.subr.bf16.mxu0 0
    %173 = vmatpush2.bf16.msra.mxu0 0
    %174 = vmatprep.subr.bf16.mxu0 0
    %175 = vmatpush2.bf16.msra.mxu0 0
    %176 = vmatprep.subr.bf16.mxu0 0
    %177 = vmatpush2.bf16.msra.mxu0 0
    %178 = vmatprep.subr.bf16.mxu0 0
    %179 = vmatpush2.bf16.msra.mxu0 0
    %180 = vmatprep.subr.bf16.mxu0 0
    %181 = vmatpush2.bf16.msra.mxu0 0
    %182 = vmatprep.subr.bf16.mxu0 0
    %183 = vmatpush2.bf16.msra.mxu0 0
    %184 = vmatprep.subr.bf16.mxu0 0
    %185 = vmatpush2.bf16.msra.mxu0 0
    %186 = vmatprep.subr.bf16.mxu0 0
    %187 = vmatpush2.bf16.msra.mxu0 0
    %188 = vmatprep.mubr.bf16.mxu0 0
    %189 = vmatmul.mubr.bf16.gmra.mxu0 %v151
    %v190 = vpop.f32.mrf.mxu0
    %v191 = vadd.f32 0.0, %v190
    %v192 = vpop.f32.mrf.mxu0
    %v193 = vadd.f32 0.0, %v192
    %v194 = vpop.f32.mrf.mxu0
    %v195 = vadd.f32 0.0, %v194
    %v196 = vpop.f32.mrf.mxu0
    %v197 = vadd.f32 0.0, %v196
    %198 = vmatprep.mubr.bf16.mxu0 0
    %199 = vmatmul.mubr.bf16.gmra.mxu0 %v154
    %v200 = vpop.f32.mrf.mxu0
    %v201 = vadd.f32 0.0, %v200
    %v202 = vpop.f32.mrf.mxu0
    %v203 = vadd.f32 0.0, %v202
    %v204 = vpop.f32.mrf.mxu0
    %v205 = vadd.f32 0.0, %v204
    %v206 = vpop.f32.mrf.mxu0
    %v207 = vadd.f32 0.0, %v206
    %208 = vdwg.mxu0
    %v221 = vunpack.c.l.b16 %v58
    %v222 = vunpack.c.h.b16 %v58
    %v223 = vunpack.c.l.b16 %v59
    %v224 = vunpack.c.h.b16 %v59
    %v225 = vunpack.c.l.b16 %v60
    %v226 = vunpack.c.h.b16 %v60
    %v227 = vunpack.c.l.b16 %v61
    %v228 = vunpack.c.h.b16 %v61
    %v229 = vunpack.c.l.b16 %v62
    %v230 = vunpack.c.h.b16 %v62
    %v231 = vunpack.c.l.b16 %v63
    %v232 = vunpack.c.h.b16 %v63
    %v233 = vunpack.c.l.b16 %v64
    %v234 = vunpack.c.h.b16 %v64
    %v235 = vunpack.c.l.b16 %v65
    %v236 = vunpack.c.h.b16 %v65
    %v237 = vunpack.c.l.b16 %v66
    %v238 = vunpack.c.h.b16 %v66
    %v239 = vunpack.c.l.b16 %v67
    %v240 = vunpack.c.h.b16 %v67
    %v241 = vunpack.c.l.b16 %v68
    %v242 = vunpack.c.h.b16 %v68
    %v243 = vunpack.c.l.b16 %v69
    %v244 = vunpack.c.h.b16 %v69
    %v245 = vpack.c.b16 %v223, %v221
    %v246 = vpack.c.b16 %v224, %v222
    %v247 = vpack.c.b16 %v227, %v225
    %v248 = vpack.c.b16 %v228, %v226
    %v249 = vpack.c.b16 %v231, %v229
    %v250 = vpack.c.b16 %v232, %v230
    %v251 = vpack.c.b16 %v235, %v233
    %v252 = vpack.c.b16 %v236, %v234
    %v253 = vpack.c.b16 %v239, %v237
    %v254 = vpack.c.b16 %v240, %v238
    %v255 = vpack.c.b16 %v243, %v241
    %v256 = vpack.c.b16 %v244, %v242
    %v270 = vsel %vm149, %v56, 0
    %v273 = vsel %vm149, %v57, 0
    %275 = vmatprep.subr.bf16.mxu0 0
    %276 = vmatpush1.bf16.msra.mxu0 0
    %277 = vmatprep.subr.bf16.mxu0 0
    %278 = vmatpush1.bf16.msra.mxu0 0
    %279 = vmatprep.subr.bf16.mxu0 %v256
    %280 = vmatpush1.bf16.msra.mxu0 %v255
    %281 = vmatprep.subr.bf16.mxu0 %v254
    %282 = vmatpush1.bf16.msra.mxu0 %v253
    %283 = vmatprep.subr.bf16.mxu0 %v252
    %284 = vmatpush1.bf16.msra.mxu0 %v251
    %285 = vmatprep.subr.bf16.mxu0 %v250
    %286 = vmatpush1.bf16.msra.mxu0 %v249
    %287 = vmatprep.subr.bf16.mxu0 %v248
    %288 = vmatpush1.bf16.msra.mxu0 %v247
    %289 = vmatprep.subr.bf16.mxu0 %v246
    %290 = vmatpush1.bf16.msra.mxu0 %v245
    %291 = vmatprep.subr.bf16.mxu0 0
    %292 = vmatpush2.bf16.msra.mxu0 0
    %293 = vmatprep.subr.bf16.mxu0 0
    %294 = vmatpush2.bf16.msra.mxu0 0
    %295 = vmatprep.subr.bf16.mxu0 0
    %296 = vmatpush2.bf16.msra.mxu0 0
    %297 = vmatprep.subr.bf16.mxu0 0
    %298 = vmatpush2.bf16.msra.mxu0 0
    %299 = vmatprep.subr.bf16.mxu0 0
    %300 = vmatpush2.bf16.msra.mxu0 0
    %301 = vmatprep.subr.bf16.mxu0 0
    %302 = vmatpush2.bf16.msra.mxu0 0
    %303 = vmatprep.subr.bf16.mxu0 0
    %304 = vmatpush2.bf16.msra.mxu0 0
    %305 = vmatprep.subr.bf16.mxu0 0
    %306 = vmatpush2.bf16.msra.mxu0 0
    %307 = vmatprep.mubr.bf16.mxu0 0
    %308 = vmatmul.mubr.bf16.gmra.mxu0 %v270
    %v309 = vpop.f32.mrf.mxu0
    %v310 = vadd.f32 %v191, %v309
    %v311 = vpop.f32.mrf.mxu0
    %v312 = vadd.f32 %v193, %v311
    %v313 = vpop.f32.mrf.mxu0
    %v314 = vadd.f32 %v195, %v313
    %v315 = vpop.f32.mrf.mxu0
    %v316 = vadd.f32 %v197, %v315
    %317 = vmatprep.mubr.bf16.mxu0 0
    %318 = vmatmul.mubr.bf16.gmra.mxu0 %v273
    %v319 = vpop.f32.mrf.mxu0
    %v320 = vadd.f32 %v201, %v319
    %v321 = vpop.f32.mrf.mxu0
    %v322 = vadd.f32 %v203, %v321
    %v323 = vpop.f32.mrf.mxu0
    %v324 = vadd.f32 %v205, %v323
    %v325 = vpop.f32.mrf.mxu0
    %v326 = vadd.f32 %v207, %v325
    %327 = vdwg.mxu0
    %v328 = vld [vmem:[%s0 + $0x2] sm:$0xff]
    %v329 = vld [vmem:[%s0 + $0xa] sm:$0xff]
    %v330 = vld [vmem:[%s0 + $0x12] sm:$0xff]
    %v331 = vld [vmem:[%s0 + $0x1a] sm:$0xf]
    %v332 = vpack.c.bf16 %v329, %v328
    %v333 = vpack.c.bf16 %v331, %v330
    %s334 = scalar_lea.vmem %s1, 192
    %v335 = vld [vmem:[%s334] sm:$0xff]
    %v336 = vld [vmem:[%s334 + $0x8] sm:$0xff]
    %v337 = vld [vmem:[%s334 + $0x10] sm:$0xff]
    %v338 = vld [vmem:[%s334 + $0x18] sm:$0xff]
    %v339 = vld [vmem:[%s334 + $0x20] sm:$0xff]
    %v340 = vld [vmem:[%s334 + $0x28] sm:$0xff]
    %v341 = vld [vmem:[%s334 + $0x30] sm:$0xff]
    %v342 = vld [vmem:[%s334 + $0x38] sm:$0xff]
    %v343 = vld [vmem:[%s334 + $0x40] sm:$0xff]
    %v344 = vld [vmem:[%s334 + $0x48] sm:$0xff]
    %v345 = vld [vmem:[%s334 + $0x50] sm:$0xff]
    %v346 = vld [vmem:[%s334 + $0x58] sm:$0xff]
    %v359 = vunpack.c.l.b16 %v335
    %v360 = vunpack.c.h.b16 %v335
    %v361 = vunpack.c.l.b16 %v336
    %v362 = vunpack.c.h.b16 %v336
    %v363 = vunpack.c.l.b16 %v337
    %v364 = vunpack.c.h.b16 %v337
    %v365 = vunpack.c.l.b16 %v338
    %v366 = vunpack.c.h.b16 %v338
    %v367 = vunpack.c.l.b16 %v339
    %v368 = vunpack.c.h.b16 %v339
    %v369 = vunpack.c.l.b16 %v340
    %v370 = vunpack.c.h.b16 %v340
    %v371 = vunpack.c.l.b16 %v341
    %v372 = vunpack.c.h.b16 %v341
    %v373 = vunpack.c.l.b16 %v342
    %v374 = vunpack.c.h.b16 %v342
    %v375 = vunpack.c.l.b16 %v343
    %v376 = vunpack.c.h.b16 %v343
    %v377 = vunpack.c.l.b16 %v344
    %v378 = vunpack.c.h.b16 %v344
    %v379 = vunpack.c.l.b16 %v345
    %v380 = vunpack.c.h.b16 %v345
    %v381 = vunpack.c.l.b16 %v346
    %v382 = vunpack.c.h.b16 %v346
    %v383 = vpack.c.b16 %v361, %v359
    %v384 = vpack.c.b16 %v362, %v360
    %v385 = vpack.c.b16 %v365, %v363
    %v386 = vpack.c.b16 %v366, %v364
    %v387 = vpack.c.b16 %v369, %v367
    %v388 = vpack.c.b16 %v370, %v368
    %v389 = vpack.c.b16 %v373, %v371
    %v390 = vpack.c.b16 %v374, %v372
    %v391 = vpack.c.b16 %v377, %v375
    %v392 = vpack.c.b16 %v378, %v376
    %v393 = vpack.c.b16 %v381, %v379
    %v394 = vpack.c.b16 %v382, %v380
    %v408 = vsel %vm149, %v332, 0
    %v411 = vsel %vm149, %v333, 0
    %413 = vmatprep.subr.bf16.mxu0 0
    %414 = vmatpush1.bf16.msra.mxu0 0
    %415 = vmatprep.subr.bf16.mxu0 0
    %416 = vmatpush1.bf16.msra.mxu0 0
    %417 = vmatprep.subr.bf16.mxu0 %v394
    %418 = vmatpush1.bf16.msra.mxu0 %v393
    %419 = vmatprep.subr.bf16.mxu0 %v392
    %420 = vmatpush1.bf16.msra.mxu0 %v391
    %421 = vmatprep.subr.bf16.mxu0 %v390
    %422 = vmatpush1.bf16.msra.mxu0 %v389
    %423 = vmatprep.subr.bf16.mxu0 %v388
    %424 = vmatpush1.bf16.msra.mxu0 %v387
    %425 = vmatprep.subr.bf16.mxu0 %v386
    %426 = vmatpush1.bf16.msra.mxu0 %v385
    %427 = vmatprep.subr.bf16.mxu0 %v384
    %428 = vmatpush1.bf16.msra.mxu0 %v383
    %429 = vmatprep.subr.bf16.mxu0 0
    %430 = vmatpush2.bf16.msra.mxu0 0
    %431 = vmatprep.subr.bf16.mxu0 0
    %432 = vmatpush2.bf16.msra.mxu0 0
    %433 = vmatprep.subr.bf16.mxu0 0
    %434 = vmatpush2.bf16.msra.mxu0 0
    %435 = vmatprep.subr.bf16.mxu0 0
    %436 = vmatpush2.bf16.msra.mxu0 0
    %437 = vmatprep.subr.bf16.mxu0 0
    %438 = vmatpush2.bf16.msra.mxu0 0
    %439 = vmatprep.subr.bf16.mxu0 0
    %440 = vmatpush2.bf16.msra.mxu0 0
    %441 = vmatprep.subr.bf16.mxu0 0
    %442 = vmatpush2.bf16.msra.mxu0 0
    %443 = vmatprep.subr.bf16.mxu0 0
    %444 = vmatpush2.bf16.msra.mxu0 0
    %445 = vmatprep.mubr.bf16.mxu0 0
    %446 = vmatmul.mubr.bf16.gmra.mxu0 %v408
    %v447 = vpop.f32.mrf.mxu0
    %v448 = vadd.f32 0.0, %v447
    %v449 = vpop.f32.mrf.mxu0
    %v450 = vadd.f32 0.0, %v449
    %v451 = vpop.f32.mrf.mxu0
    %v452 = vadd.f32 0.0, %v451
    %v453 = vpop.f32.mrf.mxu0
    %v454 = vadd.f32 0.0, %v453
    %455 = vmatprep.mubr.bf16.mxu0 0
    %456 = vmatmul.mubr.bf16.gmra.mxu0 %v411
    %v457 = vpop.f32.mrf.mxu0
    %v458 = vadd.f32 0.0, %v457
    %v459 = vpop.f32.mrf.mxu0
    %v460 = vadd.f32 0.0, %v459
    %v461 = vpop.f32.mrf.mxu0
    %v462 = vadd.f32 0.0, %v461
    %v463 = vpop.f32.mrf.mxu0
    %v464 = vadd.f32 0.0, %v463
    %465 = vdwg.mxu0
    %v466 = vadd.f32 %v310, %v448
    %v467 = vadd.f32 %v312, %v450
    %v468 = vadd.f32 %v314, %v452
    %v469 = vadd.f32 %v316, %v454
    %v470 = vadd.f32 %v320, %v458
    %v471 = vadd.f32 %v322, %v460
    %v472 = vadd.f32 %v324, %v462
    %v473 = vadd.f32 %v326, %v464
    %v474 = vld [vmem:[%s0 + $0x3] sm:$0xff]
    %v475 = vld [vmem:[%s0 + $0xb] sm:$0xff]
    %v476 = vld [vmem:[%s0 + $0x13] sm:$0xff]
    %v477 = vld [vmem:[%s0 + $0x1b] sm:$0xf]
    %v478 = vpack.c.bf16 %v475, %v474
    %v479 = vpack.c.bf16 %v477, %v476
    %s480 = scalar_lea.vmem %s1, 288
    %v481 = vld [vmem:[%s480] sm:$0xff]
    %v482 = vld [vmem:[%s480 + $0x8] sm:$0xff]
    %v483 = vld [vmem:[%s480 + $0x10] sm:$0xff]
    %v484 = vld [vmem:[%s480 + $0x18] sm:$0xff]
    %v485 = vld [vmem:[%s480 + $0x20] sm:$0xff]
    %v486 = vld [vmem:[%s480 + $0x28] sm:$0xff]
    %v487 = vld [vmem:[%s480 + $0x30] sm:$0xff]
    %v488 = vld [vmem:[%s480 + $0x38] sm:$0xff]
    %v489 = vld [vmem:[%s480 + $0x40] sm:$0xff]
    %v490 = vld [vmem:[%s480 + $0x48] sm:$0xff]
    %v491 = vld [vmem:[%s480 + $0x50] sm:$0xff]
    %v492 = vld [vmem:[%s480 + $0x58] sm:$0xff]
    %v505 = vunpack.c.l.b16 %v481
    %v506 = vunpack.c.h.b16 %v481
    %v507 = vunpack.c.l.b16 %v482
    %v508 = vunpack.c.h.b16 %v482
    %v509 = vunpack.c.l.b16 %v483
    %v510 = vunpack.c.h.b16 %v483
    %v511 = vunpack.c.l.b16 %v484
    %v512 = vunpack.c.h.b16 %v484
    %v513 = vunpack.c.l.b16 %v485
    %v514 = vunpack.c.h.b16 %v485
    %v515 = vunpack.c.l.b16 %v486
    %v516 = vunpack.c.h.b16 %v486
    %v517 = vunpack.c.l.b16 %v487
    %v518 = vunpack.c.h.b16 %v487
    %v519 = vunpack.c.l.b16 %v488
    %v520 = vunpack.c.h.b16 %v488
    %v521 = vunpack.c.l.b16 %v489
    %v522 = vunpack.c.h.b16 %v489
    %v523 = vunpack.c.l.b16 %v490
    %v524 = vunpack.c.h.b16 %v490
    %v525 = vunpack.c.l.b16 %v491
    %v526 = vunpack.c.h.b16 %v491
    %v527 = vunpack.c.l.b16 %v492
    %v528 = vunpack.c.h.b16 %v492
    %v529 = vpack.c.b16 %v507, %v505
    %v530 = vpack.c.b16 %v508, %v506
    %v531 = vpack.c.b16 %v511, %v509
    %v532 = vpack.c.b16 %v512, %v510
    %v533 = vpack.c.b16 %v515, %v513
    %v534 = vpack.c.b16 %v516, %v514
    %v535 = vpack.c.b16 %v519, %v517
    %v536 = vpack.c.b16 %v520, %v518
    %v537 = vpack.c.b16 %v523, %v521
    %v538 = vpack.c.b16 %v524, %v522
    %v539 = vpack.c.b16 %v527, %v525
    %v540 = vpack.c.b16 %v528, %v526
    %v554 = vsel %vm149, %v478, 0
    %v557 = vsel %vm149, %v479, 0
    %559 = vmatprep.subr.bf16.mxu0 0
    %560 = vmatpush1.bf16.msra.mxu0 0
    %561 = vmatprep.subr.bf16.mxu0 0
    %562 = vmatpush1.bf16.msra.mxu0 0
    %563 = vmatprep.subr.bf16.mxu0 %v540
    %564 = vmatpush1.bf16.msra.mxu0 %v539
    %565 = vmatprep.subr.bf16.mxu0 %v538
    %566 = vmatpush1.bf16.msra.mxu0 %v537
    %567 = vmatprep.subr.bf16.mxu0 %v536
    %568 = vmatpush1.bf16.msra.mxu0 %v535
    %569 = vmatprep.subr.bf16.mxu0 %v534
    %570 = vmatpush1.bf16.msra.mxu0 %v533
    %571 = vmatprep.subr.bf16.mxu0 %v532
    %572 = vmatpush1.bf16.msra.mxu0 %v531
    %573 = vmatprep.subr.bf16.mxu0 %v530
    %574 = vmatpush1.bf16.msra.mxu0 %v529
    %575 = vmatprep.subr.bf16.mxu0 0
    %576 = vmatpush2.bf16.msra.mxu0 0
    %577 = vmatprep.subr.bf16.mxu0 0
    %578 = vmatpush2.bf16.msra.mxu0 0
    %579 = vmatprep.subr.bf16.mxu0 0
    %580 = vmatpush2.bf16.msra.mxu0 0
    %581 = vmatprep.subr.bf16.mxu0 0
    %582 = vmatpush2.bf16.msra.mxu0 0
    %583 = vmatprep.subr.bf16.mxu0 0
    %584 = vmatpush2.bf16.msra.mxu0 0
    %585 = vmatprep.subr.bf16.mxu0 0
    %586 = vmatpush2.bf16.msra.mxu0 0
    %587 = vmatprep.subr.bf16.mxu0 0
    %588 = vmatpush2.bf16.msra.mxu0 0
    %589 = vmatprep.subr.bf16.mxu0 0
    %590 = vmatpush2.bf16.msra.mxu0 0
    %591 = vmatprep.mubr.bf16.mxu0 0
    %592 = vmatmul.mubr.bf16.gmra.mxu0 %v554
    %v593 = vpop.f32.mrf.mxu0
    %v594 = vadd.f32 0.0, %v593
    %v595 = vpop.f32.mrf.mxu0
    %v596 = vadd.f32 0.0, %v595
    %v597 = vpop.f32.mrf.mxu0
    %v598 = vadd.f32 0.0, %v597
    %v599 = vpop.f32.mrf.mxu0
    %v600 = vadd.f32 0.0, %v599
    %601 = vmatprep.mubr.bf16.mxu0 0
    %602 = vmatmul.mubr.bf16.gmra.mxu0 %v557
    %v603 = vpop.f32.mrf.mxu0
    %v604 = vadd.f32 0.0, %v603
    %v605 = vpop.f32.mrf.mxu0
    %v606 = vadd.f32 0.0, %v605
    %v607 = vpop.f32.mrf.mxu0
    %v608 = vadd.f32 0.0, %v607
    %v609 = vpop.f32.mrf.mxu0
    %v610 = vadd.f32 0.0, %v609
    %611 = vdwg.mxu0
    %v612 = vadd.f32 %v466, %v594
    %v613 = vadd.f32 %v467, %v596
    %v614 = vadd.f32 %v468, %v598
    %v615 = vadd.f32 %v469, %v600
    %v616 = vadd.f32 %v470, %v604
    %v617 = vadd.f32 %v471, %v606
    %v618 = vadd.f32 %v472, %v608
    %v619 = vadd.f32 %v473, %v610
    %v620 = vld [vmem:[%s0 + $0x4] sm:$0xff]
    %v621 = vld [vmem:[%s0 + $0xc] sm:$0xff]
    %v622 = vld [vmem:[%s0 + $0x14] sm:$0xff]
    %v623 = vld [vmem:[%s0 + $0x1c] sm:$0xf]
    %v624 = vpack.c.bf16 %v621, %v620
    %v625 = vpack.c.bf16 %v623, %v622
    %s626 = scalar_lea.vmem %s1, 384
    %v627 = vld [vmem:[%s626] sm:$0xff]
    %v628 = vld [vmem:[%s626 + $0x8] sm:$0xff]
    %v629 = vld [vmem:[%s626 + $0x10] sm:$0xff]
    %v630 = vld [vmem:[%s626 + $0x18] sm:$0xff]
    %v631 = vld [vmem:[%s626 + $0x20] sm:$0xff]
    %v632 = vld [vmem:[%s626 + $0x28] sm:$0xff]
    %v633 = vld [vmem:[%s626 + $0x30] sm:$0xff]
    %v634 = vld [vmem:[%s626 + $0x38] sm:$0xff]
    %v635 = vld [vmem:[%s626 + $0x40] sm:$0xff]
    %v636 = vld [vmem:[%s626 + $0x48] sm:$0xff]
    %v637 = vld [vmem:[%s626 + $0x50] sm:$0xff]
    %v638 = vld [vmem:[%s626 + $0x58] sm:$0xff]
    %v651 = vunpack.c.l.b16 %v627
    %v652 = vunpack.c.h.b16 %v627
    %v653 = vunpack.c.l.b16 %v628
    %v654 = vunpack.c.h.b16 %v628
    %v655 = vunpack.c.l.b16 %v629
    %v656 = vunpack.c.h.b16 %v629
    %v657 = vunpack.c.l.b16 %v630
    %v658 = vunpack.c.h.b16 %v630
    %v659 = vunpack.c.l.b16 %v631
    %v660 = vunpack.c.h.b16 %v631
    %v661 = vunpack.c.l.b16 %v632
    %v662 = vunpack.c.h.b16 %v632
    %v663 = vunpack.c.l.b16 %v633
    %v664 = vunpack.c.h.b16 %v633
    %v665 = vunpack.c.l.b16 %v634
    %v666 = vunpack.c.h.b16 %v634
    %v667 = vunpack.c.l.b16 %v635
    %v668 = vunpack.c.h.b16 %v635
    %v669 = vunpack.c.l.b16 %v636
    %v670 = vunpack.c.h.b16 %v636
    %v671 = vunpack.c.l.b16 %v637
    %v672 = vunpack.c.h.b16 %v637
    %v673 = vunpack.c.l.b16 %v638
    %v674 = vunpack.c.h.b16 %v638
    %v675 = vpack.c.b16 %v653, %v651
    %v676 = vpack.c.b16 %v654, %v652
    %v677 = vpack.c.b16 %v657, %v655
    %v678 = vpack.c.b16 %v658, %v656
    %v679 = vpack.c.b16 %v661, %v659
    %v680 = vpack.c.b16 %v662, %v660
    %v681 = vpack.c.b16 %v665, %v663
    %v682 = vpack.c.b16 %v666, %v664
    %v683 = vpack.c.b16 %v669, %v667
    %v684 = vpack.c.b16 %v670, %v668
    %v685 = vpack.c.b16 %v673, %v671
    %v686 = vpack.c.b16 %v674, %v672
    %v700 = vsel %vm149, %v624, 0
    %v703 = vsel %vm149, %v625, 0
    %705 = vmatprep.subr.bf16.mxu0 0
    %706 = vmatpush1.bf16.msra.mxu0 0
    %707 = vmatprep.subr.bf16.mxu0 0
    %708 = vmatpush1.bf16.msra.mxu0 0
    %709 = vmatprep.subr.bf16.mxu0 %v686
    %710 = vmatpush1.bf16.msra.mxu0 %v685
    %711 = vmatprep.subr.bf16.mxu0 %v684
    %712 = vmatpush1.bf16.msra.mxu0 %v683
    %713 = vmatprep.subr.bf16.mxu0 %v682
    %714 = vmatpush1.bf16.msra.mxu0 %v681
    %715 = vmatprep.subr.bf16.mxu0 %v680
    %716 = vmatpush1.bf16.msra.mxu0 %v679
    %717 = vmatprep.subr.bf16.mxu0 %v678
    %718 = vmatpush1.bf16.msra.mxu0 %v677
    %719 = vmatprep.subr.bf16.mxu0 %v676
    %720 = vmatpush1.bf16.msra.mxu0 %v675
    %721 = vmatprep.subr.bf16.mxu0 0
    %722 = vmatpush2.bf16.msra.mxu0 0
    %723 = vmatprep.subr.bf16.mxu0 0
    %724 = vmatpush2.bf16.msra.mxu0 0
    %725 = vmatprep.subr.bf16.mxu0 0
    %726 = vmatpush2.bf16.msra.mxu0 0
    %727 = vmatprep.subr.bf16.mxu0 0
    %728 = vmatpush2.bf16.msra.mxu0 0
    %729 = vmatprep.subr.bf16.mxu0 0
    %730 = vmatpush2.bf16.msra.mxu0 0
    %731 = vmatprep.subr.bf16.mxu0 0
    %732 = vmatpush2.bf16.msra.mxu0 0
    %733 = vmatprep.subr.bf16.mxu0 0
    %734 = vmatpush2.bf16.msra.mxu0 0
    %735 = vmatprep.subr.bf16.mxu0 0
    %736 = vmatpush2.bf16.msra.mxu0 0
    %737 = vmatprep.mubr.bf16.mxu0 0
    %738 = vmatmul.mubr.bf16.gmra.mxu0 %v700
    %v739 = vpop.f32.mrf.mxu0
    %v740 = vadd.f32 0.0, %v739
    %v741 = vpop.f32.mrf.mxu0
    %v742 = vadd.f32 0.0, %v741
    %v743 = vpop.f32.mrf.mxu0
    %v744 = vadd.f32 0.0, %v743
    %v745 = vpop.f32.mrf.mxu0
    %v746 = vadd.f32 0.0, %v745
    %747 = vmatprep.mubr.bf16.mxu0 0
    %748 = vmatmul.mubr.bf16.gmra.mxu0 %v703
    %v749 = vpop.f32.mrf.mxu0
    %v750 = vadd.f32 0.0, %v749
    %v751 = vpop.f32.mrf.mxu0
    %v752 = vadd.f32 0.0, %v751
    %v753 = vpop.f32.mrf.mxu0
    %v754 = vadd.f32 0.0, %v753
    %v755 = vpop.f32.mrf.mxu0
    %v756 = vadd.f32 0.0, %v755
    %757 = vdwg.mxu0
    %v758 = vadd.f32 %v612, %v740
    %v759 = vadd.f32 %v613, %v742
    %v760 = vadd.f32 %v614, %v744
    %v761 = vadd.f32 %v615, %v746
    %v762 = vadd.f32 %v616, %v750
    %v763 = vadd.f32 %v617, %v752
    %v764 = vadd.f32 %v618, %v754
    %v765 = vadd.f32 %v619, %v756
    %v766 = vld [vmem:[%s2] sm:$0x3]
    %v768 = vlaneseq
    %v769 = vshrl.u32 %v768, 7
    %v770 = vsub.s32 0, %v769
    %v771 = vrot.slane %v766, %v770
    %v772 = vlaneseq
    %v773 = vshrl.u32 %v772, 7
    %v774 = vsub.s32 1, %v773
    %v775 = vrot.slane %v766, %v774
    %v778 = vadd.f32 %v758, %v771
    %v779 = vadd.f32 %v759, %v775
    %v780 = vadd.f32 %v760, %v771
    %v781 = vadd.f32 %v761, %v775
    %v782 = vadd.f32 %v762, %v771
    %v783 = vadd.f32 %v763, %v775
    %v784 = vadd.f32 %v764, %v771
    %v785 = vadd.f32 %v765, %v775
    %v786 = vmax.f32 %v778, 0.0
    %v787 = vmax.f32 %v779, 0.0
    %v788 = vmax.f32 %v780, 0.0
    %v789 = vmax.f32 %v781, 0.0
    %v790 = vmax.f32 %v782, 0.0
    %v791 = vmax.f32 %v783, 0.0
    %v792 = vmax.f32 %v784, 0.0
    %v793 = vmax.f32 %v785, 0.0
    %794 = vst [vmem:[#allocation2] sm:$0xff] %v786
    %vm795 = vcmask 326656
    %796 = vst.msk [vmem:[#allocation2 + $0x8] sm:$0xff] %vm795, %v787
    %797 = vst [vmem:[#allocation2 + $0x10] sm:$0xff] %v788
    %798 = vst.msk [vmem:[#allocation2 + $0x18] sm:$0xff] %vm795, %v789
    %799 = vst [vmem:[#allocation2 + $0x20] sm:$0xff] %v790
    %800 = vst.msk [vmem:[#allocation2 + $0x28] sm:$0xff] %vm795, %v791
    %801 = vst [vmem:[#allocation2 + $0x30] sm:$0xf] %v792
    %vm802 = vcmask 322560
    %803 = vst.msk [vmem:[#allocation2 + $0x38] sm:$0xf] %vm802, %v793
    %v804 = vld [vmem:[#allocation2] sm:$0xff]
    %v805 = vld [vmem:[#allocation2 + $0x8] sm:$0xff]
    %v806 = vld [vmem:[#allocation2 + $0x10] sm:$0xff]
    %v807 = vld [vmem:[#allocation2 + $0x18] sm:$0xff]
    %v808 = vld [vmem:[#allocation2 + $0x20] sm:$0xff]
    %v809 = vld [vmem:[#allocation2 + $0x28] sm:$0xff]
    %v810 = vld [vmem:[#allocation2 + $0x30] sm:$0x7]
    %v811 = vld [vmem:[#allocation2 + $0x38] sm:$0x7]
    %820 = vrot.lane.b32.xlu0 %v804, 122
    %v821 = vpop.permute.xlu0 %820
    %822 = vrot.lane.b32.xlu0 %v805, 122
    %v823 = vpop.permute.xlu0 %822
    %824 = vrot.lane.b32.xlu0 %v806, 122
    %v825 = vpop.permute.xlu0 %824
    %826 = vrot.lane.b32.xlu0 %v807, 122
    %v827 = vpop.permute.xlu0 %826
    %828 = vrot.lane.b32.xlu0 %v808, 122
    %v829 = vpop.permute.xlu0 %828
    %830 = vrot.lane.b32.xlu0 %v809, 122
    %v831 = vpop.permute.xlu0 %830
    %832 = vrot.lane.b32.xlu0 %v810, 122
    %v833 = vpop.permute.xlu0 %832
    %834 = vrot.lane.b32.xlu0 %v811, 122
    %v835 = vpop.permute.xlu0 %834
    %vm836 = vcmask 998400
    %v837 = vsel %vm836, %v821, %v823
    %v838 = vsel %vm836, %v825, %v827
    %v839 = vsel %vm836, %v829, %v831
    %v840 = vsel %vm836, %v833, %v835
    %v849 = vmax.f32 %v804, %v837
    %v850 = vmax.f32 %v805, %v823
    %v851 = vmax.f32 %v806, %v838
    %v852 = vmax.f32 %v807, %v827
    %v853 = vmax.f32 %v808, %v839
    %v854 = vmax.f32 %v809, %v831
    %v855 = vmax.f32 %v810, %v840
    %v856 = vmax.f32 %v811, %v835
    %v857 = vld [vmem:[#allocation2] sm:$0xfe]
    %v858 = vld [vmem:[#allocation2 + $0x8] sm:$0xfe]
    %v859 = vld [vmem:[#allocation2 + $0x30] sm:$0xf]
    %v860 = vld [vmem:[#allocation2 + $0x38] sm:$0xf]
    %865 = vrot.lane.b32.xlu0 %v857, 122
    %v866 = vpop.permute.xlu0 %865
    %867 = vrot.lane.b32.xlu0 %v858, 122
    %v868 = vpop.permute.xlu0 %867
    %869 = vrot.lane.b32.xlu0 %v859, 122
    %v870 = vpop.permute.xlu0 %869
    %871 = vrot.lane.b32.xlu0 %v860, 122
    %v872 = vpop.permute.xlu0 %871
    %v873 = vsel %vm836, %v866, %v868
    %v874 = vsel %vm836, %v870, %v872
    %v879 = vmax.f32 %v857, %v873
    %v880 = vmax.f32 %v858, %v868
    %v881 = vmax.f32 %v859, %v874
    %v882 = vmax.f32 %v860, %v872
    %vm891 = vcmask 1046528
    %v892 = vrot.slane %v879, 1
    %v893 = vrot.slane %v851, 1
    %v894 = vsel %vm891, %v892, %v893
    %v895 = vrot.slane %v880, 1
    %v896 = vrot.slane %v852, 1
    %v897 = vsel %vm891, %v895, %v896
    %v898 = vrot.slane %v853, 1
    %v899 = vsel %vm891, %v893, %v898
    %v900 = vrot.slane %v854, 1
    %v901 = vsel %vm891, %v896, %v900
    %v902 = vrot.slane %v881, 1
    %v903 = vsel %vm891, %v898, %v902
    %v904 = vrot.slane %v882, 1
    %v905 = vsel %vm891, %v900, %v904
    %v914 = vmax.f32 %v849, %v894
    %v915 = vmax.f32 %v850, %v897
    %v916 = vmax.f32 %v851, %v899
    %v917 = vmax.f32 %v852, %v901
    %v918 = vmax.f32 %v853, %v903
    %v919 = vmax.f32 %v854, %v905
    %v920 = vmax.f32 %v855, %v902
    %v921 = vmax.f32 %v856, %v904
    %v922 = vld [vmem:[%s3] sm:$0xff]
    %v923 = vld [vmem:[%s3 + $0x8] sm:$0x3f]
    %vm924 = vcmask 220160
    %v926 = vsel %vm924, %v922, 0
    %v929 = vsel %vm924, %v923, 0
    %vm931 = vcmask 1042432
    %v933 = vsel %vm931, %v920, 0
    %v936 = vsel %vm931, %v921, 0
    %938 = vmatprep.subr.mxu0 0.0
    %939 = vmatpush1.msra.mxu0 0.0
    %940 = vmatprep.subr.mxu0 0.0
    %941 = vmatpush1.msra.mxu0 0.0
    %942 = vmatprep.subr.mxu0 0.0
    %943 = vmatpush1.msra.mxu0 0.0
    %944 = vmatprep.subr.mxu0 0.0
    %945 = vmatpush1.msra.mxu0 0.0
    %946 = vmatprep.subr.mxu0 0.0
    %947 = vmatpush1.msra.mxu0 0.0
    %948 = vmatprep.subr.mxu0 0.0
    %949 = vmatpush1.msra.mxu0 0.0
    %950 = vmatprep.subr.mxu0 0.0
    %951 = vmatpush1.msra.mxu0 0.0
    %952 = vmatprep.subr.mxu0 0.0
    %953 = vmatpush1.msra.mxu0 0.0
    %954 = vmatprep.subr.mxu0 0.0
    %955 = vmatpush1.msra.mxu0 0.0
    %956 = vmatprep.subr.mxu0 0.0
    %957 = vmatpush1.msra.mxu0 0.0
    %958 = vmatprep.subr.mxu0 0.0
    %959 = vmatpush1.msra.mxu0 0.0
    %960 = vmatprep.subr.mxu0 0.0
    %961 = vmatpush1.msra.mxu0 0.0
    %962 = vmatprep.subr.mxu0 %v936
    %963 = vmatpush1.msra.mxu0 %v933
    %964 = vmatprep.subr.mxu0 %v919
    %965 = vmatpush1.msra.mxu0 %v918
    %966 = vmatprep.subr.mxu0 %v917
    %967 = vmatpush1.msra.mxu0 %v916
    %968 = vmatprep.subr.mxu0 %v915
    %969 = vmatpush1.msra.mxu0 %v914
    %970 = vmatprep.subr.mxu0 0.0
    %971 = vmatpush2.msra.mxu0 0.0
    %972 = vmatprep.subr.mxu0 0.0
    %973 = vmatpush2.msra.mxu0 0.0
    %974 = vmatprep.subr.mxu0 0.0
    %975 = vmatpush2.msra.mxu0 0.0
    %976 = vmatprep.subr.mxu0 0.0
    %977 = vmatpush2.msra.mxu0 0.0
    %978 = vmatprep.subr.mxu0 0.0
    %979 = vmatpush2.msra.mxu0 0.0
    %980 = vmatprep.subr.mxu0 0.0
    %981 = vmatpush2.msra.mxu0 0.0
    %982 = vmatprep.subr.mxu0 0.0
    %983 = vmatpush2.msra.mxu0 0.0
    %984 = vmatprep.subr.mxu0 0.0
    %985 = vmatpush2.msra.mxu0 0.0
    %986 = vmatprep.subr.mxu0 0.0
    %987 = vmatpush2.msra.mxu0 0.0
    %988 = vmatprep.subr.mxu0 0.0
    %989 = vmatpush2.msra.mxu0 0.0
    %990 = vmatprep.subr.mxu0 0.0
    %991 = vmatpush2.msra.mxu0 0.0
    %992 = vmatprep.subr.mxu0 0.0
    %993 = vmatpush2.msra.mxu0 0.0
    %994 = vmatprep.subr.mxu0 0.0
    %995 = vmatpush2.msra.mxu0 0.0
    %996 = vmatprep.subr.mxu0 0.0
    %997 = vmatpush2.msra.mxu0 0.0
    %998 = vmatprep.subr.mxu0 0.0
    %999 = vmatpush2.msra.mxu0 0.0
    %1000 = vmatprep.subr.mxu0 0.0
    %1001 = vmatpush2.msra.mxu0 0.0
    %1002 = vmatprep.mubr.f32.mxu0 0.0
    %1003 = vmatmul.mubr.f32.gmra.mxu0 %v926
    %v1004 = vpop.f32.mrf.mxu0
    %v1005 = vadd.f32 0.0, %v1004
    %v1006 = vpop.f32.mrf.mxu0
    %v1007 = vadd.f32 0.0, %v1006
    %1008 = vmatprep.mubr.f32.mxu0 0.0
    %1009 = vmatmul.mubr.f32.gmra.mxu0 %v929
    %v1010 = vpop.f32.mrf.mxu0
    %v1011 = vadd.f32 0.0, %v1010
    %v1012 = vpop.f32.mrf.mxu0
    %v1013 = vadd.f32 0.0, %v1012
    %1014 = vdwg.mxu0
    %v1015 = vld [vmem:[%s4] sm:$0xff]
    %v1016 = vld [vmem:[%s4 + $0x8] sm:$0xff]
    %v1017 = vld [vmem:[%s4 + $0x10] sm:$0xff]
    %v1018 = vld [vmem:[%s4 + $0x18] sm:$0xff]
    %v1019 = vld [vmem:[%s4 + $0x20] sm:$0xff]
    %v1020 = vld [vmem:[%s4 + $0x28] sm:$0xff]
    %v1021 = vld [vmem:[%s4 + $0x30] sm:$0xff]
    %v1022 = vld [vmem:[%s4 + $0x38] sm:$0xff]
    %v1023 = vld [vmem:[%s4 + $0x40] sm:$0xff]
    %v1024 = vld [vmem:[%s4 + $0x48] sm:$0xff]
    %v1025 = vld [vmem:[%s4 + $0x50] sm:$0xff]
    %v1026 = vld [vmem:[%s4 + $0x58] sm:$0xff]
    %v1027 = vld [vmem:[%s4 + $0x60] sm:$0xff]
    %v1028 = vld [vmem:[%s4 + $0x68] sm:$0xff]
    %v1029 = vld [vmem:[%s4 + $0x70] sm:$0xff]
    %v1030 = vld [vmem:[%s4 + $0x78] sm:$0xff]
    %v1031 = vld [vmem:[%s4 + $0x80] sm:$0xff]
    %v1032 = vld [vmem:[%s4 + $0x88] sm:$0xff]
    %v1033 = vld [vmem:[%s4 + $0x90] sm:$0xff]
    %v1034 = vld [vmem:[%s4 + $0x98] sm:$0xff]
    %v1035 = vld [vmem:[%s4 + $0xa0] sm:$0x3]
    %vm1036 = vcmask 277504
    %v1038 = vsel %vm1036, %v1007, 0
    %v1041 = vsel %vm1036, %v1013, 0
    %vm1043 = vcmask 1041408
    %v1045 = vsel %vm1043, %v1035, 0
    %1047 = vmatprep.subr.mxu0 0.0
    %1048 = vmatpush1.msra.mxu0 %v1030
    %1049 = vmatprep.subr.mxu0 0.0
    %1050 = vmatpush1.msra.mxu0 %v1029
    %1051 = vmatprep.subr.mxu0 0.0
    %1052 = vmatpush1.msra.mxu0 %v1028
    %1053 = vmatprep.subr.mxu0 0.0
    %1054 = vmatpush1.msra.mxu0 %v1027
    %1055 = vmatprep.subr.mxu0 0.0
    %1056 = vmatpush1.msra.mxu0 %v1026
    %1057 = vmatprep.subr.mxu0 0.0
    %1058 = vmatpush1.msra.mxu0 %v1025
    %1059 = vmatprep.subr.mxu0 0.0
    %1060 = vmatpush1.msra.mxu0 %v1024
    %1061 = vmatprep.subr.mxu0 0.0
    %1062 = vmatpush1.msra.mxu0 %v1023
    %1063 = vmatprep.subr.mxu0 0.0
    %1064 = vmatpush1.msra.mxu0 %v1022
    %1065 = vmatprep.subr.mxu0 0.0
    %1066 = vmatpush1.msra.mxu0 %v1021
    %1067 = vmatprep.subr.mxu0 0.0
    %1068 = vmatpush1.msra.mxu0 %v1020
    %1069 = vmatprep.subr.mxu0 0.0
    %1070 = vmatpush1.msra.mxu0 %v1019
    %1071 = vmatprep.subr.mxu0 0.0
    %1072 = vmatpush1.msra.mxu0 %v1018
    %1073 = vmatprep.subr.mxu0 0.0
    %1074 = vmatpush1.msra.mxu0 %v1017
    %1075 = vmatprep.subr.mxu0 0.0
    %1076 = vmatpush1.msra.mxu0 %v1016
    %1077 = vmatprep.subr.mxu0 0.0
    %1078 = vmatpush1.msra.mxu0 %v1015
    %1079 = vmatprep.subr.mxu0 0.0
    %1080 = vmatpush2.msra.mxu0 0.0
    %1081 = vmatprep.subr.mxu0 0.0
    %1082 = vmatpush2.msra.mxu0 0.0
    %1083 = vmatprep.subr.mxu0 0.0
    %1084 = vmatpush2.msra.mxu0 0.0
    %1085 = vmatprep.subr.mxu0 0.0
    %1086 = vmatpush2.msra.mxu0 0.0
    %1087 = vmatprep.subr.mxu0 0.0
    %1088 = vmatpush2.msra.mxu0 0.0
    %1089 = vmatprep.subr.mxu0 0.0
    %1090 = vmatpush2.msra.mxu0 0.0
    %1091 = vmatprep.subr.mxu0 0.0
    %1092 = vmatpush2.msra.mxu0 0.0
    %1093 = vmatprep.subr.mxu0 0.0
    %1094 = vmatpush2.msra.mxu0 0.0
    %1095 = vmatprep.subr.mxu0 0.0
    %1096 = vmatpush2.msra.mxu0 0.0
    %1097 = vmatprep.subr.mxu0 0.0
    %1098 = vmatpush2.msra.mxu0 0.0
    %1099 = vmatprep.subr.mxu0 0.0
    %1100 = vmatpush2.msra.mxu0 0.0
    %1101 = vmatprep.subr.mxu0 0.0
    %1102 = vmatpush2.msra.mxu0 %v1045
    %1103 = vmatprep.subr.mxu0 0.0
    %1104 = vmatpush2.msra.mxu0 %v1034
    %1105 = vmatprep.subr.mxu0 0.0
    %1106 = vmatpush2.msra.mxu0 %v1033
    %1107 = vmatprep.subr.mxu0 0.0
    %1108 = vmatpush2.msra.mxu0 %v1032
    %1109 = vmatprep.subr.mxu0 0.0
    %1110 = vmatpush2.msra.mxu0 %v1031
    %1111 = vmatprep.mubr.f32.mxu0 %v1038
    %1112 = vmatmul.mubr.f32.gmra.mxu0 %v1005
    %v1113 = vpop.f32.mrf.mxu0
    %v1114 = vadd.f32 0.0, %v1113
    %v1115 = vpop.f32.mrf.mxu0
    %1116 = vmatprep.mubr.f32.mxu0 %v1041
    %1117 = vmatmul.mubr.f32.gmra.mxu0 %v1011
    %v1118 = vpop.f32.mrf.mxu0
    %v1119 = vadd.f32 0.0, %v1118
    %v1120 = vpop.f32.mrf.mxu0
    %1121 = vdwg.mxu0
    %vm1122 = vcmask 687104
    %1123 = vst.msk [vmem:[#allocation3] sm:$0xff] %vm1122, %v1114
    %vm1124 = vcmask 685056
    %1125 = vst.msk [vmem:[#allocation3 + $0x8] sm:$0x3f] %vm1124, %v1119
    %v1126 = vld [vmem:[#allocation3] sm:$0xff]
    %v1127 = vld [vmem:[#allocation3 + $0x8] sm:$0x3]
    %v1128 = vpack.c.bf16 %v1127, %v1126
    %v1129 = vld [vmem:[%s5] sm:$0xff]
    %v1130 = vld [vmem:[%s5 + $0x8] sm:$0xff]
    %v1131 = vld [vmem:[%s5 + $0x10] sm:$0xff]
    %v1132 = vld [vmem:[%s5 + $0x18] sm:$0xff]
    %v1133 = vld [vmem:[%s5 + $0x20] sm:$0xff]
    %v1134 = vld [vmem:[%s5 + $0x28] sm:$0xff]
    %v1135 = vld [vmem:[%s5 + $0x30] sm:$0xff]
    %v1136 = vld [vmem:[%s5 + $0x38] sm:$0xff]
    %v1137 = vld [vmem:[%s5 + $0x40] sm:$0xff]
    %v1138 = vld [vmem:[%s5 + $0x48] sm:$0xff]
    %v1139 = vld [vmem:[%s5 + $0x50] sm:$0x33]
    %v1140 = vld [vmem:[#allocation3 + $0x1] sm:$0xff]
    %v1141 = vld [vmem:[#allocation3 + $0x9] sm:$0x3]
    %v1142 = vpack.c.bf16 %v1141, %v1140
    %s1143 = scalar_lea.vmem %s5, 88
    %v1144 = vld [vmem:[%s1143] sm:$0xff]
    %v1145 = vld [vmem:[%s1143 + $0x8] sm:$0xff]
    %v1146 = vld [vmem:[%s1143 + $0x10] sm:$0xff]
    %v1147 = vld [vmem:[%s1143 + $0x18] sm:$0xff]
    %v1148 = vld [vmem:[%s1143 + $0x20] sm:$0xff]
    %v1149 = vld [vmem:[%s1143 + $0x28] sm:$0xff]
    %v1150 = vld [vmem:[%s1143 + $0x30] sm:$0xff]
    %v1151 = vld [vmem:[%s1143 + $0x38] sm:$0xff]
    %v1152 = vld [vmem:[%s1143 + $0x40] sm:$0xff]
    %v1153 = vld [vmem:[%s1143 + $0x48] sm:$0xff]
    %v1154 = vld [vmem:[%s1143 + $0x50] sm:$0x33]
    %v1166 = vunpack.c.l.b16 %v1144
    %v1167 = vunpack.c.h.b16 %v1144
    %v1168 = vunpack.c.l.b16 %v1145
    %v1169 = vunpack.c.h.b16 %v1145
    %v1170 = vunpack.c.l.b16 %v1146
    %v1171 = vunpack.c.h.b16 %v1146
    %v1172 = vunpack.c.l.b16 %v1147
    %v1173 = vunpack.c.h.b16 %v1147
    %v1174 = vunpack.c.l.b16 %v1148
    %v1175 = vunpack.c.h.b16 %v1148
    %v1176 = vunpack.c.l.b16 %v1149
    %v1177 = vunpack.c.h.b16 %v1149
    %v1178 = vunpack.c.l.b16 %v1150
    %v1179 = vunpack.c.h.b16 %v1150
    %v1180 = vunpack.c.l.b16 %v1151
    %v1181 = vunpack.c.h.b16 %v1151
    %v1182 = vunpack.c.l.b16 %v1152
    %v1183 = vunpack.c.h.b16 %v1152
    %v1184 = vunpack.c.l.b16 %v1153
    %v1185 = vunpack.c.h.b16 %v1153
    %v1186 = vunpack.c.l.b16 %v1154
    %v1187 = vunpack.c.h.b16 %v1154
    %v1188 = vpack.c.b16 %v1168, %v1166
    %v1189 = vpack.c.b16 %v1169, %v1167
    %v1190 = vpack.c.b16 %v1172, %v1170
    %v1191 = vpack.c.b16 %v1173, %v1171
    %v1192 = vpack.c.b16 %v1176, %v1174
    %v1193 = vpack.c.b16 %v1177, %v1175
    %v1194 = vpack.c.b16 %v1180, %v1178
    %v1195 = vpack.c.b16 %v1181, %v1179
    %v1196 = vpack.c.b16 %v1184, %v1182
    %v1197 = vpack.c.b16 %v1185, %v1183
    %v1198 = vpack.c.b16 %v1186, %v1186
    %v1199 = vpack.c.b16 %v1187, %v1187
    %v1211 = vsel %vm1122, %v1142, 0
    %v1214 = vsel %vm1043, %v1198, 0
    %v1217 = vsel %vm1043, %v1199, 0
    %1219 = vmatprep.subr.bf16.mxu0 0
    %1220 = vmatpush1.bf16.msra.mxu0 0
    %1221 = vmatprep.subr.bf16.mxu0 0
    %1222 = vmatpush1.bf16.msra.mxu0 0
    %1223 = vmatprep.subr.bf16.mxu0 %v1217
    %1224 = vmatpush1.bf16.msra.mxu0 %v1214
    %1225 = vmatprep.subr.bf16.mxu0 %v1197
    %1226 = vmatpush1.bf16.msra.mxu0 %v1196
    %1227 = vmatprep.subr.bf16.mxu0 %v1195
    %1228 = vmatpush1.bf16.msra.mxu0 %v1194
    %1229 = vmatprep.subr.bf16.mxu0 %v1193
    %1230 = vmatpush1.bf16.msra.mxu0 %v1192
    %1231 = vmatprep.subr.bf16.mxu0 %v1191
    %1232 = vmatpush1.bf16.msra.mxu0 %v1190
    %1233 = vmatprep.subr.bf16.mxu0 %v1189
    %1234 = vmatpush1.bf16.msra.mxu0 %v1188
    %1235 = vmatprep.subr.bf16.mxu0 0
    %1236 = vmatpush2.bf16.msra.mxu0 0
    %1237 = vmatprep.subr.bf16.mxu0 0
    %1238 = vmatpush2.bf16.msra.mxu0 0
    %1239 = vmatprep.subr.bf16.mxu0 0
    %1240 = vmatpush2.bf16.msra.mxu0 0
    %1241 = vmatprep.subr.bf16.mxu0 0
    %1242 = vmatpush2.bf16.msra.mxu0 0
    %1243 = vmatprep.subr.bf16.mxu0 0
    %1244 = vmatpush2.bf16.msra.mxu0 0
    %1245 = vmatprep.subr.bf16.mxu0 0
    %1246 = vmatpush2.bf16.msra.mxu0 0
    %1247 = vmatprep.subr.bf16.mxu0 0
    %1248 = vmatpush2.bf16.msra.mxu0 0
    %1249 = vmatprep.subr.bf16.mxu0 0
    %1250 = vmatpush2.bf16.msra.mxu0 0
    %1251 = vmatprep.mubr.bf16.mxu0 0
    %1252 = vmatmul.mubr.bf16.gmra.mxu0 %v1211
    %v1253 = vpop.f32.mrf.mxu0
    %v1254 = vadd.f32 0.0, %v1253
    %v1255 = vpop.f32.mrf.mxu0
    %v1256 = vadd.f32 0.0, %v1255
    %v1257 = vpop.f32.mrf.mxu0
    %v1258 = vadd.f32 0.0, %v1257
    %v1259 = vpop.f32.mrf.mxu0
    %v1260 = vadd.f32 0.0, %v1259
    %1261 = vdwg.mxu0
    %v1273 = vunpack.c.l.b16 %v1129
    %v1274 = vunpack.c.h.b16 %v1129
    %v1275 = vunpack.c.l.b16 %v1130
    %v1276 = vunpack.c.h.b16 %v1130
    %v1277 = vunpack.c.l.b16 %v1131
    %v1278 = vunpack.c.h.b16 %v1131
    %v1279 = vunpack.c.l.b16 %v1132
    %v1280 = vunpack.c.h.b16 %v1132
    %v1281 = vunpack.c.l.b16 %v1133
    %v1282 = vunpack.c.h.b16 %v1133
    %v1283 = vunpack.c.l.b16 %v1134
    %v1284 = vunpack.c.h.b16 %v1134
    %v1285 = vunpack.c.l.b16 %v1135
    %v1286 = vunpack.c.h.b16 %v1135
    %v1287 = vunpack.c.l.b16 %v1136
    %v1288 = vunpack.c.h.b16 %v1136
    %v1289 = vunpack.c.l.b16 %v1137
    %v1290 = vunpack.c.h.b16 %v1137
    %v1291 = vunpack.c.l.b16 %v1138
    %v1292 = vunpack.c.h.b16 %v1138
    %v1293 = vunpack.c.l.b16 %v1139
    %v1294 = vunpack.c.h.b16 %v1139
    %v1295 = vpack.c.b16 %v1275, %v1273
    %v1296 = vpack.c.b16 %v1276, %v1274
    %v1297 = vpack.c.b16 %v1279, %v1277
    %v1298 = vpack.c.b16 %v1280, %v1278
    %v1299 = vpack.c.b16 %v1283, %v1281
    %v1300 = vpack.c.b16 %v1284, %v1282
    %v1301 = vpack.c.b16 %v1287, %v1285
    %v1302 = vpack.c.b16 %v1288, %v1286
    %v1303 = vpack.c.b16 %v1291, %v1289
    %v1304 = vpack.c.b16 %v1292, %v1290
    %v1305 = vpack.c.b16 %v1293, %v1293
    %v1306 = vpack.c.b16 %v1294, %v1294
    %v1318 = vsel %vm1122, %v1128, 0
    %v1321 = vsel %vm1043, %v1305, 0
    %v1324 = vsel %vm1043, %v1306, 0
    %1326 = vmatprep.subr.bf16.mxu0 0
    %1327 = vmatpush1.bf16.msra.mxu0 0
    %1328 = vmatprep.subr.bf16.mxu0 0
    %1329 = vmatpush1.bf16.msra.mxu0 0
    %1330 = vmatprep.subr.bf16.mxu0 %v1324
    %1331 = vmatpush1.bf16.msra.mxu0 %v1321
    %1332 = vmatprep.subr.bf16.mxu0 %v1304
    %1333 = vmatpush1.bf16.msra.mxu0 %v1303
    %1334 = vmatprep.subr.bf16.mxu0 %v1302
    %1335 = vmatpush1.bf16.msra.mxu0 %v1301
    %1336 = vmatprep.subr.bf16.mxu0 %v1300
    %1337 = vmatpush1.bf16.msra.mxu0 %v1299
    %1338 = vmatprep.subr.bf16.mxu0 %v1298
    %1339 = vmatpush1.bf16.msra.mxu0 %v1297
    %1340 = vmatprep.subr.bf16.mxu0 %v1296
    %1341 = vmatpush1.bf16.msra.mxu0 %v1295
    %1342 = vmatprep.subr.bf16.mxu0 0
    %1343 = vmatpush2.bf16.msra.mxu0 0
    %1344 = vmatprep.subr.bf16.mxu0 0
    %1345 = vmatpush2.bf16.msra.mxu0 0
    %1346 = vmatprep.subr.bf16.mxu0 0
    %1347 = vmatpush2.bf16.msra.mxu0 0
    %1348 = vmatprep.subr.bf16.mxu0 0
    %1349 = vmatpush2.bf16.msra.mxu0 0
    %1350 = vmatprep.subr.bf16.mxu0 0
    %1351 = vmatpush2.bf16.msra.mxu0 0
    %1352 = vmatprep.subr.bf16.mxu0 0
    %1353 = vmatpush2.bf16.msra.mxu0 0
    %1354 = vmatprep.subr.bf16.mxu0 0
    %1355 = vmatpush2.bf16.msra.mxu0 0
    %1356 = vmatprep.subr.bf16.mxu0 0
    %1357 = vmatpush2.bf16.msra.mxu0 0
    %1358 = vmatprep.mubr.bf16.mxu0 0
    %1359 = vmatmul.mubr.bf16.gmra.mxu0 %v1318
    %v1360 = vpop.f32.mrf.mxu0
    %v1361 = vadd.f32 %v1254, %v1360
    %v1362 = vpop.f32.mrf.mxu0
    %v1363 = vadd.f32 %v1256, %v1362
    %v1364 = vpop.f32.mrf.mxu0
    %v1365 = vadd.f32 %v1258, %v1364
    %v1366 = vpop.f32.mrf.mxu0
    %v1367 = vadd.f32 %v1260, %v1366
    %1368 = vdwg.mxu0
    %v1369 = vld [vmem:[#allocation3 + $0x2] sm:$0xff]
    %v1370 = vld [vmem:[#allocation3 + $0xa] sm:$0x3]
    %v1371 = vpack.c.bf16 %v1370, %v1369
    %s1372 = scalar_lea.vmem %s5, 176
    %v1373 = vld [vmem:[%s1372] sm:$0xff]
    %v1374 = vld [vmem:[%s1372 + $0x8] sm:$0xff]
    %v1375 = vld [vmem:[%s1372 + $0x10] sm:$0xff]
    %v1376 = vld [vmem:[%s1372 + $0x18] sm:$0xff]
    %v1377 = vld [vmem:[%s1372 + $0x20] sm:$0xff]
    %v1378 = vld [vmem:[%s1372 + $0x28] sm:$0xff]
    %v1379 = vld [vmem:[%s1372 + $0x30] sm:$0xff]
    %v1380 = vld [vmem:[%s1372 + $0x38] sm:$0xff]
    %v1381 = vld [vmem:[%s1372 + $0x40] sm:$0xff]
    %v1382 = vld [vmem:[%s1372 + $0x48] sm:$0xff]
    %v1383 = vld [vmem:[%s1372 + $0x50] sm:$0x33]
    %v1395 = vunpack.c.l.b16 %v1373
    %v1396 = vunpack.c.h.b16 %v1373
    %v1397 = vunpack.c.l.b16 %v1374
    %v1398 = vunpack.c.h.b16 %v1374
    %v1399 = vunpack.c.l.b16 %v1375
    %v1400 = vunpack.c.h.b16 %v1375
    %v1401 = vunpack.c.l.b16 %v1376
    %v1402 = vunpack.c.h.b16 %v1376
    %v1403 = vunpack.c.l.b16 %v1377
    %v1404 = vunpack.c.h.b16 %v1377
    %v1405 = vunpack.c.l.b16 %v1378
    %v1406 = vunpack.c.h.b16 %v1378
    %v1407 = vunpack.c.l.b16 %v1379
    %v1408 = vunpack.c.h.b16 %v1379
    %v1409 = vunpack.c.l.b16 %v1380
    %v1410 = vunpack.c.h.b16 %v1380
    %v1411 = vunpack.c.l.b16 %v1381
    %v1412 = vunpack.c.h.b16 %v1381
    %v1413 = vunpack.c.l.b16 %v1382
    %v1414 = vunpack.c.h.b16 %v1382
    %v1415 = vunpack.c.l.b16 %v1383
    %v1416 = vunpack.c.h.b16 %v1383
    %v1417 = vpack.c.b16 %v1397, %v1395
    %v1418 = vpack.c.b16 %v1398, %v1396
    %v1419 = vpack.c.b16 %v1401, %v1399
    %v1420 = vpack.c.b16 %v1402, %v1400
    %v1421 = vpack.c.b16 %v1405, %v1403
    %v1422 = vpack.c.b16 %v1406, %v1404
    %v1423 = vpack.c.b16 %v1409, %v1407
    %v1424 = vpack.c.b16 %v1410, %v1408
    %v1425 = vpack.c.b16 %v1413, %v1411
    %v1426 = vpack.c.b16 %v1414, %v1412
    %v1427 = vpack.c.b16 %v1415, %v1415
    %v1428 = vpack.c.b16 %v1416, %v1416
    %v1440 = vsel %vm1122, %v1371, 0
    %v1443 = vsel %vm1043, %v1427, 0
    %v1446 = vsel %vm1043, %v1428, 0
    %1448 = vmatprep.subr.bf16.mxu0 0
    %1449 = vmatpush1.bf16.msra.mxu0 0
    %1450 = vmatprep.subr.bf16.mxu0 0
    %1451 = vmatpush1.bf16.msra.mxu0 0
    %1452 = vmatprep.subr.bf16.mxu0 %v1446
    %1453 = vmatpush1.bf16.msra.mxu0 %v1443
    %1454 = vmatprep.subr.bf16.mxu0 %v1426
    %1455 = vmatpush1.bf16.msra.mxu0 %v1425
    %1456 = vmatprep.subr.bf16.mxu0 %v1424
    %1457 = vmatpush1.bf16.msra.mxu0 %v1423
    %1458 = vmatprep.subr.bf16.mxu0 %v1422
    %1459 = vmatpush1.bf16.msra.mxu0 %v1421
    %1460 = vmatprep.subr.bf16.mxu0 %v1420
    %1461 = vmatpush1.bf16.msra.mxu0 %v1419
    %1462 = vmatprep.subr.bf16.mxu0 %v1418
    %1463 = vmatpush1.bf16.msra.mxu0 %v1417
    %1464 = vmatprep.subr.bf16.mxu0 0
    %1465 = vmatpush2.bf16.msra.mxu0 0
    %1466 = vmatprep.subr.bf16.mxu0 0
    %1467 = vmatpush2.bf16.msra.mxu0 0
    %1468 = vmatprep.subr.bf16.mxu0 0
    %1469 = vmatpush2.bf16.msra.mxu0 0
    %1470 = vmatprep.subr.bf16.mxu0 0
    %1471 = vmatpush2.bf16.msra.mxu0 0
    %1472 = vmatprep.subr.bf16.mxu0 0
    %1473 = vmatpush2.bf16.msra.mxu0 0
    %1474 = vmatprep.subr.bf16.mxu0 0
    %1475 = vmatpush2.bf16.msra.mxu0 0
    %1476 = vmatprep.subr.bf16.mxu0 0
    %1477 = vmatpush2.bf16.msra.mxu0 0
    %1478 = vmatprep.subr.bf16.mxu0 0
    %1479 = vmatpush2.bf16.msra.mxu0 0
    %1480 = vmatprep.mubr.bf16.mxu0 0
    %1481 = vmatmul.mubr.bf16.gmra.mxu0 %v1440
    %v1482 = vpop.f32.mrf.mxu0
    %v1483 = vadd.f32 0.0, %v1482
    %v1484 = vpop.f32.mrf.mxu0
    %v1485 = vadd.f32 0.0, %v1484
    %v1486 = vpop.f32.mrf.mxu0
    %v1487 = vadd.f32 0.0, %v1486
    %v1488 = vpop.f32.mrf.mxu0
    %v1489 = vadd.f32 0.0, %v1488
    %1490 = vdwg.mxu0
    %v1491 = vadd.f32 %v1361, %v1483
    %v1492 = vadd.f32 %v1363, %v1485
    %v1493 = vadd.f32 %v1365, %v1487
    %v1494 = vadd.f32 %v1367, %v1489
    %v1495 = vld [vmem:[#allocation3 + $0x3] sm:$0xff]
    %v1496 = vld [vmem:[#allocation3 + $0xb] sm:$0x3]
    %v1497 = vpack.c.bf16 %v1496, %v1495
    %s1498 = scalar_lea.vmem %s5, 264
    %v1499 = vld [vmem:[%s1498] sm:$0xff]
    %v1500 = vld [vmem:[%s1498 + $0x8] sm:$0xff]
    %v1501 = vld [vmem:[%s1498 + $0x10] sm:$0xff]
    %v1502 = vld [vmem:[%s1498 + $0x18] sm:$0xff]
    %v1503 = vld [vmem:[%s1498 + $0x20] sm:$0xff]
    %v1504 = vld [vmem:[%s1498 + $0x28] sm:$0xff]
    %v1505 = vld [vmem:[%s1498 + $0x30] sm:$0xff]
    %v1506 = vld [vmem:[%s1498 + $0x38] sm:$0xff]
    %v1507 = vld [vmem:[%s1498 + $0x40] sm:$0xff]
    %v1508 = vld [vmem:[%s1498 + $0x48] sm:$0xff]
    %v1509 = vld [vmem:[%s1498 + $0x50] sm:$0x33]
    %v1521 = vunpack.c.l.b16 %v1499
    %v1522 = vunpack.c.h.b16 %v1499
    %v1523 = vunpack.c.l.b16 %v1500
    %v1524 = vunpack.c.h.b16 %v1500
    %v1525 = vunpack.c.l.b16 %v1501
    %v1526 = vunpack.c.h.b16 %v1501
    %v1527 = vunpack.c.l.b16 %v1502
    %v1528 = vunpack.c.h.b16 %v1502
    %v1529 = vunpack.c.l.b16 %v1503
    %v1530 = vunpack.c.h.b16 %v1503
    %v1531 = vunpack.c.l.b16 %v1504
    %v1532 = vunpack.c.h.b16 %v1504
    %v1533 = vunpack.c.l.b16 %v1505
    %v1534 = vunpack.c.h.b16 %v1505
    %v1535 = vunpack.c.l.b16 %v1506
    %v1536 = vunpack.c.h.b16 %v1506
    %v1537 = vunpack.c.l.b16 %v1507
    %v1538 = vunpack.c.h.b16 %v1507
    %v1539 = vunpack.c.l.b16 %v1508
    %v1540 = vunpack.c.h.b16 %v1508
    %v1541 = vunpack.c.l.b16 %v1509
    %v1542 = vunpack.c.h.b16 %v1509
    %v1543 = vpack.c.b16 %v1523, %v1521
    %v1544 = vpack.c.b16 %v1524, %v1522
    %v1545 = vpack.c.b16 %v1527, %v1525
    %v1546 = vpack.c.b16 %v1528, %v1526
    %v1547 = vpack.c.b16 %v1531, %v1529
    %v1548 = vpack.c.b16 %v1532, %v1530
    %v1549 = vpack.c.b16 %v1535, %v1533
    %v1550 = vpack.c.b16 %v1536, %v1534
    %v1551 = vpack.c.b16 %v1539, %v1537
    %v1552 = vpack.c.b16 %v1540, %v1538
    %v1553 = vpack.c.b16 %v1541, %v1541
    %v1554 = vpack.c.b16 %v1542, %v1542
    %v1566 = vsel %vm1122, %v1497, 0
    %v1569 = vsel %vm1043, %v1553, 0
    %v1572 = vsel %vm1043, %v1554, 0
    %1574 = vmatprep.subr.bf16.mxu0 0
    %1575 = vmatpush1.bf16.msra.mxu0 0
    %1576 = vmatprep.subr.bf16.mxu0 0
    %1577 = vmatpush1.bf16.msra.mxu0 0
    %1578 = vmatprep.subr.bf16.mxu0 %v1572
    %1579 = vmatpush1.bf16.msra.mxu0 %v1569
    %1580 = vmatprep.subr.bf16.mxu0 %v1552
    %1581 = vmatpush1.bf16.msra.mxu0 %v1551
    %1582 = vmatprep.subr.bf16.mxu0 %v1550
    %1583 = vmatpush1.bf16.msra.mxu0 %v1549
    %1584 = vmatprep.subr.bf16.mxu0 %v1548
    %1585 = vmatpush1.bf16.msra.mxu0 %v1547
    %1586 = vmatprep.subr.bf16.mxu0 %v1546
    %1587 = vmatpush1.bf16.msra.mxu0 %v1545
    %1588 = vmatprep.subr.bf16.mxu0 %v1544
    %1589 = vmatpush1.bf16.msra.mxu0 %v1543
    %1590 = vmatprep.subr.bf16.mxu0 0
    %1591 = vmatpush2.bf16.msra.mxu0 0
    %1592 = vmatprep.subr.bf16.mxu0 0
    %1593 = vmatpush2.bf16.msra.mxu0 0
    %1594 = vmatprep.subr.bf16.mxu0 0
    %1595 = vmatpush2.bf16.msra.mxu0 0
    %1596 = vmatprep.subr.bf16.mxu0 0
    %1597 = vmatpush2.bf16.msra.mxu0 0
    %1598 = vmatprep.subr.bf16.mxu0 0
    %1599 = vmatpush2.bf16.msra.mxu0 0
    %1600 = vmatprep.subr.bf16.mxu0 0
    %1601 = vmatpush2.bf16.msra.mxu0 0
    %1602 = vmatprep.subr.bf16.mxu0 0
    %1603 = vmatpush2.bf16.msra.mxu0 0
    %1604 = vmatprep.subr.bf16.mxu0 0
    %1605 = vmatpush2.bf16.msra.mxu0 0
    %1606 = vmatprep.mubr.bf16.mxu0 0
    %1607 = vmatmul.mubr.bf16.gmra.mxu0 %v1566
    %v1608 = vpop.f32.mrf.mxu0
    %v1609 = vadd.f32 0.0, %v1608
    %v1610 = vpop.f32.mrf.mxu0
    %v1611 = vadd.f32 0.0, %v1610
    %v1612 = vpop.f32.mrf.mxu0
    %v1613 = vadd.f32 0.0, %v1612
    %v1614 = vpop.f32.mrf.mxu0
    %v1615 = vadd.f32 0.0, %v1614
    %1616 = vdwg.mxu0
    %v1617 = vadd.f32 %v1491, %v1609
    %v1618 = vadd.f32 %v1492, %v1611
    %v1619 = vadd.f32 %v1493, %v1613
    %v1620 = vadd.f32 %v1494, %v1615
    %v1621 = vld [vmem:[#allocation3 + $0x4] sm:$0xff]
    %v1622 = vld [vmem:[#allocation3 + $0xc] sm:$0x3]
    %v1623 = vpack.c.bf16 %v1622, %v1621
    %s1624 = scalar_lea.vmem %s5, 352
    %v1625 = vld [vmem:[%s1624] sm:$0xff]
    %v1626 = vld [vmem:[%s1624 + $0x8] sm:$0xff]
    %v1627 = vld [vmem:[%s1624 + $0x10] sm:$0xff]
    %v1628 = vld [vmem:[%s1624 + $0x18] sm:$0xff]
    %v1629 = vld [vmem:[%s1624 + $0x20] sm:$0xff]
    %v1630 = vld [vmem:[%s1624 + $0x28] sm:$0xff]
    %v1631 = vld [vmem:[%s1624 + $0x30] sm:$0xff]
    %v1632 = vld [vmem:[%s1624 + $0x38] sm:$0xff]
    %v1633 = vld [vmem:[%s1624 + $0x40] sm:$0xff]
    %v1634 = vld [vmem:[%s1624 + $0x48] sm:$0xff]
    %v1635 = vld [vmem:[%s1624 + $0x50] sm:$0x33]
    %v1647 = vunpack.c.l.b16 %v1625
    %v1648 = vunpack.c.h.b16 %v1625
    %v1649 = vunpack.c.l.b16 %v1626
    %v1650 = vunpack.c.h.b16 %v1626
    %v1651 = vunpack.c.l.b16 %v1627
    %v1652 = vunpack.c.h.b16 %v1627
    %v1653 = vunpack.c.l.b16 %v1628
    %v1654 = vunpack.c.h.b16 %v1628
    %v1655 = vunpack.c.l.b16 %v1629
    %v1656 = vunpack.c.h.b16 %v1629
    %v1657 = vunpack.c.l.b16 %v1630
    %v1658 = vunpack.c.h.b16 %v1630
    %v1659 = vunpack.c.l.b16 %v1631
    %v1660 = vunpack.c.h.b16 %v1631
    %v1661 = vunpack.c.l.b16 %v1632
    %v1662 = vunpack.c.h.b16 %v1632
    %v1663 = vunpack.c.l.b16 %v1633
    %v1664 = vunpack.c.h.b16 %v1633
    %v1665 = vunpack.c.l.b16 %v1634
    %v1666 = vunpack.c.h.b16 %v1634
    %v1667 = vunpack.c.l.b16 %v1635
    %v1668 = vunpack.c.h.b16 %v1635
    %v1669 = vpack.c.b16 %v1649, %v1647
    %v1670 = vpack.c.b16 %v1650, %v1648
    %v1671 = vpack.c.b16 %v1653, %v1651
    %v1672 = vpack.c.b16 %v1654, %v1652
    %v1673 = vpack.c.b16 %v1657, %v1655
    %v1674 = vpack.c.b16 %v1658, %v1656
    %v1675 = vpack.c.b16 %v1661, %v1659
    %v1676 = vpack.c.b16 %v1662, %v1660
    %v1677 = vpack.c.b16 %v1665, %v1663
    %v1678 = vpack.c.b16 %v1666, %v1664
    %v1679 = vpack.c.b16 %v1667, %v1667
    %v1680 = vpack.c.b16 %v1668, %v1668
    %v1692 = vsel %vm1122, %v1623, 0
    %v1695 = vsel %vm1043, %v1679, 0
    %v1698 = vsel %vm1043, %v1680, 0
    %1700 = vmatprep.subr.bf16.mxu0 0
    %1701 = vmatpush1.bf16.msra.mxu0 0
    %1702 = vmatprep.subr.bf16.mxu0 0
    %1703 = vmatpush1.bf16.msra.mxu0 0
    %1704 = vmatprep.subr.bf16.mxu0 %v1698
    %1705 = vmatpush1.bf16.msra.mxu0 %v1695
    %1706 = vmatprep.subr.bf16.mxu0 %v1678
    %1707 = vmatpush1.bf16.msra.mxu0 %v1677
    %1708 = vmatprep.subr.bf16.mxu0 %v1676
    %1709 = vmatpush1.bf16.msra.mxu0 %v1675
    %1710 = vmatprep.subr.bf16.mxu0 %v1674
    %1711 = vmatpush1.bf16.msra.mxu0 %v1673
    %1712 = vmatprep.subr.bf16.mxu0 %v1672
    %1713 = vmatpush1.bf16.msra.mxu0 %v1671
    %1714 = vmatprep.subr.bf16.mxu0 %v1670
    %1715 = vmatpush1.bf16.msra.mxu0 %v1669
    %1716 = vmatprep.subr.bf16.mxu0 0
    %1717 = vmatpush2.bf16.msra.mxu0 0
    %1718 = vmatprep.subr.bf16.mxu0 0
    %1719 = vmatpush2.bf16.msra.mxu0 0
    %1720 = vmatprep.subr.bf16.mxu0 0
    %1721 = vmatpush2.bf16.msra.mxu0 0
    %1722 = vmatprep.subr.bf16.mxu0 0
    %1723 = vmatpush2.bf16.msra.mxu0 0
    %1724 = vmatprep.subr.bf16.mxu0 0
    %1725 = vmatpush2.bf16.msra.mxu0 0
    %1726 = vmatprep.subr.bf16.mxu0 0
    %1727 = vmatpush2.bf16.msra.mxu0 0
    %1728 = vmatprep.subr.bf16.mxu0 0
    %1729 = vmatpush2.bf16.msra.mxu0 0
    %1730 = vmatprep.subr.bf16.mxu0 0
    %1731 = vmatpush2.bf16.msra.mxu0 0
    %1732 = vmatprep.mubr.bf16.mxu0 0
    %1733 = vmatmul.mubr.bf16.gmra.mxu0 %v1692
    %v1734 = vpop.f32.mrf.mxu0
    %v1735 = vadd.f32 0.0, %v1734
    %v1736 = vpop.f32.mrf.mxu0
    %v1737 = vadd.f32 0.0, %v1736
    %v1738 = vpop.f32.mrf.mxu0
    %v1739 = vadd.f32 0.0, %v1738
    %v1740 = vpop.f32.mrf.mxu0
    %v1741 = vadd.f32 0.0, %v1740
    %1742 = vdwg.mxu0
    %v1743 = vadd.f32 %v1617, %v1735
    %v1744 = vadd.f32 %v1618, %v1737
    %v1745 = vadd.f32 %v1619, %v1739
    %v1746 = vadd.f32 %v1620, %v1741
    %v1747 = vld [vmem:[%s6] sm:$0x3]
    %v1749 = vlaneseq
    %v1750 = vshrl.u32 %v1749, 7
    %v1751 = vsub.s32 0, %v1750
    %v1752 = vrot.slane %v1747, %v1751
    %v1753 = vlaneseq
    %v1754 = vshrl.u32 %v1753, 7
    %v1755 = vsub.s32 1, %v1754
    %v1756 = vrot.slane %v1747, %v1755
    %v1759 = vadd.f32 %v1743, %v1752
    %v1760 = vadd.f32 %v1744, %v1756
    %v1761 = vadd.f32 %v1745, %v1752
    %v1762 = vadd.f32 %v1746, %v1756
    %v1763 = vmax.f32 %v1759, 0.0
    %v1764 = vmax.f32 %v1760, 0.0
    %v1765 = vmax.f32 %v1761, 0.0
    %v1766 = vmax.f32 %v1762, 0.0
    %1767 = vst [vmem:[#allocation4] sm:$0xff] %v1763
    %vm1768 = vcmask 261120
    %1769 = vst.msk [vmem:[#allocation4 + $0x8] sm:$0xff] %vm1768, %v1764
    %1770 = vst [vmem:[#allocation4 + $0x10] sm:$0x3] %v1765
    %vm1771 = vcmask 254976
    %1772 = vst.msk [vmem:[#allocation4 + $0x18] sm:$0x3] %vm1771, %v1766
    %v1773 = vld [vmem:[#allocation4] sm:$0xff]
    %v1774 = vld [vmem:[#allocation4 + $0x8] sm:$0xff]
    %v1775 = vld [vmem:[#allocation4 + $0x10] sm:$0x1]
    %v1776 = vld [vmem:[#allocation4 + $0x18] sm:$0x1]
    %1781 = vrot.lane.b32.xlu0 %v1773, 112
    %v1782 = vpop.permute.xlu0 %1781
    %1783 = vrot.lane.b32.xlu0 %v1774, 112
    %v1784 = vpop.permute.xlu0 %1783
    %1785 = vrot.lane.b32.xlu0 %v1775, 112
    %v1786 = vpop.permute.xlu0 %1785
    %1787 = vrot.lane.b32.xlu0 %v1776, 112
    %v1788 = vpop.permute.xlu0 %1787
    %vm1789 = vcmask 916480
    %v1790 = vsel %vm1789, %v1782, %v1784
    %v1791 = vsel %vm1789, %v1786, %v1788
    %v1796 = vmax.f32 %v1773, %v1790
    %v1797 = vmax.f32 %v1774, %v1784
    %v1798 = vmax.f32 %v1775, %v1791
    %v1799 = vmax.f32 %v1776, %v1788
    %v1800 = vld [vmem:[#allocation4] sm:$0xfe]
    %v1801 = vld [vmem:[#allocation4 + $0x8] sm:$0xfe]
    %v1802 = vld [vmem:[#allocation4 + $0x10] sm:$0x3]
    %v1803 = vld [vmem:[#allocation4 + $0x18] sm:$0x3]
    %1808 = vrot.lane.b32.xlu0 %v1800, 112
    %v1809 = vpop.permute.xlu0 %1808
    %1810 = vrot.lane.b32.xlu0 %v1801, 112
    %v1811 = vpop.permute.xlu0 %1810
    %1812 = vrot.lane.b32.xlu0 %v1802, 112
    %v1813 = vpop.permute.xlu0 %1812
    %1814 = vrot.lane.b32.xlu0 %v1803, 112
    %v1815 = vpop.permute.xlu0 %1814
    %v1816 = vsel %vm1789, %v1809, %v1811
    %v1817 = vsel %vm1789, %v1813, %v1815
    %v1822 = vmax.f32 %v1800, %v1816
    %v1823 = vmax.f32 %v1801, %v1811
    %v1824 = vmax.f32 %v1802, %v1817
    %v1825 = vmax.f32 %v1803, %v1815
    %v1830 = vrot.slane %v1822, 1
    %v1831 = vrot.slane %v1824, 1
    %v1832 = vsel %vm891, %v1830, %v1831
    %v1833 = vrot.slane %v1823, 1
    %v1834 = vrot.slane %v1825, 1
    %v1835 = vsel %vm891, %v1833, %v1834
    %v1840 = vmax.f32 %v1796, %v1832
    %v1841 = vmax.f32 %v1797, %v1835
    %v1842 = vmax.f32 %v1798, %v1831
    %v1843 = vmax.f32 %v1799, %v1834
    %v1844 = vld [vmem:[%s7] sm:$0x1f]
    %vm1845 = vcmask 72704
    %v1847 = vsel %vm1845, %v1844, 0
    %vm1849 = vcmask 1040384
    %v1851 = vsel %vm1849, %v1842, 0
    %v1854 = vsel %vm1849, %v1843, 0
    %1856 = vmatprep.subr.mxu0 0.0
    %1857 = vmatpush1.msra.mxu0 0.0
    %1858 = vmatprep.subr.mxu0 0.0
    %1859 = vmatpush1.msra.mxu0 0.0
    %1860 = vmatprep.subr.mxu0 0.0
    %1861 = vmatpush1.msra.mxu0 0.0
    %1862 = vmatprep.subr.mxu0 0.0
    %1863 = vmatpush1.msra.mxu0 0.0
    %1864 = vmatprep.subr.mxu0 0.0
    %1865 = vmatpush1.msra.mxu0 0.0
    %1866 = vmatprep.subr.mxu0 0.0
    %1867 = vmatpush1.msra.mxu0 0.0
    %1868 = vmatprep.subr.mxu0 0.0
    %1869 = vmatpush1.msra.mxu0 0.0
    %1870 = vmatprep.subr.mxu0 0.0
    %1871 = vmatpush1.msra.mxu0 0.0
    %1872 = vmatprep.subr.mxu0 0.0
    %1873 = vmatpush1.msra.mxu0 0.0
    %1874 = vmatprep.subr.mxu0 0.0
    %1875 = vmatpush1.msra.mxu0 0.0
    %1876 = vmatprep.subr.mxu0 0.0
    %1877 = vmatpush1.msra.mxu0 0.0
    %1878 = vmatprep.subr.mxu0 0.0
    %1879 = vmatpush1.msra.mxu0 0.0
    %1880 = vmatprep.subr.mxu0 0.0
    %1881 = vmatpush1.msra.mxu0 0.0
    %1882 = vmatprep.subr.mxu0 0.0
    %1883 = vmatpush1.msra.mxu0 0.0
    %1884 = vmatprep.subr.mxu0 %v1854
    %1885 = vmatpush1.msra.mxu0 %v1851
    %1886 = vmatprep.subr.mxu0 %v1841
    %1887 = vmatpush1.msra.mxu0 %v1840
    %1888 = vmatprep.subr.mxu0 0.0
    %1889 = vmatpush2.msra.mxu0 0.0
    %1890 = vmatprep.subr.mxu0 0.0
    %1891 = vmatpush2.msra.mxu0 0.0
    %1892 = vmatprep.subr.mxu0 0.0
    %1893 = vmatpush2.msra.mxu0 0.0
    %1894 = vmatprep.subr.mxu0 0.0
    %1895 = vmatpush2.msra.mxu0 0.0
    %1896 = vmatprep.subr.mxu0 0.0
    %1897 = vmatpush2.msra.mxu0 0.0
    %1898 = vmatprep.subr.mxu0 0.0
    %1899 = vmatpush2.msra.mxu0 0.0
    %1900 = vmatprep.subr.mxu0 0.0
    %1901 = vmatpush2.msra.mxu0 0.0
    %1902 = vmatprep.subr.mxu0 0.0
    %1903 = vmatpush2.msra.mxu0 0.0
    %1904 = vmatprep.subr.mxu0 0.0
    %1905 = vmatpush2.msra.mxu0 0.0
    %1906 = vmatprep.subr.mxu0 0.0
    %1907 = vmatpush2.msra.mxu0 0.0
    %1908 = vmatprep.subr.mxu0 0.0
    %1909 = vmatpush2.msra.mxu0 0.0
    %1910 = vmatprep.subr.mxu0 0.0
    %1911 = vmatpush2.msra.mxu0 0.0
    %1912 = vmatprep.subr.mxu0 0.0
    %1913 = vmatpush2.msra.mxu0 0.0
    %1914 = vmatprep.subr.mxu0 0.0
    %1915 = vmatpush2.msra.mxu0 0.0
    %1916 = vmatprep.subr.mxu0 0.0
    %1917 = vmatpush2.msra.mxu0 0.0
    %1918 = vmatprep.subr.mxu0 0.0
    %1919 = vmatpush2.msra.mxu0 0.0
    %1920 = vmatprep.mubr.f32.mxu0 0.0
    %1921 = vmatmul.mubr.f32.gmra.mxu0 %v1847
    %v1922 = vpop.f32.mrf.mxu0
    %v1923 = vadd.f32 0.0, %v1922
    %v1924 = vpop.f32.mrf.mxu0
    %v1925 = vadd.f32 0.0, %v1924
    %1926 = vdwg.mxu0
    %v1927 = vld [vmem:[%s8] sm:$0xff]
    %v1928 = vld [vmem:[%s8 + $0x8] sm:$0xff]
    %v1929 = vld [vmem:[%s8 + $0x10] sm:$0xff]
    %v1930 = vld [vmem:[%s8 + $0x18] sm:$0xff]
    %v1931 = vld [vmem:[%s8 + $0x20] sm:$0xff]
    %v1932 = vld [vmem:[%s8 + $0x28] sm:$0xff]
    %v1933 = vld [vmem:[%s8 + $0x30] sm:$0xff]
    %v1934 = vld [vmem:[%s8 + $0x38] sm:$0xff]
    %v1935 = vld [vmem:[%s8 + $0x40] sm:$0xff]
    %v1936 = vld [vmem:[%s8 + $0x48] sm:$0xff]
    %v1937 = vld [vmem:[%s8 + $0x50] sm:$0xff]
    %v1938 = vld [vmem:[%s8 + $0x58] sm:$0xff]
    %v1939 = vld [vmem:[%s8 + $0x60] sm:$0xff]
    %v1940 = vld [vmem:[%s8 + $0x68] sm:$0xff]
    %v1941 = vld [vmem:[%s8 + $0x70] sm:$0xff]
    %v1942 = vld [vmem:[%s8 + $0x78] sm:$0xff]
    %v1943 = vld [vmem:[%s8 + $0x80] sm:$0xff]
    %v1944 = vld [vmem:[%s8 + $0x88] sm:$0xff]
    %vm1945 = vcmask 130048
    %v1947 = vsel %vm1945, %v1925, 0
    %1949 = vmatprep.subr.mxu0 0.0
    %1950 = vmatpush1.msra.mxu0 %v1942
    %1951 = vmatprep.subr.mxu0 0.0
    %1952 = vmatpush1.msra.mxu0 %v1941
    %1953 = vmatprep.subr.mxu0 0.0
    %1954 = vmatpush1.msra.mxu0 %v1940
    %1955 = vmatprep.subr.mxu0 0.0
    %1956 = vmatpush1.msra.mxu0 %v1939
    %1957 = vmatprep.subr.mxu0 0.0
    %1958 = vmatpush1.msra.mxu0 %v1938
    %1959 = vmatprep.subr.mxu0 0.0
    %1960 = vmatpush1.msra.mxu0 %v1937
    %1961 = vmatprep.subr.mxu0 0.0
    %1962 = vmatpush1.msra.mxu0 %v1936
    %1963 = vmatprep.subr.mxu0 0.0
    %1964 = vmatpush1.msra.mxu0 %v1935
    %1965 = vmatprep.subr.mxu0 0.0
    %1966 = vmatpush1.msra.mxu0 %v1934
    %1967 = vmatprep.subr.mxu0 0.0
    %1968 = vmatpush1.msra.mxu0 %v1933
    %1969 = vmatprep.subr.mxu0 0.0
    %1970 = vmatpush1.msra.mxu0 %v1932
    %1971 = vmatprep.subr.mxu0 0.0
    %1972 = vmatpush1.msra.mxu0 %v1931
    %1973 = vmatprep.subr.mxu0 0.0
    %1974 = vmatpush1.msra.mxu0 %v1930
    %1975 = vmatprep.subr.mxu0 0.0
    %1976 = vmatpush1.msra.mxu0 %v1929
    %1977 = vmatprep.subr.mxu0 0.0
    %1978 = vmatpush1.msra.mxu0 %v1928
    %1979 = vmatprep.subr.mxu0 0.0
    %1980 = vmatpush1.msra.mxu0 %v1927
    %1981 = vmatprep.subr.mxu0 0.0
    %1982 = vmatpush2.msra.mxu0 0.0
    %1983 = vmatprep.subr.mxu0 0.0
    %1984 = vmatpush2.msra.mxu0 0.0
    %1985 = vmatprep.subr.mxu0 0.0
    %1986 = vmatpush2.msra.mxu0 0.0
    %1987 = vmatprep.subr.mxu0 0.0
    %1988 = vmatpush2.msra.mxu0 0.0
    %1989 = vmatprep.subr.mxu0 0.0
    %1990 = vmatpush2.msra.mxu0 0.0
    %1991 = vmatprep.subr.mxu0 0.0
    %1992 = vmatpush2.msra.mxu0 0.0
    %1993 = vmatprep.subr.mxu0 0.0
    %1994 = vmatpush2.msra.mxu0 0.0
    %1995 = vmatprep.subr.mxu0 0.0
    %1996 = vmatpush2.msra.mxu0 0.0
    %1997 = vmatprep.subr.mxu0 0.0
    %1998 = vmatpush2.msra.mxu0 0.0
    %1999 = vmatprep.subr.mxu0 0.0
    %2000 = vmatpush2.msra.mxu0 0.0
    %2001 = vmatprep.subr.mxu0 0.0
    %2002 = vmatpush2.msra.mxu0 0.0
    %2003 = vmatprep.subr.mxu0 0.0
    %2004 = vmatpush2.msra.mxu0 0.0
    %2005 = vmatprep.subr.mxu0 0.0
    %2006 = vmatpush2.msra.mxu0 0.0
    %2007 = vmatprep.subr.mxu0 0.0
    %2008 = vmatpush2.msra.mxu0 0.0
    %2009 = vmatprep.subr.mxu0 0.0
    %2010 = vmatpush2.msra.mxu0 %v1944
    %2011 = vmatprep.subr.mxu0 0.0
    %2012 = vmatpush2.msra.mxu0 %v1943
    %2013 = vmatprep.mubr.f32.mxu0 %v1947
    %2014 = vmatmul.mubr.f32.gmra.mxu0 %v1923
    %v2015 = vpop.f32.mrf.mxu0
    %v2016 = vadd.f32 0.0, %v2015
    %v2017 = vpop.f32.mrf.mxu0
    %2018 = vdwg.mxu0
    %vm2019 = vcmask 651264
    %2020 = vst.msk [vmem:[#allocation5] sm:$0x1f] %vm2019, %v2016
    %v2021 = vld [vmem:[#allocation5] sm:$0x1]
    %vm2022 = vcmask 647168
    %2023 = vst.msk [vmem:[#allocation6] sm:$0x1] %vm2022, %v2021
    %v2024 = vld [vmem:[#allocation5 + $0x1] sm:$0x1]
    %v2027 = vunpack.c.l.s4 1983009808
    %v2028 = vunpack.c.0.s8 %v2027
    %v2029 = vlaneseq
    %v2030 = vshrl.u32 %v2029, 7
    %v2031 = vsub.s32 %v2028, %v2030
    %v2032 = vrot.slane %v2024, %v2031
    %2033 = vrot.lane.b32.xlu0 %v2032, 80
    %v2034 = vpop.permute.xlu0 %2033
    %v2035 = vrot.slane %v2034, 6
    %vm2036 = vcmask 654336
    %v2037 = vsel %vm2036, %v2035, %v2034
    %vm2039 = vcmask 1041024
    %vm2040 = vcmask 256002
    %vm2041 = vmor %vm2040, %vm2039
    %2042 = vst.msk [vmem:[#allocation6] sm:$0x5] %vm2041, %v2037
    %v2043 = vld [vmem:[#allocation5 + $0x2] sm:$0x1]
    %v2046 = vunpack.c.l.s4 1983009808
    %v2047 = vunpack.c.0.s8 %v2046
    %v2048 = vlaneseq
    %v2049 = vshrl.u32 %v2048, 7
    %v2050 = vsub.s32 %v2047, %v2049
    %v2051 = vrot.slane %v2043, %v2050
    %2052 = vrot.lane.b32.xlu0 %v2051, 32
    %v2053 = vpop.permute.xlu0 %2052
    %vm2055 = vcmask 909568
    %2056 = vst.msk [vmem:[#allocation6 + $0x2] sm:$0x1] %vm2055, %v2053
    %v2057 = vld [vmem:[#allocation5 + $0x3] sm:$0x1]
    %v2060 = vunpack.c.l.s4 1983009808
    %v2061 = vunpack.c.0.s8 %v2060
    %v2062 = vlaneseq
    %v2063 = vshrl.u32 %v2062, 7
    %v2064 = vsub.s32 %v2061, %v2063
    %v2065 = vrot.slane %v2057, %v2064
    %2066 = vrot.lane.b32.xlu0 %v2065, 112
    %v2067 = vpop.permute.xlu0 %2066
    %v2068 = vrot.slane %v2067, 6
    %v2069 = vsel %vm1789, %v2068, %v2067
    %vm2071 = vcmask 1041280
    %vm2072 = vcmask 518146
    %vm2073 = vmor %vm2072, %vm2071
    %2074 = vst.msk [vmem:[#allocation6 + $0x2] sm:$0x5] %vm2073, %v2069
    %v2075 = vld [vmem:[#allocation5 + $0x4] sm:$0x1]
    %v2078 = vunpack.c.l.s4 1983009808
    %v2079 = vunpack.c.0.s8 %v2078
    %v2080 = vlaneseq
    %v2081 = vshrl.u32 %v2080, 7
    %v2082 = vsub.s32 %v2079, %v2081
    %v2083 = vrot.slane %v2075, %v2082
    %2084 = vrot.lane.b32.xlu0 %v2083, 64
    %v2085 = vpop.permute.xlu0 %2084
    %v2086 = vrot.slane %v2085, 6
    %vm2087 = vcmask 523264
    %v2088 = vsel %vm2087, %v2086, %v2085
    %vm2090 = vcmask 1040896
    %vm2091 = vcmask 124930
    %vm2092 = vmor %vm2091, %vm2090
    %2093 = vst.msk [vmem:[#allocation6 + $0x4] sm:$0x5] %vm2092, %v2088
    %s2094 = scalar_lea.vmem %s0, 32
    %v2095 = vld [vmem:[%s2094] sm:$0xff]
    %v2096 = vld [vmem:[%s2094 + $0x8] sm:$0xff]
    %v2097 = vld [vmem:[%s2094 + $0x10] sm:$0xff]
    %v2098 = vld [vmem:[%s2094 + $0x18] sm:$0xf]
    %v2099 = vpack.c.bf16 %v2096, %v2095
    %v2100 = vpack.c.bf16 %v2098, %v2097
    %v2101 = vld [vmem:[%s1] sm:$0xff]
    %v2102 = vld [vmem:[%s1 + $0x8] sm:$0xff]
    %v2103 = vld [vmem:[%s1 + $0x10] sm:$0xff]
    %v2104 = vld [vmem:[%s1 + $0x18] sm:$0xff]
    %v2105 = vld [vmem:[%s1 + $0x20] sm:$0xff]
    %v2106 = vld [vmem:[%s1 + $0x28] sm:$0xff]
    %v2107 = vld [vmem:[%s1 + $0x30] sm:$0xff]
    %v2108 = vld [vmem:[%s1 + $0x38] sm:$0xff]
    %v2109 = vld [vmem:[%s1 + $0x40] sm:$0xff]
    %v2110 = vld [vmem:[%s1 + $0x48] sm:$0xff]
    %v2111 = vld [vmem:[%s1 + $0x50] sm:$0xff]
    %v2112 = vld [vmem:[%s1 + $0x58] sm:$0xff]
    %v2113 = vld [vmem:[%s2094 + $0x1] sm:$0xff]
    %v2114 = vld [vmem:[%s2094 + $0x9] sm:$0xff]
    %v2115 = vld [vmem:[%s2094 + $0x11] sm:$0xff]
    %v2116 = vld [vmem:[%s2094 + $0x19] sm:$0xf]
    %v2117 = vpack.c.bf16 %v2114, %v2113
    %v2118 = vpack.c.bf16 %v2116, %v2115
    %v2119 = vld [vmem:[%s76] sm:$0xff]
    %v2120 = vld [vmem:[%s76 + $0x8] sm:$0xff]
    %v2121 = vld [vmem:[%s76 + $0x10] sm:$0xff]
    %v2122 = vld [vmem:[%s76 + $0x18] sm:$0xff]
    %v2123 = vld [vmem:[%s76 + $0x20] sm:$0xff]
    %v2124 = vld [vmem:[%s76 + $0x28] sm:$0xff]
    %v2125 = vld [vmem:[%s76 + $0x30] sm:$0xff]
    %v2126 = vld [vmem:[%s76 + $0x38] sm:$0xff]
    %v2127 = vld [vmem:[%s76 + $0x40] sm:$0xff]
    %v2128 = vld [vmem:[%s76 + $0x48] sm:$0xff]
    %v2129 = vld [vmem:[%s76 + $0x50] sm:$0xff]
    %v2130 = vld [vmem:[%s76 + $0x58] sm:$0xff]
    %v2143 = vunpack.c.l.b16 %v2119
    %v2144 = vunpack.c.h.b16 %v2119
    %v2145 = vunpack.c.l.b16 %v2120
    %v2146 = vunpack.c.h.b16 %v2120
    %v2147 = vunpack.c.l.b16 %v2121
    %v2148 = vunpack.c.h.b16 %v2121
    %v2149 = vunpack.c.l.b16 %v2122
    %v2150 = vunpack.c.h.b16 %v2122
    %v2151 = vunpack.c.l.b16 %v2123
    %v2152 = vunpack.c.h.b16 %v2123
    %v2153 = vunpack.c.l.b16 %v2124
    %v2154 = vunpack.c.h.b16 %v2124
    %v2155 = vunpack.c.l.b16 %v2125
    %v2156 = vunpack.c.h.b16 %v2125
    %v2157 = vunpack.c.l.b16 %v2126
    %v2158 = vunpack.c.h.b16 %v2126
    %v2159 = vunpack.c.l.b16 %v2127
    %v2160 = vunpack.c.h.b16 %v2127
    %v2161 = vunpack.c.l.b16 %v2128
    %v2162 = vunpack.c.h.b16 %v2128
    %v2163 = vunpack.c.l.b16 %v2129
    %v2164 = vunpack.c.h.b16 %v2129
    %v2165 = vunpack.c.l.b16 %v2130
    %v2166 = vunpack.c.h.b16 %v2130
    %v2167 = vpack.c.b16 %v2145, %v2143
    %v2168 = vpack.c.b16 %v2146, %v2144
    %v2169 = vpack.c.b16 %v2149, %v2147
    %v2170 = vpack.c.b16 %v2150, %v2148
    %v2171 = vpack.c.b16 %v2153, %v2151
    %v2172 = vpack.c.b16 %v2154, %v2152
    %v2173 = vpack.c.b16 %v2157, %v2155
    %v2174 = vpack.c.b16 %v2158, %v2156
    %v2175 = vpack.c.b16 %v2161, %v2159
    %v2176 = vpack.c.b16 %v2162, %v2160
    %v2177 = vpack.c.b16 %v2165, %v2163
    %v2178 = vpack.c.b16 %v2166, %v2164
    %v2192 = vsel %vm149, %v2117, 0
    %v2195 = vsel %vm149, %v2118, 0
    %2197 = vmatprep.subr.bf16.mxu0 0
    %2198 = vmatpush1.bf16.msra.mxu0 0
    %2199 = vmatprep.subr.bf16.mxu0 0
    %2200 = vmatpush1.bf16.msra.mxu0 0
    %2201 = vmatprep.subr.bf16.mxu0 %v2178
    %2202 = vmatpush1.bf16.msra.mxu0 %v2177
    %2203 = vmatprep.subr.bf16.mxu0 %v2176
    %2204 = vmatpush1.bf16.msra.mxu0 %v2175
    %2205 = vmatprep.subr.bf16.mxu0 %v2174
    %2206 = vmatpush1.bf16.msra.mxu0 %v2173
    %2207 = vmatprep.subr.bf16.mxu0 %v2172
    %2208 = vmatpush1.bf16.msra.mxu0 %v2171
    %2209 = vmatprep.subr.bf16.mxu0 %v2170
    %2210 = vmatpush1.bf16.msra.mxu0 %v2169
    %2211 = vmatprep.subr.bf16.mxu0 %v2168
    %2212 = vmatpush1.bf16.msra.mxu0 %v2167
    %2213 = vmatprep.subr.bf16.mxu0 0
    %2214 = vmatpush2.bf16.msra.mxu0 0
    %2215 = vmatprep.subr.bf16.mxu0 0
    %2216 = vmatpush2.bf16.msra.mxu0 0
    %2217 = vmatprep.subr.bf16.mxu0 0
    %2218 = vmatpush2.bf16.msra.mxu0 0
    %2219 = vmatprep.subr.bf16.mxu0 0
    %2220 = vmatpush2.bf16.msra.mxu0 0
    %2221 = vmatprep.subr.bf16.mxu0 0
    %2222 = vmatpush2.bf16.msra.mxu0 0
    %2223 = vmatprep.subr.bf16.mxu0 0
    %2224 = vmatpush2.bf16.msra.mxu0 0
    %2225 = vmatprep.subr.bf16.mxu0 0
    %2226 = vmatpush2.bf16.msra.mxu0 0
    %2227 = vmatprep.subr.bf16.mxu0 0
    %2228 = vmatpush2.bf16.msra.mxu0 0
    %2229 = vmatprep.mubr.bf16.mxu0 0
    %2230 = vmatmul.mubr.bf16.gmra.mxu0 %v2192
    %v2231 = vpop.f32.mrf.mxu0
    %v2232 = vadd.f32 0.0, %v2231
    %v2233 = vpop.f32.mrf.mxu0
    %v2234 = vadd.f32 0.0, %v2233
    %v2235 = vpop.f32.mrf.mxu0
    %v2236 = vadd.f32 0.0, %v2235
    %v2237 = vpop.f32.mrf.mxu0
    %v2238 = vadd.f32 0.0, %v2237
    %2239 = vmatprep.mubr.bf16.mxu0 0
    %2240 = vmatmul.mubr.bf16.gmra.mxu0 %v2195
    %v2241 = vpop.f32.mrf.mxu0
    %v2242 = vadd.f32 0.0, %v2241
    %v2243 = vpop.f32.mrf.mxu0
    %v2244 = vadd.f32 0.0, %v2243
    %v2245 = vpop.f32.mrf.mxu0
    %v2246 = vadd.f32 0.0, %v2245
    %v2247 = vpop.f32.mrf.mxu0
    %v2248 = vadd.f32 0.0, %v2247
    %2249 = vdwg.mxu0
    %v2262 = vunpack.c.l.b16 %v2101
    %v2263 = vunpack.c.h.b16 %v2101
    %v2264 = vunpack.c.l.b16 %v2102
    %v2265 = vunpack.c.h.b16 %v2102
    %v2266 = vunpack.c.l.b16 %v2103
    %v2267 = vunpack.c.h.b16 %v2103
    %v2268 = vunpack.c.l.b16 %v2104
    %v2269 = vunpack.c.h.b16 %v2104
    %v2270 = vunpack.c.l.b16 %v2105
    %v2271 = vunpack.c.h.b16 %v2105
    %v2272 = vunpack.c.l.b16 %v2106
    %v2273 = vunpack.c.h.b16 %v2106
    %v2274 = vunpack.c.l.b16 %v2107
    %v2275 = vunpack.c.h.b16 %v2107
    %v2276 = vunpack.c.l.b16 %v2108
    %v2277 = vunpack.c.h.b16 %v2108
    %v2278 = vunpack.c.l.b16 %v2109
    %v2279 = vunpack.c.h.b16 %v2109
    %v2280 = vunpack.c.l.b16 %v2110
    %v2281 = vunpack.c.h.b16 %v2110
    %v2282 = vunpack.c.l.b16 %v2111
    %v2283 = vunpack.c.h.b16 %v2111
    %v2284 = vunpack.c.l.b16 %v2112
    %v2285 = vunpack.c.h.b16 %v2112
    %v2286 = vpack.c.b16 %v2264, %v2262
    %v2287 = vpack.c.b16 %v2265, %v2263
    %v2288 = vpack.c.b16 %v2268, %v2266
    %v2289 = vpack.c.b16 %v2269, %v2267
    %v2290 = vpack.c.b16 %v2272, %v2270
    %v2291 = vpack.c.b16 %v2273, %v2271
    %v2292 = vpack.c.b16 %v2276, %v2274
    %v2293 = vpack.c.b16 %v2277, %v2275
    %v2294 = vpack.c.b16 %v2280, %v2278
    %v2295 = vpack.c.b16 %v2281, %v2279
    %v2296 = vpack.c.b16 %v2284, %v2282
    %v2297 = vpack.c.b16 %v2285, %v2283
    %v2311 = vsel %vm149, %v2099, 0
    %v2314 = vsel %vm149, %v2100, 0
    %2316 = vmatprep.subr.bf16.mxu0 0
    %2317 = vmatpush1.bf16.msra.mxu0 0
    %2318 = vmatprep.subr.bf16.mxu0 0
    %2319 = vmatpush1.bf16.msra.mxu0 0
    %2320 = vmatprep.subr.bf16.mxu0 %v2297
    %2321 = vmatpush1.bf16.msra.mxu0 %v2296
    %2322 = vmatprep.subr.bf16.mxu0 %v2295
    %2323 = vmatpush1.bf16.msra.mxu0 %v2294
    %2324 = vmatprep.subr.bf16.mxu0 %v2293
    %2325 = vmatpush1.bf16.msra.mxu0 %v2292
    %2326 = vmatprep.subr.bf16.mxu0 %v2291
    %2327 = vmatpush1.bf16.msra.mxu0 %v2290
    %2328 = vmatprep.subr.bf16.mxu0 %v2289
    %2329 = vmatpush1.bf16.msra.mxu0 %v2288
    %2330 = vmatprep.subr.bf16.mxu0 %v2287
    %2331 = vmatpush1.bf16.msra.mxu0 %v2286
    %2332 = vmatprep.subr.bf16.mxu0 0
    %2333 = vmatpush2.bf16.msra.mxu0 0
    %2334 = vmatprep.subr.bf16.mxu0 0
    %2335 = vmatpush2.bf16.msra.mxu0 0
    %2336 = vmatprep.subr.bf16.mxu0 0
    %2337 = vmatpush2.bf16.msra.mxu0 0
    %2338 = vmatprep.subr.bf16.mxu0 0
    %2339 = vmatpush2.bf16.msra.mxu0 0
    %2340 = vmatprep.subr.bf16.mxu0 0
    %2341 = vmatpush2.bf16.msra.mxu0 0
    %2342 = vmatprep.subr.bf16.mxu0 0
    %2343 = vmatpush2.bf16.msra.mxu0 0
    %2344 = vmatprep.subr.bf16.mxu0 0
    %2345 = vmatpush2.bf16.msra.mxu0 0
    %2346 = vmatprep.subr.bf16.mxu0 0
    %2347 = vmatpush2.bf16.msra.mxu0 0
    %2348 = vmatprep.mubr.bf16.mxu0 0
    %2349 = vmatmul.mubr.bf16.gmra.mxu0 %v2311
    %v2350 = vpop.f32.mrf.mxu0
    %v2351 = vadd.f32 %v2232, %v2350
    %v2352 = vpop.f32.mrf.mxu0
    %v2353 = vadd.f32 %v2234, %v2352
    %v2354 = vpop.f32.mrf.mxu0
    %v2355 = vadd.f32 %v2236, %v2354
    %v2356 = vpop.f32.mrf.mxu0
    %v2357 = vadd.f32 %v2238, %v2356
    %2358 = vmatprep.mubr.bf16.mxu0 0
    %2359 = vmatmul.mubr.bf16.gmra.mxu0 %v2314
    %v2360 = vpop.f32.mrf.mxu0
    %v2361 = vadd.f32 %v2242, %v2360
    %v2362 = vpop.f32.mrf.mxu0
    %v2363 = vadd.f32 %v2244, %v2362
    %v2364 = vpop.f32.mrf.mxu0
    %v2365 = vadd.f32 %v2246, %v2364
    %v2366 = vpop.f32.mrf.mxu0
    %v2367 = vadd.f32 %v2248, %v2366
    %2368 = vdwg.mxu0
    %v2369 = vld [vmem:[%s2094 + $0x2] sm:$0xff]
    %v2370 = vld [vmem:[%s2094 + $0xa] sm:$0xff]
    %v2371 = vld [vmem:[%s2094 + $0x12] sm:$0xff]
    %v2372 = vld [vmem:[%s2094 + $0x1a] sm:$0xf]
    %v2373 = vpack.c.bf16 %v2370, %v2369
    %v2374 = vpack.c.bf16 %v2372, %v2371
    %v2375 = vld [vmem:[%s334] sm:$0xff]
    %v2376 = vld [vmem:[%s334 + $0x8] sm:$0xff]
    %v2377 = vld [vmem:[%s334 + $0x10] sm:$0xff]
    %v2378 = vld [vmem:[%s334 + $0x18] sm:$0xff]
    %v2379 = vld [vmem:[%s334 + $0x20] sm:$0xff]
    %v2380 = vld [vmem:[%s334 + $0x28] sm:$0xff]
    %v2381 = vld [vmem:[%s334 + $0x30] sm:$0xff]
    %v2382 = vld [vmem:[%s334 + $0x38] sm:$0xff]
    %v2383 = vld [vmem:[%s334 + $0x40] sm:$0xff]
    %v2384 = vld [vmem:[%s334 + $0x48] sm:$0xff]
    %v2385 = vld [vmem:[%s334 + $0x50] sm:$0xff]
    %v2386 = vld [vmem:[%s334 + $0x58] sm:$0xff]
    %v2399 = vunpack.c.l.b16 %v2375
    %v2400 = vunpack.c.h.b16 %v2375
    %v2401 = vunpack.c.l.b16 %v2376
    %v2402 = vunpack.c.h.b16 %v2376
    %v2403 = vunpack.c.l.b16 %v2377
    %v2404 = vunpack.c.h.b16 %v2377
    %v2405 = vunpack.c.l.b16 %v2378
    %v2406 = vunpack.c.h.b16 %v2378
    %v2407 = vunpack.c.l.b16 %v2379
    %v2408 = vunpack.c.h.b16 %v2379
    %v2409 = vunpack.c.l.b16 %v2380
    %v2410 = vunpack.c.h.b16 %v2380
    %v2411 = vunpack.c.l.b16 %v2381
    %v2412 = vunpack.c.h.b16 %v2381
    %v2413 = vunpack.c.l.b16 %v2382
    %v2414 = vunpack.c.h.b16 %v2382
    %v2415 = vunpack.c.l.b16 %v2383
    %v2416 = vunpack.c.h.b16 %v2383
    %v2417 = vunpack.c.l.b16 %v2384
    %v2418 = vunpack.c.h.b16 %v2384
    %v2419 = vunpack.c.l.b16 %v2385
    %v2420 = vunpack.c.h.b16 %v2385
    %v2421 = vunpack.c.l.b16 %v2386
    %v2422 = vunpack.c.h.b16 %v2386
    %v2423 = vpack.c.b16 %v2401, %v2399
    %v2424 = vpack.c.b16 %v2402, %v2400
    %v2425 = vpack.c.b16 %v2405, %v2403
    %v2426 = vpack.c.b16 %v2406, %v2404
    %v2427 = vpack.c.b16 %v2409, %v2407
    %v2428 = vpack.c.b16 %v2410, %v2408
    %v2429 = vpack.c.b16 %v2413, %v2411
    %v2430 = vpack.c.b16 %v2414, %v2412
    %v2431 = vpack.c.b16 %v2417, %v2415
    %v2432 = vpack.c.b16 %v2418, %v2416
    %v2433 = vpack.c.b16 %v2421, %v2419
    %v2434 = vpack.c.b16 %v2422, %v2420
    %v2448 = vsel %vm149, %v2373, 0
    %v2451 = vsel %vm149, %v2374, 0
    %2453 = vmatprep.subr.bf16.mxu0 0
    %2454 = vmatpush1.bf16.msra.mxu0 0
    %2455 = vmatprep.subr.bf16.mxu0 0
    %2456 = vmatpush1.bf16.msra.mxu0 0
    %2457 = vmatprep.subr.bf16.mxu0 %v2434
    %2458 = vmatpush1.bf16.msra.mxu0 %v2433
    %2459 = vmatprep.subr.bf16.mxu0 %v2432
    %2460 = vmatpush1.bf16.msra.mxu0 %v2431
    %2461 = vmatprep.subr.bf16.mxu0 %v2430
    %2462 = vmatpush1.bf16.msra.mxu0 %v2429
    %2463 = vmatprep.subr.bf16.mxu0 %v2428
    %2464 = vmatpush1.bf16.msra.mxu0 %v2427
    %2465 = vmatprep.subr.bf16.mxu0 %v2426
    %2466 = vmatpush1.bf16.msra.mxu0 %v2425
    %2467 = vmatprep.subr.bf16.mxu0 %v2424
    %2468 = vmatpush1.bf16.msra.mxu0 %v2423
    %2469 = vmatprep.subr.bf16.mxu0 0
    %2470 = vmatpush2.bf16.msra.mxu0 0
    %2471 = vmatprep.subr.bf16.mxu0 0
    %2472 = vmatpush2.bf16.msra.mxu0 0
    %2473 = vmatprep.subr.bf16.mxu0 0
    %2474 = vmatpush2.bf16.msra.mxu0 0
    %2475 = vmatprep.subr.bf16.mxu0 0
    %2476 = vmatpush2.bf16.msra.mxu0 0
    %2477 = vmatprep.subr.bf16.mxu0 0
    %2478 = vmatpush2.bf16.msra.mxu0 0
    %2479 = vmatprep.subr.bf16.mxu0 0
    %2480 = vmatpush2.bf16.msra.mxu0 0
    %2481 = vmatprep.subr.bf16.mxu0 0
    %2482 = vmatpush2.bf16.msra.mxu0 0
    %2483 = vmatprep.subr.bf16.mxu0 0
    %2484 = vmatpush2.bf16.msra.mxu0 0
    %2485 = vmatprep.mubr.bf16.mxu0 0
    %2486 = vmatmul.mubr.bf16.gmra.mxu0 %v2448
    %v2487 = vpop.f32.mrf.mxu0
    %v2488 = vadd.f32 0.0, %v2487
    %v2489 = vpop.f32.mrf.mxu0
    %v2490 = vadd.f32 0.0, %v2489
    %v2491 = vpop.f32.mrf.mxu0
    %v2492 = vadd.f32 0.0, %v2491
    %v2493 = vpop.f32.mrf.mxu0
    %v2494 = vadd.f32 0.0, %v2493
    %2495 = vmatprep.mubr.bf16.mxu0 0
    %2496 = vmatmul.mubr.bf16.gmra.mxu0 %v2451
    %v2497 = vpop.f32.mrf.mxu0
    %v2498 = vadd.f32 0.0, %v2497
    %v2499 = vpop.f32.mrf.mxu0
    %v2500 = vadd.f32 0.0, %v2499
    %v2501 = vpop.f32.mrf.mxu0
    %v2502 = vadd.f32 0.0, %v2501
    %v2503 = vpop.f32.mrf.mxu0
    %v2504 = vadd.f32 0.0, %v2503
    %2505 = vdwg.mxu0
    %v2506 = vadd.f32 %v2351, %v2488
    %v2507 = vadd.f32 %v2353, %v2490
    %v2508 = vadd.f32 %v2355, %v2492
    %v2509 = vadd.f32 %v2357, %v2494
    %v2510 = vadd.f32 %v2361, %v2498
    %v2511 = vadd.f32 %v2363, %v2500
    %v2512 = vadd.f32 %v2365, %v2502
    %v2513 = vadd.f32 %v2367, %v2504
    %v2514 = vld [vmem:[%s2094 + $0x3] sm:$0xff]
    %v2515 = vld [vmem:[%s2094 + $0xb] sm:$0xff]
    %v2516 = vld [vmem:[%s2094 + $0x13] sm:$0xff]
    %v2517 = vld [vmem:[%s2094 + $0x1b] sm:$0xf]
    %v2518 = vpack.c.bf16 %v2515, %v2514
    %v2519 = vpack.c.bf16 %v2517, %v2516
    %v2520 = vld [vmem:[%s480] sm:$0xff]
    %v2521 = vld [vmem:[%s480 + $0x8] sm:$0xff]
    %v2522 = vld [vmem:[%s480 + $0x10] sm:$0xff]
    %v2523 = vld [vmem:[%s480 + $0x18] sm:$0xff]
    %v2524 = vld [vmem:[%s480 + $0x20] sm:$0xff]
    %v2525 = vld [vmem:[%s480 + $0x28] sm:$0xff]
    %v2526 = vld [vmem:[%s480 + $0x30] sm:$0xff]
    %v2527 = vld [vmem:[%s480 + $0x38] sm:$0xff]
    %v2528 = vld [vmem:[%s480 + $0x40] sm:$0xff]
    %v2529 = vld [vmem:[%s480 + $0x48] sm:$0xff]
    %v2530 = vld [vmem:[%s480 + $0x50] sm:$0xff]
    %v2531 = vld [vmem:[%s480 + $0x58] sm:$0xff]
    %v2544 = vunpack.c.l.b16 %v2520
    %v2545 = vunpack.c.h.b16 %v2520
    %v2546 = vunpack.c.l.b16 %v2521
    %v2547 = vunpack.c.h.b16 %v2521
    %v2548 = vunpack.c.l.b16 %v2522
    %v2549 = vunpack.c.h.b16 %v2522
    %v2550 = vunpack.c.l.b16 %v2523
    %v2551 = vunpack.c.h.b16 %v2523
    %v2552 = vunpack.c.l.b16 %v2524
    %v2553 = vunpack.c.h.b16 %v2524
    %v2554 = vunpack.c.l.b16 %v2525
    %v2555 = vunpack.c.h.b16 %v2525
    %v2556 = vunpack.c.l.b16 %v2526
    %v2557 = vunpack.c.h.b16 %v2526
    %v2558 = vunpack.c.l.b16 %v2527
    %v2559 = vunpack.c.h.b16 %v2527
    %v2560 = vunpack.c.l.b16 %v2528
    %v2561 = vunpack.c.h.b16 %v2528
    %v2562 = vunpack.c.l.b16 %v2529
    %v2563 = vunpack.c.h.b16 %v2529
    %v2564 = vunpack.c.l.b16 %v2530
    %v2565 = vunpack.c.h.b16 %v2530
    %v2566 = vunpack.c.l.b16 %v2531
    %v2567 = vunpack.c.h.b16 %v2531
    %v2568 = vpack.c.b16 %v2546, %v2544
    %v2569 = vpack.c.b16 %v2547, %v2545
    %v2570 = vpack.c.b16 %v2550, %v2548
    %v2571 = vpack.c.b16 %v2551, %v2549
    %v2572 = vpack.c.b16 %v2554, %v2552
    %v2573 = vpack.c.b16 %v2555, %v2553
    %v2574 = vpack.c.b16 %v2558, %v2556
    %v2575 = vpack.c.b16 %v2559, %v2557
    %v2576 = vpack.c.b16 %v2562, %v2560
    %v2577 = vpack.c.b16 %v2563, %v2561
    %v2578 = vpack.c.b16 %v2566, %v2564
    %v2579 = vpack.c.b16 %v2567, %v2565
    %v2593 = vsel %vm149, %v2518, 0
    %v2596 = vsel %vm149, %v2519, 0
    %2598 = vmatprep.subr.bf16.mxu0 0
    %2599 = vmatpush1.bf16.msra.mxu0 0
    %2600 = vmatprep.subr.bf16.mxu0 0
    %2601 = vmatpush1.bf16.msra.mxu0 0
    %2602 = vmatprep.subr.bf16.mxu0 %v2579
    %2603 = vmatpush1.bf16.msra.mxu0 %v2578
    %2604 = vmatprep.subr.bf16.mxu0 %v2577
    %2605 = vmatpush1.bf16.msra.mxu0 %v2576
    %2606 = vmatprep.subr.bf16.mxu0 %v2575
    %2607 = vmatpush1.bf16.msra.mxu0 %v2574
    %2608 = vmatprep.subr.bf16.mxu0 %v2573
    %2609 = vmatpush1.bf16.msra.mxu0 %v2572
    %2610 = vmatprep.subr.bf16.mxu0 %v2571
    %2611 = vmatpush1.bf16.msra.mxu0 %v2570
    %2612 = vmatprep.subr.bf16.mxu0 %v2569
    %2613 = vmatpush1.bf16.msra.mxu0 %v2568
    %2614 = vmatprep.subr.bf16.mxu0 0
    %2615 = vmatpush2.bf16.msra.mxu0 0
    %2616 = vmatprep.subr.bf16.mxu0 0
    %2617 = vmatpush2.bf16.msra.mxu0 0
    %2618 = vmatprep.subr.bf16.mxu0 0
    %2619 = vmatpush2.bf16.msra.mxu0 0
    %2620 = vmatprep.subr.bf16.mxu0 0
    %2621 = vmatpush2.bf16.msra.mxu0 0
    %2622 = vmatprep.subr.bf16.mxu0 0
    %2623 = vmatpush2.bf16.msra.mxu0 0
    %2624 = vmatprep.subr.bf16.mxu0 0
    %2625 = vmatpush2.bf16.msra.mxu0 0
    %2626 = vmatprep.subr.bf16.mxu0 0
    %2627 = vmatpush2.bf16.msra.mxu0 0
    %2628 = vmatprep.subr.bf16.mxu0 0
    %2629 = vmatpush2.bf16.msra.mxu0 0
    %2630 = vmatprep.mubr.bf16.mxu0 0
    %2631 = vmatmul.mubr.bf16.gmra.mxu0 %v2593
    %v2632 = vpop.f32.mrf.mxu0
    %v2633 = vadd.f32 0.0, %v2632
    %v2634 = vpop.f32.mrf.mxu0
    %v2635 = vadd.f32 0.0, %v2634
    %v2636 = vpop.f32.mrf.mxu0
    %v2637 = vadd.f32 0.0, %v2636
    %v2638 = vpop.f32.mrf.mxu0
    %v2639 = vadd.f32 0.0, %v2638
    %2640 = vmatprep.mubr.bf16.mxu0 0
    %2641 = vmatmul.mubr.bf16.gmra.mxu0 %v2596
    %v2642 = vpop.f32.mrf.mxu0
    %v2643 = vadd.f32 0.0, %v2642
    %v2644 = vpop.f32.mrf.mxu0
    %v2645 = vadd.f32 0.0, %v2644
    %v2646 = vpop.f32.mrf.mxu0
    %v2647 = vadd.f32 0.0, %v2646
    %v2648 = vpop.f32.mrf.mxu0
    %v2649 = vadd.f32 0.0, %v2648
    %2650 = vdwg.mxu0
    %v2651 = vadd.f32 %v2506, %v2633
    %v2652 = vadd.f32 %v2507, %v2635
    %v2653 = vadd.f32 %v2508, %v2637
    %v2654 = vadd.f32 %v2509, %v2639
    %v2655 = vadd.f32 %v2510, %v2643
    %v2656 = vadd.f32 %v2511, %v2645
    %v2657 = vadd.f32 %v2512, %v2647
    %v2658 = vadd.f32 %v2513, %v2649
    %v2659 = vld [vmem:[%s2094 + $0x4] sm:$0xff]
    %v2660 = vld [vmem:[%s2094 + $0xc] sm:$0xff]
    %v2661 = vld [vmem:[%s2094 + $0x14] sm:$0xff]
    %v2662 = vld [vmem:[%s2094 + $0x1c] sm:$0xf]
    %v2663 = vpack.c.bf16 %v2660, %v2659
    %v2664 = vpack.c.bf16 %v2662, %v2661
    %v2665 = vld [vmem:[%s626] sm:$0xff]
    %v2666 = vld [vmem:[%s626 + $0x8] sm:$0xff]
    %v2667 = vld [vmem:[%s626 + $0x10] sm:$0xff]
    %v2668 = vld [vmem:[%s626 + $0x18] sm:$0xff]
    %v2669 = vld [vmem:[%s626 + $0x20] sm:$0xff]
    %v2670 = vld [vmem:[%s626 + $0x28] sm:$0xff]
    %v2671 = vld [vmem:[%s626 + $0x30] sm:$0xff]
    %v2672 = vld [vmem:[%s626 + $0x38] sm:$0xff]
    %v2673 = vld [vmem:[%s626 + $0x40] sm:$0xff]
    %v2674 = vld [vmem:[%s626 + $0x48] sm:$0xff]
    %v2675 = vld [vmem:[%s626 + $0x50] sm:$0xff]
    %v2676 = vld [vmem:[%s626 + $0x58] sm:$0xff]
    %v2689 = vunpack.c.l.b16 %v2665
    %v2690 = vunpack.c.h.b16 %v2665
    %v2691 = vunpack.c.l.b16 %v2666
    %v2692 = vunpack.c.h.b16 %v2666
    %v2693 = vunpack.c.l.b16 %v2667
    %v2694 = vunpack.c.h.b16 %v2667
    %v2695 = vunpack.c.l.b16 %v2668
    %v2696 = vunpack.c.h.b16 %v2668
    %v2697 = vunpack.c.l.b16 %v2669
    %v2698 = vunpack.c.h.b16 %v2669
    %v2699 = vunpack.c.l.b16 %v2670
    %v2700 = vunpack.c.h.b16 %v2670
    %v2701 = vunpack.c.l.b16 %v2671
    %v2702 = vunpack.c.h.b16 %v2671
    %v2703 = vunpack.c.l.b16 %v2672
    %v2704 = vunpack.c.h.b16 %v2672
    %v2705 = vunpack.c.l.b16 %v2673
    %v2706 = vunpack.c.h.b16 %v2673
    %v2707 = vunpack.c.l.b16 %v2674
    %v2708 = vunpack.c.h.b16 %v2674
    %v2709 = vunpack.c.l.b16 %v2675
    %v2710 = vunpack.c.h.b16 %v2675
    %v2711 = vunpack.c.l.b16 %v2676
    %v2712 = vunpack.c.h.b16 %v2676
    %v2713 = vpack.c.b16 %v2691, %v2689
    %v2714 = vpack.c.b16 %v2692, %v2690
    %v2715 = vpack.c.b16 %v2695, %v2693
    %v2716 = vpack.c.b16 %v2696, %v2694
    %v2717 = vpack.c.b16 %v2699, %v2697
    %v2718 = vpack.c.b16 %v2700, %v2698
    %v2719 = vpack.c.b16 %v2703, %v2701
    %v2720 = vpack.c.b16 %v2704, %v2702
    %v2721 = vpack.c.b16 %v2707, %v2705
    %v2722 = vpack.c.b16 %v2708, %v2706
    %v2723 = vpack.c.b16 %v2711, %v2709
    %v2724 = vpack.c.b16 %v2712, %v2710
    %v2738 = vsel %vm149, %v2663, 0
    %v2741 = vsel %vm149, %v2664, 0
    %2743 = vmatprep.subr.bf16.mxu0 0
    %2744 = vmatpush1.bf16.msra.mxu0 0
    %2745 = vmatprep.subr.bf16.mxu0 0
    %2746 = vmatpush1.bf16.msra.mxu0 0
    %2747 = vmatprep.subr.bf16.mxu0 %v2724
    %2748 = vmatpush1.bf16.msra.mxu0 %v2723
    %2749 = vmatprep.subr.bf16.mxu0 %v2722
    %2750 = vmatpush1.bf16.msra.mxu0 %v2721
    %2751 = vmatprep.subr.bf16.mxu0 %v2720
    %2752 = vmatpush1.bf16.msra.mxu0 %v2719
    %2753 = vmatprep.subr.bf16.mxu0 %v2718
    %2754 = vmatpush1.bf16.msra.mxu0 %v2717
    %2755 = vmatprep.subr.bf16.mxu0 %v2716
    %2756 = vmatpush1.bf16.msra.mxu0 %v2715
    %2757 = vmatprep.subr.bf16.mxu0 %v2714
    %2758 = vmatpush1.bf16.msra.mxu0 %v2713
    %2759 = vmatprep.subr.bf16.mxu0 0
    %2760 = vmatpush2.bf16.msra.mxu0 0
    %2761 = vmatprep.subr.bf16.mxu0 0
    %2762 = vmatpush2.bf16.msra.mxu0 0
    %2763 = vmatprep.subr.bf16.mxu0 0
    %2764 = vmatpush2.bf16.msra.mxu0 0
    %2765 = vmatprep.subr.bf16.mxu0 0
    %2766 = vmatpush2.bf16.msra.mxu0 0
    %2767 = vmatprep.subr.bf16.mxu0 0
    %2768 = vmatpush2.bf16.msra.mxu0 0
    %2769 = vmatprep.subr.bf16.mxu0 0
    %2770 = vmatpush2.bf16.msra.mxu0 0
    %2771 = vmatprep.subr.bf16.mxu0 0
    %2772 = vmatpush2.bf16.msra.mxu0 0
    %2773 = vmatprep.subr.bf16.mxu0 0
    %2774 = vmatpush2.bf16.msra.mxu0 0
    %2775 = vmatprep.mubr.bf16.mxu0 0
    %2776 = vmatmul.mubr.bf16.gmra.mxu0 %v2738
    %v2777 = vpop.f32.mrf.mxu0
    %v2778 = vadd.f32 0.0, %v2777
    %v2779 = vpop.f32.mrf.mxu0
    %v2780 = vadd.f32 0.0, %v2779
    %v2781 = vpop.f32.mrf.mxu0
    %v2782 = vadd.f32 0.0, %v2781
    %v2783 = vpop.f32.mrf.mxu0
    %v2784 = vadd.f32 0.0, %v2783
    %2785 = vmatprep.mubr.bf16.mxu0 0
    %2786 = vmatmul.mubr.bf16.gmra.mxu0 %v2741
    %v2787 = vpop.f32.mrf.mxu0
    %v2788 = vadd.f32 0.0, %v2787
    %v2789 = vpop.f32.mrf.mxu0
    %v2790 = vadd.f32 0.0, %v2789
    %v2791 = vpop.f32.mrf.mxu0
    %v2792 = vadd.f32 0.0, %v2791
    %v2793 = vpop.f32.mrf.mxu0
    %v2794 = vadd.f32 0.0, %v2793
    %2795 = vdwg.mxu0
    %v2796 = vadd.f32 %v2651, %v2778
    %v2797 = vadd.f32 %v2652, %v2780
    %v2798 = vadd.f32 %v2653, %v2782
    %v2799 = vadd.f32 %v2654, %v2784
    %v2800 = vadd.f32 %v2655, %v2788
    %v2801 = vadd.f32 %v2656, %v2790
    %v2802 = vadd.f32 %v2657, %v2792
    %v2803 = vadd.f32 %v2658, %v2794
    %v2804 = vld [vmem:[%s2] sm:$0x3]
    %v2806 = vlaneseq
    %v2807 = vshrl.u32 %v2806, 7
    %v2808 = vsub.s32 0, %v2807
    %v2809 = vrot.slane %v2804, %v2808
    %v2810 = vlaneseq
    %v2811 = vshrl.u32 %v2810, 7
    %v2812 = vsub.s32 1, %v2811
    %v2813 = vrot.slane %v2804, %v2812
    %v2816 = vadd.f32 %v2796, %v2809
    %v2817 = vadd.f32 %v2797, %v2813
    %v2818 = vadd.f32 %v2798, %v2809
    %v2819 = vadd.f32 %v2799, %v2813
    %v2820 = vadd.f32 %v2800, %v2809
    %v2821 = vadd.f32 %v2801, %v2813
    %v2822 = vadd.f32 %v2802, %v2809
    %v2823 = vadd.f32 %v2803, %v2813
    %v2824 = vmax.f32 %v2816, 0.0
    %v2825 = vmax.f32 %v2817, 0.0
    %v2826 = vmax.f32 %v2818, 0.0
    %v2827 = vmax.f32 %v2819, 0.0
    %v2828 = vmax.f32 %v2820, 0.0
    %v2829 = vmax.f32 %v2821, 0.0
    %v2830 = vmax.f32 %v2822, 0.0
    %v2831 = vmax.f32 %v2823, 0.0
    %2832 = vst [vmem:[#allocation2] sm:$0xff] %v2824
    %2833 = vst.msk [vmem:[#allocation2 + $0x8] sm:$0xff] %vm795, %v2825
    %2834 = vst [vmem:[#allocation2 + $0x10] sm:$0xff] %v2826
    %2835 = vst.msk [vmem:[#allocation2 + $0x18] sm:$0xff] %vm795, %v2827
    %2836 = vst [vmem:[#allocation2 + $0x20] sm:$0xff] %v2828
    %2837 = vst.msk [vmem:[#allocation2 + $0x28] sm:$0xff] %vm795, %v2829
    %2838 = vst [vmem:[#allocation2 + $0x30] sm:$0xf] %v2830
    %2839 = vst.msk [vmem:[#allocation2 + $0x38] sm:$0xf] %vm802, %v2831
    %v2840 = vld [vmem:[#allocation2] sm:$0xff]
    %v2841 = vld [vmem:[#allocation2 + $0x8] sm:$0xff]
    %v2842 = vld [vmem:[#allocation2 + $0x10] sm:$0xff]
    %v2843 = vld [vmem:[#allocation2 + $0x18] sm:$0xff]
    %v2844 = vld [vmem:[#allocation2 + $0x20] sm:$0xff]
    %v2845 = vld [vmem:[#allocation2 + $0x28] sm:$0xff]
    %v2846 = vld [vmem:[#allocation2 + $0x30] sm:$0x7]
    %v2847 = vld [vmem:[#allocation2 + $0x38] sm:$0x7]
    %2856 = vrot.lane.b32.xlu0 %v2840, 122
    %v2857 = vpop.permute.xlu0 %2856
    %2858 = vrot.lane.b32.xlu0 %v2841, 122
    %v2859 = vpop.permute.xlu0 %2858
    %2860 = vrot.lane.b32.xlu0 %v2842, 122
    %v2861 = vpop.permute.xlu0 %2860
    %2862 = vrot.lane.b32.xlu0 %v2843, 122
    %v2863 = vpop.permute.xlu0 %2862
    %2864 = vrot.lane.b32.xlu0 %v2844, 122
    %v2865 = vpop.permute.xlu0 %2864
    %2866 = vrot.lane.b32.xlu0 %v2845, 122
    %v2867 = vpop.permute.xlu0 %2866
    %2868 = vrot.lane.b32.xlu0 %v2846, 122
    %v2869 = vpop.permute.xlu0 %2868
    %2870 = vrot.lane.b32.xlu0 %v2847, 122
    %v2871 = vpop.permute.xlu0 %2870
    %v2872 = vsel %vm836, %v2857, %v2859
    %v2873 = vsel %vm836, %v2861, %v2863
    %v2874 = vsel %vm836, %v2865, %v2867
    %v2875 = vsel %vm836, %v2869, %v2871
    %v2884 = vmax.f32 %v2840, %v2872
    %v2885 = vmax.f32 %v2841, %v2859
    %v2886 = vmax.f32 %v2842, %v2873
    %v2887 = vmax.f32 %v2843, %v2863
    %v2888 = vmax.f32 %v2844, %v2874
    %v2889 = vmax.f32 %v2845, %v2867
    %v2890 = vmax.f32 %v2846, %v2875
    %v2891 = vmax.f32 %v2847, %v2871
    %v2892 = vld [vmem:[#allocation2] sm:$0xfe]
    %v2893 = vld [vmem:[#allocation2 + $0x8] sm:$0xfe]
    %v2894 = vld [vmem:[#allocation2 + $0x30] sm:$0xf]
    %v2895 = vld [vmem:[#allocation2 + $0x38] sm:$0xf]
    %2900 = vrot.lane.b32.xlu0 %v2892, 122
    %v2901 = vpop.permute.xlu0 %2900
    %2902 = vrot.lane.b32.xlu0 %v2893, 122
    %v2903 = vpop.permute.xlu0 %2902
    %2904 = vrot.lane.b32.xlu0 %v2894, 122
    %v2905 = vpop.permute.xlu0 %2904
    %2906 = vrot.lane.b32.xlu0 %v2895, 122
    %v2907 = vpop.permute.xlu0 %2906
    %v2908 = vsel %vm836, %v2901, %v2903
    %v2909 = vsel %vm836, %v2905, %v2907
    %v2914 = vmax.f32 %v2892, %v2908
    %v2915 = vmax.f32 %v2893, %v2903
    %v2916 = vmax.f32 %v2894, %v2909
    %v2917 = vmax.f32 %v2895, %v2907
    %v2926 = vrot.slane %v2914, 1
    %v2927 = vrot.slane %v2886, 1
    %v2928 = vsel %vm891, %v2926, %v2927
    %v2929 = vrot.slane %v2915, 1
    %v2930 = vrot.slane %v2887, 1
    %v2931 = vsel %vm891, %v2929, %v2930
    %v2932 = vrot.slane %v2888, 1
    %v2933 = vsel %vm891, %v2927, %v2932
    %v2934 = vrot.slane %v2889, 1
    %v2935 = vsel %vm891, %v2930, %v2934
    %v2936 = vrot.slane %v2916, 1
    %v2937 = vsel %vm891, %v2932, %v2936
    %v2938 = vrot.slane %v2917, 1
    %v2939 = vsel %vm891, %v2934, %v2938
    %v2948 = vmax.f32 %v2884, %v2928
    %v2949 = vmax.f32 %v2885, %v2931
    %v2950 = vmax.f32 %v2886, %v2933
    %v2951 = vmax.f32 %v2887, %v2935
    %v2952 = vmax.f32 %v2888, %v2937
    %v2953 = vmax.f32 %v2889, %v2939
    %v2954 = vmax.f32 %v2890, %v2936
    %v2955 = vmax.f32 %v2891, %v2938
    %v2956 = vld [vmem:[%s3] sm:$0xff]
    %v2957 = vld [vmem:[%s3 + $0x8] sm:$0x3f]
    %v2959 = vsel %vm924, %v2956, 0
    %v2962 = vsel %vm924, %v2957, 0
    %v2965 = vsel %vm931, %v2954, 0
    %v2968 = vsel %vm931, %v2955, 0
    %2970 = vmatprep.subr.mxu0 0.0
    %2971 = vmatpush1.msra.mxu0 0.0
    %2972 = vmatprep.subr.mxu0 0.0
    %2973 = vmatpush1.msra.mxu0 0.0
    %2974 = vmatprep.subr.mxu0 0.0
    %2975 = vmatpush1.msra.mxu0 0.0
    %2976 = vmatprep.subr.mxu0 0.0
    %2977 = vmatpush1.msra.mxu0 0.0
    %2978 = vmatprep.subr.mxu0 0.0
    %2979 = vmatpush1.msra.mxu0 0.0
    %2980 = vmatprep.subr.mxu0 0.0
    %2981 = vmatpush1.msra.mxu0 0.0
    %2982 = vmatprep.subr.mxu0 0.0
    %2983 = vmatpush1.msra.mxu0 0.0
    %2984 = vmatprep.subr.mxu0 0.0
    %2985 = vmatpush1.msra.mxu0 0.0
    %2986 = vmatprep.subr.mxu0 0.0
    %2987 = vmatpush1.msra.mxu0 0.0
    %2988 = vmatprep.subr.mxu0 0.0
    %2989 = vmatpush1.msra.mxu0 0.0
    %2990 = vmatprep.subr.mxu0 0.0
    %2991 = vmatpush1.msra.mxu0 0.0
    %2992 = vmatprep.subr.mxu0 0.0
    %2993 = vmatpush1.msra.mxu0 0.0
    %2994 = vmatprep.subr.mxu0 %v2968
    %2995 = vmatpush1.msra.mxu0 %v2965
    %2996 = vmatprep.subr.mxu0 %v2953
    %2997 = vmatpush1.msra.mxu0 %v2952
    %2998 = vmatprep.subr.mxu0 %v2951
    %2999 = vmatpush1.msra.mxu0 %v2950
    %3000 = vmatprep.subr.mxu0 %v2949
    %3001 = vmatpush1.msra.mxu0 %v2948
    %3002 = vmatprep.subr.mxu0 0.0
    %3003 = vmatpush2.msra.mxu0 0.0
    %3004 = vmatprep.subr.mxu0 0.0
    %3005 = vmatpush2.msra.mxu0 0.0
    %3006 = vmatprep.subr.mxu0 0.0
    %3007 = vmatpush2.msra.mxu0 0.0
    %3008 = vmatprep.subr.mxu0 0.0
    %3009 = vmatpush2.msra.mxu0 0.0
    %3010 = vmatprep.subr.mxu0 0.0
    %3011 = vmatpush2.msra.mxu0 0.0
    %3012 = vmatprep.subr.mxu0 0.0
    %3013 = vmatpush2.msra.mxu0 0.0
    %3014 = vmatprep.subr.mxu0 0.0
    %3015 = vmatpush2.msra.mxu0 0.0
    %3016 = vmatprep.subr.mxu0 0.0
    %3017 = vmatpush2.msra.mxu0 0.0
    %3018 = vmatprep.subr.mxu0 0.0
    %3019 = vmatpush2.msra.mxu0 0.0
    %3020 = vmatprep.subr.mxu0 0.0
    %3021 = vmatpush2.msra.mxu0 0.0
    %3022 = vmatprep.subr.mxu0 0.0
    %3023 = vmatpush2.msra.mxu0 0.0
    %3024 = vmatprep.subr.mxu0 0.0
    %3025 = vmatpush2.msra.mxu0 0.0
    %3026 = vmatprep.subr.mxu0 0.0
    %3027 = vmatpush2.msra.mxu0 0.0
    %3028 = vmatprep.subr.mxu0 0.0
    %3029 = vmatpush2.msra.mxu0 0.0
    %3030 = vmatprep.subr.mxu0 0.0
    %3031 = vmatpush2.msra.mxu0 0.0
    %3032 = vmatprep.subr.mxu0 0.0
    %3033 = vmatpush2.msra.mxu0 0.0
    %3034 = vmatprep.mubr.f32.mxu0 0.0
    %3035 = vmatmul.mubr.f32.gmra.mxu0 %v2959
    %v3036 = vpop.f32.mrf.mxu0
    %v3037 = vadd.f32 0.0, %v3036
    %v3038 = vpop.f32.mrf.mxu0
    %v3039 = vadd.f32 0.0, %v3038
    %3040 = vmatprep.mubr.f32.mxu0 0.0
    %3041 = vmatmul.mubr.f32.gmra.mxu0 %v2962
    %v3042 = vpop.f32.mrf.mxu0
    %v3043 = vadd.f32 0.0, %v3042
    %v3044 = vpop.f32.mrf.mxu0
    %v3045 = vadd.f32 0.0, %v3044
    %3046 = vdwg.mxu0
    %v3047 = vld [vmem:[%s4] sm:$0xff]
    %v3048 = vld [vmem:[%s4 + $0x8] sm:$0xff]
    %v3049 = vld [vmem:[%s4 + $0x10] sm:$0xff]
    %v3050 = vld [vmem:[%s4 + $0x18] sm:$0xff]
    %v3051 = vld [vmem:[%s4 + $0x20] sm:$0xff]
    %v3052 = vld [vmem:[%s4 + $0x28] sm:$0xff]
    %v3053 = vld [vmem:[%s4 + $0x30] sm:$0xff]
    %v3054 = vld [vmem:[%s4 + $0x38] sm:$0xff]
    %v3055 = vld [vmem:[%s4 + $0x40] sm:$0xff]
    %v3056 = vld [vmem:[%s4 + $0x48] sm:$0xff]
    %v3057 = vld [vmem:[%s4 + $0x50] sm:$0xff]
    %v3058 = vld [vmem:[%s4 + $0x58] sm:$0xff]
    %v3059 = vld [vmem:[%s4 + $0x60] sm:$0xff]
    %v3060 = vld [vmem:[%s4 + $0x68] sm:$0xff]
    %v3061 = vld [vmem:[%s4 + $0x70] sm:$0xff]
    %v3062 = vld [vmem:[%s4 + $0x78] sm:$0xff]
    %v3063 = vld [vmem:[%s4 + $0x80] sm:$0xff]
    %v3064 = vld [vmem:[%s4 + $0x88] sm:$0xff]
    %v3065 = vld [vmem:[%s4 + $0x90] sm:$0xff]
    %v3066 = vld [vmem:[%s4 + $0x98] sm:$0xff]
    %v3067 = vld [vmem:[%s4 + $0xa0] sm:$0x3]
    %v3069 = vsel %vm1036, %v3039, 0
    %v3072 = vsel %vm1036, %v3045, 0
    %v3075 = vsel %vm1043, %v3067, 0
    %3077 = vmatprep.subr.mxu0 0.0
    %3078 = vmatpush1.msra.mxu0 %v3062
    %3079 = vmatprep.subr.mxu0 0.0
    %3080 = vmatpush1.msra.mxu0 %v3061
    %3081 = vmatprep.subr.mxu0 0.0
    %3082 = vmatpush1.msra.mxu0 %v3060
    %3083 = vmatprep.subr.mxu0 0.0
    %3084 = vmatpush1.msra.mxu0 %v3059
    %3085 = vmatprep.subr.mxu0 0.0
    %3086 = vmatpush1.msra.mxu0 %v3058
    %3087 = vmatprep.subr.mxu0 0.0
    %3088 = vmatpush1.msra.mxu0 %v3057
    %3089 = vmatprep.subr.mxu0 0.0
    %3090 = vmatpush1.msra.mxu0 %v3056
    %3091 = vmatprep.subr.mxu0 0.0
    %3092 = vmatpush1.msra.mxu0 %v3055
    %3093 = vmatprep.subr.mxu0 0.0
    %3094 = vmatpush1.msra.mxu0 %v3054
    %3095 = vmatprep.subr.mxu0 0.0
    %3096 = vmatpush1.msra.mxu0 %v3053
    %3097 = vmatprep.subr.mxu0 0.0
    %3098 = vmatpush1.msra.mxu0 %v3052
    %3099 = vmatprep.subr.mxu0 0.0
    %3100 = vmatpush1.msra.mxu0 %v3051
    %3101 = vmatprep.subr.mxu0 0.0
    %3102 = vmatpush1.msra.mxu0 %v3050
    %3103 = vmatprep.subr.mxu0 0.0
    %3104 = vmatpush1.msra.mxu0 %v3049
    %3105 = vmatprep.subr.mxu0 0.0
    %3106 = vmatpush1.msra.mxu0 %v3048
    %3107 = vmatprep.subr.mxu0 0.0
    %3108 = vmatpush1.msra.mxu0 %v3047
    %3109 = vmatprep.subr.mxu0 0.0
    %3110 = vmatpush2.msra.mxu0 0.0
    %3111 = vmatprep.subr.mxu0 0.0
    %3112 = vmatpush2.msra.mxu0 0.0
    %3113 = vmatprep.subr.mxu0 0.0
    %3114 = vmatpush2.msra.mxu0 0.0
    %3115 = vmatprep.subr.mxu0 0.0
    %3116 = vmatpush2.msra.mxu0 0.0
    %3117 = vmatprep.subr.mxu0 0.0
    %3118 = vmatpush2.msra.mxu0 0.0
    %3119 = vmatprep.subr.mxu0 0.0
    %3120 = vmatpush2.msra.mxu0 0.0
    %3121 = vmatprep.subr.mxu0 0.0
    %3122 = vmatpush2.msra.mxu0 0.0
    %3123 = vmatprep.subr.mxu0 0.0
    %3124 = vmatpush2.msra.mxu0 0.0
    %3125 = vmatprep.subr.mxu0 0.0
    %3126 = vmatpush2.msra.mxu0 0.0
    %3127 = vmatprep.subr.mxu0 0.0
    %3128 = vmatpush2.msra.mxu0 0.0
    %3129 = vmatprep.subr.mxu0 0.0
    %3130 = vmatpush2.msra.mxu0 0.0
    %3131 = vmatprep.subr.mxu0 0.0
    %3132 = vmatpush2.msra.mxu0 %v3075
    %3133 = vmatprep.subr.mxu0 0.0
    %3134 = vmatpush2.msra.mxu0 %v3066
    %3135 = vmatprep.subr.mxu0 0.0
    %3136 = vmatpush2.msra.mxu0 %v3065
    %3137 = vmatprep.subr.mxu0 0.0
    %3138 = vmatpush2.msra.mxu0 %v3064
    %3139 = vmatprep.subr.mxu0 0.0
    %3140 = vmatpush2.msra.mxu0 %v3063
    %3141 = vmatprep.mubr.f32.mxu0 %v3069
    %3142 = vmatmul.mubr.f32.gmra.mxu0 %v3037
    %v3143 = vpop.f32.mrf.mxu0
    %v3144 = vadd.f32 0.0, %v3143
    %v3145 = vpop.f32.mrf.mxu0
    %3146 = vmatprep.mubr.f32.mxu0 %v3072
    %3147 = vmatmul.mubr.f32.gmra.mxu0 %v3043
    %v3148 = vpop.f32.mrf.mxu0
    %v3149 = vadd.f32 0.0, %v3148
    %v3150 = vpop.f32.mrf.mxu0
    %3151 = vdwg.mxu0
    %3152 = vst.msk [vmem:[#allocation3] sm:$0xff] %vm1122, %v3144
    %3153 = vst.msk [vmem:[#allocation3 + $0x8] sm:$0x3f] %vm1124, %v3149
    %v3154 = vld [vmem:[#allocation3] sm:$0xff]
    %v3155 = vld [vmem:[#allocation3 + $0x8] sm:$0x3]
    %v3156 = vpack.c.bf16 %v3155, %v3154
    %v3157 = vld [vmem:[%s5] sm:$0xff]
    %v3158 = vld [vmem:[%s5 + $0x8] sm:$0xff]
    %v3159 = vld [vmem:[%s5 + $0x10] sm:$0xff]
    %v3160 = vld [vmem:[%s5 + $0x18] sm:$0xff]
    %v3161 = vld [vmem:[%s5 + $0x20] sm:$0xff]
    %v3162 = vld [vmem:[%s5 + $0x28] sm:$0xff]
    %v3163 = vld [vmem:[%s5 + $0x30] sm:$0xff]
    %v3164 = vld [vmem:[%s5 + $0x38] sm:$0xff]
    %v3165 = vld [vmem:[%s5 + $0x40] sm:$0xff]
    %v3166 = vld [vmem:[%s5 + $0x48] sm:$0xff]
    %v3167 = vld [vmem:[%s5 + $0x50] sm:$0x33]
    %v3168 = vld [vmem:[#allocation3 + $0x1] sm:$0xff]
    %v3169 = vld [vmem:[#allocation3 + $0x9] sm:$0x3]
    %v3170 = vpack.c.bf16 %v3169, %v3168
    %v3171 = vld [vmem:[%s1143] sm:$0xff]
    %v3172 = vld [vmem:[%s1143 + $0x8] sm:$0xff]
    %v3173 = vld [vmem:[%s1143 + $0x10] sm:$0xff]
    %v3174 = vld [vmem:[%s1143 + $0x18] sm:$0xff]
    %v3175 = vld [vmem:[%s1143 + $0x20] sm:$0xff]
    %v3176 = vld [vmem:[%s1143 + $0x28] sm:$0xff]
    %v3177 = vld [vmem:[%s1143 + $0x30] sm:$0xff]
    %v3178 = vld [vmem:[%s1143 + $0x38] sm:$0xff]
    %v3179 = vld [vmem:[%s1143 + $0x40] sm:$0xff]
    %v3180 = vld [vmem:[%s1143 + $0x48] sm:$0xff]
    %v3181 = vld [vmem:[%s1143 + $0x50] sm:$0x33]
    %v3193 = vunpack.c.l.b16 %v3171
    %v3194 = vunpack.c.h.b16 %v3171
    %v3195 = vunpack.c.l.b16 %v3172
    %v3196 = vunpack.c.h.b16 %v3172
    %v3197 = vunpack.c.l.b16 %v3173
    %v3198 = vunpack.c.h.b16 %v3173
    %v3199 = vunpack.c.l.b16 %v3174
    %v3200 = vunpack.c.h.b16 %v3174
    %v3201 = vunpack.c.l.b16 %v3175
    %v3202 = vunpack.c.h.b16 %v3175
    %v3203 = vunpack.c.l.b16 %v3176
    %v3204 = vunpack.c.h.b16 %v3176
    %v3205 = vunpack.c.l.b16 %v3177
    %v3206 = vunpack.c.h.b16 %v3177
    %v3207 = vunpack.c.l.b16 %v3178
    %v3208 = vunpack.c.h.b16 %v3178
    %v3209 = vunpack.c.l.b16 %v3179
    %v3210 = vunpack.c.h.b16 %v3179
    %v3211 = vunpack.c.l.b16 %v3180
    %v3212 = vunpack.c.h.b16 %v3180
    %v3213 = vunpack.c.l.b16 %v3181
    %v3214 = vunpack.c.h.b16 %v3181
    %v3215 = vpack.c.b16 %v3195, %v3193
    %v3216 = vpack.c.b16 %v3196, %v3194
    %v3217 = vpack.c.b16 %v3199, %v3197
    %v3218 = vpack.c.b16 %v3200, %v3198
    %v3219 = vpack.c.b16 %v3203, %v3201
    %v3220 = vpack.c.b16 %v3204, %v3202
    %v3221 = vpack.c.b16 %v3207, %v3205
    %v3222 = vpack.c.b16 %v3208, %v3206
    %v3223 = vpack.c.b16 %v3211, %v3209
    %v3224 = vpack.c.b16 %v3212, %v3210
    %v3225 = vpack.c.b16 %v3213, %v3213
    %v3226 = vpack.c.b16 %v3214, %v3214
    %v3238 = vsel %vm1122, %v3170, 0
    %v3241 = vsel %vm1043, %v3225, 0
    %v3244 = vsel %vm1043, %v3226, 0
    %3246 = vmatprep.subr.bf16.mxu0 0
    %3247 = vmatpush1.bf16.msra.mxu0 0
    %3248 = vmatprep.subr.bf16.mxu0 0
    %3249 = vmatpush1.bf16.msra.mxu0 0
    %3250 = vmatprep.subr.bf16.mxu0 %v3244
    %3251 = vmatpush1.bf16.msra.mxu0 %v3241
    %3252 = vmatprep.subr.bf16.mxu0 %v3224
    %3253 = vmatpush1.bf16.msra.mxu0 %v3223
    %3254 = vmatprep.subr.bf16.mxu0 %v3222
    %3255 = vmatpush1.bf16.msra.mxu0 %v3221
    %3256 = vmatprep.subr.bf16.mxu0 %v3220
    %3257 = vmatpush1.bf16.msra.mxu0 %v3219
    %3258 = vmatprep.subr.bf16.mxu0 %v3218
    %3259 = vmatpush1.bf16.msra.mxu0 %v3217
    %3260 = vmatprep.subr.bf16.mxu0 %v3216
    %3261 = vmatpush1.bf16.msra.mxu0 %v3215
    %3262 = vmatprep.subr.bf16.mxu0 0
    %3263 = vmatpush2.bf16.msra.mxu0 0
    %3264 = vmatprep.subr.bf16.mxu0 0
    %3265 = vmatpush2.bf16.msra.mxu0 0
    %3266 = vmatprep.subr.bf16.mxu0 0
    %3267 = vmatpush2.bf16.msra.mxu0 0
    %3268 = vmatprep.subr.bf16.mxu0 0
    %3269 = vmatpush2.bf16.msra.mxu0 0
    %3270 = vmatprep.subr.bf16.mxu0 0
    %3271 = vmatpush2.bf16.msra.mxu0 0
    %3272 = vmatprep.subr.bf16.mxu0 0
    %3273 = vmatpush2.bf16.msra.mxu0 0
    %3274 = vmatprep.subr.bf16.mxu0 0
    %3275 = vmatpush2.bf16.msra.mxu0 0
    %3276 = vmatprep.subr.bf16.mxu0 0
    %3277 = vmatpush2.bf16.msra.mxu0 0
    %3278 = vmatprep.mubr.bf16.mxu0 0
    %3279 = vmatmul.mubr.bf16.gmra.mxu0 %v3238
    %v3280 = vpop.f32.mrf.mxu0
    %v3281 = vadd.f32 0.0, %v3280
    %v3282 = vpop.f32.mrf.mxu0
    %v3283 = vadd.f32 0.0, %v3282
    %v3284 = vpop.f32.mrf.mxu0
    %v3285 = vadd.f32 0.0, %v3284
    %v3286 = vpop.f32.mrf.mxu0
    %v3287 = vadd.f32 0.0, %v3286
    %3288 = vdwg.mxu0
    %v3300 = vunpack.c.l.b16 %v3157
    %v3301 = vunpack.c.h.b16 %v3157
    %v3302 = vunpack.c.l.b16 %v3158
    %v3303 = vunpack.c.h.b16 %v3158
    %v3304 = vunpack.c.l.b16 %v3159
    %v3305 = vunpack.c.h.b16 %v3159
    %v3306 = vunpack.c.l.b16 %v3160
    %v3307 = vunpack.c.h.b16 %v3160
    %v3308 = vunpack.c.l.b16 %v3161
    %v3309 = vunpack.c.h.b16 %v3161
    %v3310 = vunpack.c.l.b16 %v3162
    %v3311 = vunpack.c.h.b16 %v3162
    %v3312 = vunpack.c.l.b16 %v3163
    %v3313 = vunpack.c.h.b16 %v3163
    %v3314 = vunpack.c.l.b16 %v3164
    %v3315 = vunpack.c.h.b16 %v3164
    %v3316 = vunpack.c.l.b16 %v3165
    %v3317 = vunpack.c.h.b16 %v3165
    %v3318 = vunpack.c.l.b16 %v3166
    %v3319 = vunpack.c.h.b16 %v3166
    %v3320 = vunpack.c.l.b16 %v3167
    %v3321 = vunpack.c.h.b16 %v3167
    %v3322 = vpack.c.b16 %v3302, %v3300
    %v3323 = vpack.c.b16 %v3303, %v3301
    %v3324 = vpack.c.b16 %v3306, %v3304
    %v3325 = vpack.c.b16 %v3307, %v3305
    %v3326 = vpack.c.b16 %v3310, %v3308
    %v3327 = vpack.c.b16 %v3311, %v3309
    %v3328 = vpack.c.b16 %v3314, %v3312
    %v3329 = vpack.c.b16 %v3315, %v3313
    %v3330 = vpack.c.b16 %v3318, %v3316
    %v3331 = vpack.c.b16 %v3319, %v3317
    %v3332 = vpack.c.b16 %v3320, %v3320
    %v3333 = vpack.c.b16 %v3321, %v3321
    %v3345 = vsel %vm1122, %v3156, 0
    %v3348 = vsel %vm1043, %v3332, 0
    %v3351 = vsel %vm1043, %v3333, 0
    %3353 = vmatprep.subr.bf16.mxu0 0
    %3354 = vmatpush1.bf16.msra.mxu0 0
    %3355 = vmatprep.subr.bf16.mxu0 0
    %3356 = vmatpush1.bf16.msra.mxu0 0
    %3357 = vmatprep.subr.bf16.mxu0 %v3351
    %3358 = vmatpush1.bf16.msra.mxu0 %v3348
    %3359 = vmatprep.subr.bf16.mxu0 %v3331
    %3360 = vmatpush1.bf16.msra.mxu0 %v3330
    %3361 = vmatprep.subr.bf16.mxu0 %v3329
    %3362 = vmatpush1.bf16.msra.mxu0 %v3328
    %3363 = vmatprep.subr.bf16.mxu0 %v3327
    %3364 = vmatpush1.bf16.msra.mxu0 %v3326
    %3365 = vmatprep.subr.bf16.mxu0 %v3325
    %3366 = vmatpush1.bf16.msra.mxu0 %v3324
    %3367 = vmatprep.subr.bf16.mxu0 %v3323
    %3368 = vmatpush1.bf16.msra.mxu0 %v3322
    %3369 = vmatprep.subr.bf16.mxu0 0
    %3370 = vmatpush2.bf16.msra.mxu0 0
    %3371 = vmatprep.subr.bf16.mxu0 0
    %3372 = vmatpush2.bf16.msra.mxu0 0
    %3373 = vmatprep.subr.bf16.mxu0 0
    %3374 = vmatpush2.bf16.msra.mxu0 0
    %3375 = vmatprep.subr.bf16.mxu0 0
    %3376 = vmatpush2.bf16.msra.mxu0 0
    %3377 = vmatprep.subr.bf16.mxu0 0
    %3378 = vmatpush2.bf16.msra.mxu0 0
    %3379 = vmatprep.subr.bf16.mxu0 0
    %3380 = vmatpush2.bf16.msra.mxu0 0
    %3381 = vmatprep.subr.bf16.mxu0 0
    %3382 = vmatpush2.bf16.msra.mxu0 0
    %3383 = vmatprep.subr.bf16.mxu0 0
    %3384 = vmatpush2.bf16.msra.mxu0 0
    %3385 = vmatprep.mubr.bf16.mxu0 0
    %3386 = vmatmul.mubr.bf16.gmra.mxu0 %v3345
    %v3387 = vpop.f32.mrf.mxu0
    %v3388 = vadd.f32 %v3281, %v3387
    %v3389 = vpop.f32.mrf.mxu0
    %v3390 = vadd.f32 %v3283, %v3389
    %v3391 = vpop.f32.mrf.mxu0
    %v3392 = vadd.f32 %v3285, %v3391
    %v3393 = vpop.f32.mrf.mxu0
    %v3394 = vadd.f32 %v3287, %v3393
    %3395 = vdwg.mxu0
    %v3396 = vld [vmem:[#allocation3 + $0x2] sm:$0xff]
    %v3397 = vld [vmem:[#allocation3 + $0xa] sm:$0x3]
    %v3398 = vpack.c.bf16 %v3397, %v3396
    %v3399 = vld [vmem:[%s1372] sm:$0xff]
    %v3400 = vld [vmem:[%s1372 + $0x8] sm:$0xff]
    %v3401 = vld [vmem:[%s1372 + $0x10] sm:$0xff]
    %v3402 = vld [vmem:[%s1372 + $0x18] sm:$0xff]
    %v3403 = vld [vmem:[%s1372 + $0x20] sm:$0xff]
    %v3404 = vld [vmem:[%s1372 + $0x28] sm:$0xff]
    %v3405 = vld [vmem:[%s1372 + $0x30] sm:$0xff]
    %v3406 = vld [vmem:[%s1372 + $0x38] sm:$0xff]
    %v3407 = vld [vmem:[%s1372 + $0x40] sm:$0xff]
    %v3408 = vld [vmem:[%s1372 + $0x48] sm:$0xff]
    %v3409 = vld [vmem:[%s1372 + $0x50] sm:$0x33]
    %v3421 = vunpack.c.l.b16 %v3399
    %v3422 = vunpack.c.h.b16 %v3399
    %v3423 = vunpack.c.l.b16 %v3400
    %v3424 = vunpack.c.h.b16 %v3400
    %v3425 = vunpack.c.l.b16 %v3401
    %v3426 = vunpack.c.h.b16 %v3401
    %v3427 = vunpack.c.l.b16 %v3402
    %v3428 = vunpack.c.h.b16 %v3402
    %v3429 = vunpack.c.l.b16 %v3403
    %v3430 = vunpack.c.h.b16 %v3403
    %v3431 = vunpack.c.l.b16 %v3404
    %v3432 = vunpack.c.h.b16 %v3404
    %v3433 = vunpack.c.l.b16 %v3405
    %v3434 = vunpack.c.h.b16 %v3405
    %v3435 = vunpack.c.l.b16 %v3406
    %v3436 = vunpack.c.h.b16 %v3406
    %v3437 = vunpack.c.l.b16 %v3407
    %v3438 = vunpack.c.h.b16 %v3407
    %v3439 = vunpack.c.l.b16 %v3408
    %v3440 = vunpack.c.h.b16 %v3408
    %v3441 = vunpack.c.l.b16 %v3409
    %v3442 = vunpack.c.h.b16 %v3409
    %v3443 = vpack.c.b16 %v3423, %v3421
    %v3444 = vpack.c.b16 %v3424, %v3422
    %v3445 = vpack.c.b16 %v3427, %v3425
    %v3446 = vpack.c.b16 %v3428, %v3426
    %v3447 = vpack.c.b16 %v3431, %v3429
    %v3448 = vpack.c.b16 %v3432, %v3430
    %v3449 = vpack.c.b16 %v3435, %v3433
    %v3450 = vpack.c.b16 %v3436, %v3434
    %v3451 = vpack.c.b16 %v3439, %v3437
    %v3452 = vpack.c.b16 %v3440, %v3438
    %v3453 = vpack.c.b16 %v3441, %v3441
    %v3454 = vpack.c.b16 %v3442, %v3442
    %v3466 = vsel %vm1122, %v3398, 0
    %v3469 = vsel %vm1043, %v3453, 0
    %v3472 = vsel %vm1043, %v3454, 0
    %3474 = vmatprep.subr.bf16.mxu0 0
    %3475 = vmatpush1.bf16.msra.mxu0 0
    %3476 = vmatprep.subr.bf16.mxu0 0
    %3477 = vmatpush1.bf16.msra.mxu0 0
    %3478 = vmatprep.subr.bf16.mxu0 %v3472
    %3479 = vmatpush1.bf16.msra.mxu0 %v3469
    %3480 = vmatprep.subr.bf16.mxu0 %v3452
    %3481 = vmatpush1.bf16.msra.mxu0 %v3451
    %3482 = vmatprep.subr.bf16.mxu0 %v3450
    %3483 = vmatpush1.bf16.msra.mxu0 %v3449
    %3484 = vmatprep.subr.bf16.mxu0 %v3448
    %3485 = vmatpush1.bf16.msra.mxu0 %v3447
    %3486 = vmatprep.subr.bf16.mxu0 %v3446
    %3487 = vmatpush1.bf16.msra.mxu0 %v3445
    %3488 = vmatprep.subr.bf16.mxu0 %v3444
    %3489 = vmatpush1.bf16.msra.mxu0 %v3443
    %3490 = vmatprep.subr.bf16.mxu0 0
    %3491 = vmatpush2.bf16.msra.mxu0 0
    %3492 = vmatprep.subr.bf16.mxu0 0
    %3493 = vmatpush2.bf16.msra.mxu0 0
    %3494 = vmatprep.subr.bf16.mxu0 0
    %3495 = vmatpush2.bf16.msra.mxu0 0
    %3496 = vmatprep.subr.bf16.mxu0 0
    %3497 = vmatpush2.bf16.msra.mxu0 0
    %3498 = vmatprep.subr.bf16.mxu0 0
    %3499 = vmatpush2.bf16.msra.mxu0 0
    %3500 = vmatprep.subr.bf16.mxu0 0
    %3501 = vmatpush2.bf16.msra.mxu0 0
    %3502 = vmatprep.subr.bf16.mxu0 0
    %3503 = vmatpush2.bf16.msra.mxu0 0
    %3504 = vmatprep.subr.bf16.mxu0 0
    %3505 = vmatpush2.bf16.msra.mxu0 0
    %3506 = vmatprep.mubr.bf16.mxu0 0
    %3507 = vmatmul.mubr.bf16.gmra.mxu0 %v3466
    %v3508 = vpop.f32.mrf.mxu0
    %v3509 = vadd.f32 0.0, %v3508
    %v3510 = vpop.f32.mrf.mxu0
    %v3511 = vadd.f32 0.0, %v3510
    %v3512 = vpop.f32.mrf.mxu0
    %v3513 = vadd.f32 0.0, %v3512
    %v3514 = vpop.f32.mrf.mxu0
    %v3515 = vadd.f32 0.0, %v3514
    %3516 = vdwg.mxu0
    %v3517 = vadd.f32 %v3388, %v3509
    %v3518 = vadd.f32 %v3390, %v3511
    %v3519 = vadd.f32 %v3392, %v3513
    %v3520 = vadd.f32 %v3394, %v3515
    %v3521 = vld [vmem:[#allocation3 + $0x3] sm:$0xff]
    %v3522 = vld [vmem:[#allocation3 + $0xb] sm:$0x3]
    %v3523 = vpack.c.bf16 %v3522, %v3521
    %v3524 = vld [vmem:[%s1498] sm:$0xff]
    %v3525 = vld [vmem:[%s1498 + $0x8] sm:$0xff]
    %v3526 = vld [vmem:[%s1498 + $0x10] sm:$0xff]
    %v3527 = vld [vmem:[%s1498 + $0x18] sm:$0xff]
    %v3528 = vld [vmem:[%s1498 + $0x20] sm:$0xff]
    %v3529 = vld [vmem:[%s1498 + $0x28] sm:$0xff]
    %v3530 = vld [vmem:[%s1498 + $0x30] sm:$0xff]
    %v3531 = vld [vmem:[%s1498 + $0x38] sm:$0xff]
    %v3532 = vld [vmem:[%s1498 + $0x40] sm:$0xff]
    %v3533 = vld [vmem:[%s1498 + $0x48] sm:$0xff]
    %v3534 = vld [vmem:[%s1498 + $0x50] sm:$0x33]
    %v3546 = vunpack.c.l.b16 %v3524
    %v3547 = vunpack.c.h.b16 %v3524
    %v3548 = vunpack.c.l.b16 %v3525
    %v3549 = vunpack.c.h.b16 %v3525
    %v3550 = vunpack.c.l.b16 %v3526
    %v3551 = vunpack.c.h.b16 %v3526
    %v3552 = vunpack.c.l.b16 %v3527
    %v3553 = vunpack.c.h.b16 %v3527
    %v3554 = vunpack.c.l.b16 %v3528
    %v3555 = vunpack.c.h.b16 %v3528
    %v3556 = vunpack.c.l.b16 %v3529
    %v3557 = vunpack.c.h.b16 %v3529
    %v3558 = vunpack.c.l.b16 %v3530
    %v3559 = vunpack.c.h.b16 %v3530
    %v3560 = vunpack.c.l.b16 %v3531
    %v3561 = vunpack.c.h.b16 %v3531
    %v3562 = vunpack.c.l.b16 %v3532
    %v3563 = vunpack.c.h.b16 %v3532
    %v3564 = vunpack.c.l.b16 %v3533
    %v3565 = vunpack.c.h.b16 %v3533
    %v3566 = vunpack.c.l.b16 %v3534
    %v3567 = vunpack.c.h.b16 %v3534
    %v3568 = vpack.c.b16 %v3548, %v3546
    %v3569 = vpack.c.b16 %v3549, %v3547
    %v3570 = vpack.c.b16 %v3552, %v3550
    %v3571 = vpack.c.b16 %v3553, %v3551
    %v3572 = vpack.c.b16 %v3556, %v3554
    %v3573 = vpack.c.b16 %v3557, %v3555
    %v3574 = vpack.c.b16 %v3560, %v3558
    %v3575 = vpack.c.b16 %v3561, %v3559
    %v3576 = vpack.c.b16 %v3564, %v3562
    %v3577 = vpack.c.b16 %v3565, %v3563
    %v3578 = vpack.c.b16 %v3566, %v3566
    %v3579 = vpack.c.b16 %v3567, %v3567
    %v3591 = vsel %vm1122, %v3523, 0
    %v3594 = vsel %vm1043, %v3578, 0
    %v3597 = vsel %vm1043, %v3579, 0
    %3599 = vmatprep.subr.bf16.mxu0 0
    %3600 = vmatpush1.bf16.msra.mxu0 0
    %3601 = vmatprep.subr.bf16.mxu0 0
    %3602 = vmatpush1.bf16.msra.mxu0 0
    %3603 = vmatprep.subr.bf16.mxu0 %v3597
    %3604 = vmatpush1.bf16.msra.mxu0 %v3594
    %3605 = vmatprep.subr.bf16.mxu0 %v3577
    %3606 = vmatpush1.bf16.msra.mxu0 %v3576
    %3607 = vmatprep.subr.bf16.mxu0 %v3575
    %3608 = vmatpush1.bf16.msra.mxu0 %v3574
    %3609 = vmatprep.subr.bf16.mxu0 %v3573
    %3610 = vmatpush1.bf16.msra.mxu0 %v3572
    %3611 = vmatprep.subr.bf16.mxu0 %v3571
    %3612 = vmatpush1.bf16.msra.mxu0 %v3570
    %3613 = vmatprep.subr.bf16.mxu0 %v3569
    %3614 = vmatpush1.bf16.msra.mxu0 %v3568
    %3615 = vmatprep.subr.bf16.mxu0 0
    %3616 = vmatpush2.bf16.msra.mxu0 0
    %3617 = vmatprep.subr.bf16.mxu0 0
    %3618 = vmatpush2.bf16.msra.mxu0 0
    %3619 = vmatprep.subr.bf16.mxu0 0
    %3620 = vmatpush2.bf16.msra.mxu0 0
    %3621 = vmatprep.subr.bf16.mxu0 0
    %3622 = vmatpush2.bf16.msra.mxu0 0
    %3623 = vmatprep.subr.bf16.mxu0 0
    %3624 = vmatpush2.bf16.msra.mxu0 0
    %3625 = vmatprep.subr.bf16.mxu0 0
    %3626 = vmatpush2.bf16.msra.mxu0 0
    %3627 = vmatprep.subr.bf16.mxu0 0
    %3628 = vmatpush2.bf16.msra.mxu0 0
    %3629 = vmatprep.subr.bf16.mxu0 0
    %3630 = vmatpush2.bf16.msra.mxu0 0
    %3631 = vmatprep.mubr.bf16.mxu0 0
    %3632 = vmatmul.mubr.bf16.gmra.mxu0 %v3591
    %v3633 = vpop.f32.mrf.mxu0
    %v3634 = vadd.f32 0.0, %v3633
    %v3635 = vpop.f32.mrf.mxu0
    %v3636 = vadd.f32 0.0, %v3635
    %v3637 = vpop.f32.mrf.mxu0
    %v3638 = vadd.f32 0.0, %v3637
    %v3639 = vpop.f32.mrf.mxu0
    %v3640 = vadd.f32 0.0, %v3639
    %3641 = vdwg.mxu0
    %v3642 = vadd.f32 %v3517, %v3634
    %v3643 = vadd.f32 %v3518, %v3636
    %v3644 = vadd.f32 %v3519, %v3638
    %v3645 = vadd.f32 %v3520, %v3640
    %v3646 = vld [vmem:[#allocation3 + $0x4] sm:$0xff]
    %v3647 = vld [vmem:[#allocation3 + $0xc] sm:$0x3]
    %v3648 = vpack.c.bf16 %v3647, %v3646
    %v3649 = vld [vmem:[%s1624] sm:$0xff]
    %v3650 = vld [vmem:[%s1624 + $0x8] sm:$0xff]
    %v3651 = vld [vmem:[%s1624 + $0x10] sm:$0xff]
    %v3652 = vld [vmem:[%s1624 + $0x18] sm:$0xff]
    %v3653 = vld [vmem:[%s1624 + $0x20] sm:$0xff]
    %v3654 = vld [vmem:[%s1624 + $0x28] sm:$0xff]
    %v3655 = vld [vmem:[%s1624 + $0x30] sm:$0xff]
    %v3656 = vld [vmem:[%s1624 + $0x38] sm:$0xff]
    %v3657 = vld [vmem:[%s1624 + $0x40] sm:$0xff]
    %v3658 = vld [vmem:[%s1624 + $0x48] sm:$0xff]
    %v3659 = vld [vmem:[%s1624 + $0x50] sm:$0x33]
    %v3671 = vunpack.c.l.b16 %v3649
    %v3672 = vunpack.c.h.b16 %v3649
    %v3673 = vunpack.c.l.b16 %v3650
    %v3674 = vunpack.c.h.b16 %v3650
    %v3675 = vunpack.c.l.b16 %v3651
    %v3676 = vunpack.c.h.b16 %v3651
    %v3677 = vunpack.c.l.b16 %v3652
    %v3678 = vunpack.c.h.b16 %v3652
    %v3679 = vunpack.c.l.b16 %v3653
    %v3680 = vunpack.c.h.b16 %v3653
    %v3681 = vunpack.c.l.b16 %v3654
    %v3682 = vunpack.c.h.b16 %v3654
    %v3683 = vunpack.c.l.b16 %v3655
    %v3684 = vunpack.c.h.b16 %v3655
    %v3685 = vunpack.c.l.b16 %v3656
    %v3686 = vunpack.c.h.b16 %v3656
    %v3687 = vunpack.c.l.b16 %v3657
    %v3688 = vunpack.c.h.b16 %v3657
    %v3689 = vunpack.c.l.b16 %v3658
    %v3690 = vunpack.c.h.b16 %v3658
    %v3691 = vunpack.c.l.b16 %v3659
    %v3692 = vunpack.c.h.b16 %v3659
    %v3693 = vpack.c.b16 %v3673, %v3671
    %v3694 = vpack.c.b16 %v3674, %v3672
    %v3695 = vpack.c.b16 %v3677, %v3675
    %v3696 = vpack.c.b16 %v3678, %v3676
    %v3697 = vpack.c.b16 %v3681, %v3679
    %v3698 = vpack.c.b16 %v3682, %v3680
    %v3699 = vpack.c.b16 %v3685, %v3683
    %v3700 = vpack.c.b16 %v3686, %v3684
    %v3701 = vpack.c.b16 %v3689, %v3687
    %v3702 = vpack.c.b16 %v3690, %v3688
    %v3703 = vpack.c.b16 %v3691, %v3691
    %v3704 = vpack.c.b16 %v3692, %v3692
    %v3716 = vsel %vm1122, %v3648, 0
    %v3719 = vsel %vm1043, %v3703, 0
    %v3722 = vsel %vm1043, %v3704, 0
    %3724 = vmatprep.subr.bf16.mxu0 0
    %3725 = vmatpush1.bf16.msra.mxu0 0
    %3726 = vmatprep.subr.bf16.mxu0 0
    %3727 = vmatpush1.bf16.msra.mxu0 0
    %3728 = vmatprep.subr.bf16.mxu0 %v3722
    %3729 = vmatpush1.bf16.msra.mxu0 %v3719
    %3730 = vmatprep.subr.bf16.mxu0 %v3702
    %3731 = vmatpush1.bf16.msra.mxu0 %v3701
    %3732 = vmatprep.subr.bf16.mxu0 %v3700
    %3733 = vmatpush1.bf16.msra.mxu0 %v3699
    %3734 = vmatprep.subr.bf16.mxu0 %v3698
    %3735 = vmatpush1.bf16.msra.mxu0 %v3697
    %3736 = vmatprep.subr.bf16.mxu0 %v3696
    %3737 = vmatpush1.bf16.msra.mxu0 %v3695
    %3738 = vmatprep.subr.bf16.mxu0 %v3694
    %3739 = vmatpush1.bf16.msra.mxu0 %v3693
    %3740 = vmatprep.subr.bf16.mxu0 0
    %3741 = vmatpush2.bf16.msra.mxu0 0
    %3742 = vmatprep.subr.bf16.mxu0 0
    %3743 = vmatpush2.bf16.msra.mxu0 0
    %3744 = vmatprep.subr.bf16.mxu0 0
    %3745 = vmatpush2.bf16.msra.mxu0 0
    %3746 = vmatprep.subr.bf16.mxu0 0
    %3747 = vmatpush2.bf16.msra.mxu0 0
    %3748 = vmatprep.subr.bf16.mxu0 0
    %3749 = vmatpush2.bf16.msra.mxu0 0
    %3750 = vmatprep.subr.bf16.mxu0 0
    %3751 = vmatpush2.bf16.msra.mxu0 0
    %3752 = vmatprep.subr.bf16.mxu0 0
    %3753 = vmatpush2.bf16.msra.mxu0 0
    %3754 = vmatprep.subr.bf16.mxu0 0
    %3755 = vmatpush2.bf16.msra.mxu0 0
    %3756 = vmatprep.mubr.bf16.mxu0 0
    %3757 = vmatmul.mubr.bf16.gmra.mxu0 %v3716
    %v3758 = vpop.f32.mrf.mxu0
    %v3759 = vadd.f32 0.0, %v3758
    %v3760 = vpop.f32.mrf.mxu0
    %v3761 = vadd.f32 0.0, %v3760
    %v3762 = vpop.f32.mrf.mxu0
    %v3763 = vadd.f32 0.0, %v3762
    %v3764 = vpop.f32.mrf.mxu0
    %v3765 = vadd.f32 0.0, %v3764
    %3766 = vdwg.mxu0
    %v3767 = vadd.f32 %v3642, %v3759
    %v3768 = vadd.f32 %v3643, %v3761
    %v3769 = vadd.f32 %v3644, %v3763
    %v3770 = vadd.f32 %v3645, %v3765
    %v3771 = vld [vmem:[%s6] sm:$0x3]
    %v3773 = vlaneseq
    %v3774 = vshrl.u32 %v3773, 7
    %v3775 = vsub.s32 0, %v3774
    %v3776 = vrot.slane %v3771, %v3775
    %v3777 = vlaneseq
    %v3778 = vshrl.u32 %v3777, 7
    %v3779 = vsub.s32 1, %v3778
    %v3780 = vrot.slane %v3771, %v3779
    %v3783 = vadd.f32 %v3767, %v3776
    %v3784 = vadd.f32 %v3768, %v3780
    %v3785 = vadd.f32 %v3769, %v3776
    %v3786 = vadd.f32 %v3770, %v3780
    %v3787 = vmax.f32 %v3783, 0.0
    %v3788 = vmax.f32 %v3784, 0.0
    %v3789 = vmax.f32 %v3785, 0.0
    %v3790 = vmax.f32 %v3786, 0.0
    %3791 = vst [vmem:[#allocation4] sm:$0xff] %v3787
    %3792 = vst.msk [vmem:[#allocation4 + $0x8] sm:$0xff] %vm1768, %v3788
    %3793 = vst [vmem:[#allocation4 + $0x10] sm:$0x3] %v3789
    %3794 = vst.msk [vmem:[#allocation4 + $0x18] sm:$0x3] %vm1771, %v3790
    %v3795 = vld [vmem:[#allocation4] sm:$0xff]
    %v3796 = vld [vmem:[#allocation4 + $0x8] sm:$0xff]
    %v3797 = vld [vmem:[#allocation4 + $0x10] sm:$0x1]
    %v3798 = vld [vmem:[#allocation4 + $0x18] sm:$0x1]
    %3803 = vrot.lane.b32.xlu0 %v3795, 112
    %v3804 = vpop.permute.xlu0 %3803
    %3805 = vrot.lane.b32.xlu0 %v3796, 112
    %v3806 = vpop.permute.xlu0 %3805
    %3807 = vrot.lane.b32.xlu0 %v3797, 112
    %v3808 = vpop.permute.xlu0 %3807
    %3809 = vrot.lane.b32.xlu0 %v3798, 112
    %v3810 = vpop.permute.xlu0 %3809
    %v3811 = vsel %vm1789, %v3804, %v3806
    %v3812 = vsel %vm1789, %v3808, %v3810
    %v3817 = vmax.f32 %v3795, %v3811
    %v3818 = vmax.f32 %v3796, %v3806
    %v3819 = vmax.f32 %v3797, %v3812
    %v3820 = vmax.f32 %v3798, %v3810
    %v3821 = vld [vmem:[#allocation4] sm:$0xfe]
    %v3822 = vld [vmem:[#allocation4 + $0x8] sm:$0xfe]
    %v3823 = vld [vmem:[#allocation4 + $0x10] sm:$0x3]
    %v3824 = vld [vmem:[#allocation4 + $0x18] sm:$0x3]
    %3829 = vrot.lane.b32.xlu0 %v3821, 112
    %v3830 = vpop.permute.xlu0 %3829
    %3831 = vrot.lane.b32.xlu0 %v3822, 112
    %v3832 = vpop.permute.xlu0 %3831
    %3833 = vrot.lane.b32.xlu0 %v3823, 112
    %v3834 = vpop.permute.xlu0 %3833
    %3835 = vrot.lane.b32.xlu0 %v3824, 112
    %v3836 = vpop.permute.xlu0 %3835
    %v3837 = vsel %vm1789, %v3830, %v3832
    %v3838 = vsel %vm1789, %v3834, %v3836
    %v3843 = vmax.f32 %v3821, %v3837
    %v3844 = vmax.f32 %v3822, %v3832
    %v3845 = vmax.f32 %v3823, %v3838
    %v3846 = vmax.f32 %v3824, %v3836
    %v3851 = vrot.slane %v3843, 1
    %v3852 = vrot.slane %v3845, 1
    %v3853 = vsel %vm891, %v3851, %v3852
    %v3854 = vrot.slane %v3844, 1
    %v3855 = vrot.slane %v3846, 1
    %v3856 = vsel %vm891, %v3854, %v3855
    %v3861 = vmax.f32 %v3817, %v3853
    %v3862 = vmax.f32 %v3818, %v3856
    %v3863 = vmax.f32 %v3819, %v3852
    %v3864 = vmax.f32 %v3820, %v3855
    %v3865 = vld [vmem:[%s7] sm:$0x1f]
    %v3867 = vsel %vm1845, %v3865, 0
    %v3870 = vsel %vm1849, %v3863, 0
    %v3873 = vsel %vm1849, %v3864, 0
    %3875 = vmatprep.subr.mxu0 0.0
    %3876 = vmatpush1.msra.mxu0 0.0
    %3877 = vmatprep.subr.mxu0 0.0
    %3878 = vmatpush1.msra.mxu0 0.0
    %3879 = vmatprep.subr.mxu0 0.0
    %3880 = vmatpush1.msra.mxu0 0.0
    %3881 = vmatprep.subr.mxu0 0.0
    %3882 = vmatpush1.msra.mxu0 0.0
    %3883 = vmatprep.subr.mxu0 0.0
    %3884 = vmatpush1.msra.mxu0 0.0
    %3885 = vmatprep.subr.mxu0 0.0
    %3886 = vmatpush1.msra.mxu0 0.0
    %3887 = vmatprep.subr.mxu0 0.0
    %3888 = vmatpush1.msra.mxu0 0.0
    %3889 = vmatprep.subr.mxu0 0.0
    %3890 = vmatpush1.msra.mxu0 0.0
    %3891 = vmatprep.subr.mxu0 0.0
    %3892 = vmatpush1.msra.mxu0 0.0
    %3893 = vmatprep.subr.mxu0 0.0
    %3894 = vmatpush1.msra.mxu0 0.0
    %3895 = vmatprep.subr.mxu0 0.0
    %3896 = vmatpush1.msra.mxu0 0.0
    %3897 = vmatprep.subr.mxu0 0.0
    %3898 = vmatpush1.msra.mxu0 0.0
    %3899 = vmatprep.subr.mxu0 0.0
    %3900 = vmatpush1.msra.mxu0 0.0
    %3901 = vmatprep.subr.mxu0 0.0
    %3902 = vmatpush1.msra.mxu0 0.0
    %3903 = vmatprep.subr.mxu0 %v3873
    %3904 = vmatpush1.msra.mxu0 %v3870
    %3905 = vmatprep.subr.mxu0 %v3862
    %3906 = vmatpush1.msra.mxu0 %v3861
    %3907 = vmatprep.subr.mxu0 0.0
    %3908 = vmatpush2.msra.mxu0 0.0
    %3909 = vmatprep.subr.mxu0 0.0
    %3910 = vmatpush2.msra.mxu0 0.0
    %3911 = vmatprep.subr.mxu0 0.0
    %3912 = vmatpush2.msra.mxu0 0.0
    %3913 = vmatprep.subr.mxu0 0.0
    %3914 = vmatpush2.msra.mxu0 0.0
    %3915 = vmatprep.subr.mxu0 0.0
    %3916 = vmatpush2.msra.mxu0 0.0
    %3917 = vmatprep.subr.mxu0 0.0
    %3918 = vmatpush2.msra.mxu0 0.0
    %3919 = vmatprep.subr.mxu0 0.0
    %3920 = vmatpush2.msra.mxu0 0.0
    %3921 = vmatprep.subr.mxu0 0.0
    %3922 = vmatpush2.msra.mxu0 0.0
    %3923 = vmatprep.subr.mxu0 0.0
    %3924 = vmatpush2.msra.mxu0 0.0
    %3925 = vmatprep.subr.mxu0 0.0
    %3926 = vmatpush2.msra.mxu0 0.0
    %3927 = vmatprep.subr.mxu0 0.0
    %3928 = vmatpush2.msra.mxu0 0.0
    %3929 = vmatprep.subr.mxu0 0.0
    %3930 = vmatpush2.msra.mxu0 0.0
    %3931 = vmatprep.subr.mxu0 0.0
    %3932 = vmatpush2.msra.mxu0 0.0
    %3933 = vmatprep.subr.mxu0 0.0
    %3934 = vmatpush2.msra.mxu0 0.0
    %3935 = vmatprep.subr.mxu0 0.0
    %3936 = vmatpush2.msra.mxu0 0.0
    %3937 = vmatprep.subr.mxu0 0.0
    %3938 = vmatpush2.msra.mxu0 0.0
    %3939 = vmatprep.mubr.f32.mxu0 0.0
    %3940 = vmatmul.mubr.f32.gmra.mxu0 %v3867
    %v3941 = vpop.f32.mrf.mxu0
    %v3942 = vadd.f32 0.0, %v3941
    %v3943 = vpop.f32.mrf.mxu0
    %v3944 = vadd.f32 0.0, %v3943
    %3945 = vdwg.mxu0
    %v3946 = vld [vmem:[%s8] sm:$0xff]
    %v3947 = vld [vmem:[%s8 + $0x8] sm:$0xff]
    %v3948 = vld [vmem:[%s8 + $0x10] sm:$0xff]
    %v3949 = vld [vmem:[%s8 + $0x18] sm:$0xff]
    %v3950 = vld [vmem:[%s8 + $0x20] sm:$0xff]
    %v3951 = vld [vmem:[%s8 + $0x28] sm:$0xff]
    %v3952 = vld [vmem:[%s8 + $0x30] sm:$0xff]
    %v3953 = vld [vmem:[%s8 + $0x38] sm:$0xff]
    %v3954 = vld [vmem:[%s8 + $0x40] sm:$0xff]
    %v3955 = vld [vmem:[%s8 + $0x48] sm:$0xff]
    %v3956 = vld [vmem:[%s8 + $0x50] sm:$0xff]
    %v3957 = vld [vmem:[%s8 + $0x58] sm:$0xff]
    %v3958 = vld [vmem:[%s8 + $0x60] sm:$0xff]
    %v3959 = vld [vmem:[%s8 + $0x68] sm:$0xff]
    %v3960 = vld [vmem:[%s8 + $0x70] sm:$0xff]
    %v3961 = vld [vmem:[%s8 + $0x78] sm:$0xff]
    %v3962 = vld [vmem:[%s8 + $0x80] sm:$0xff]
    %v3963 = vld [vmem:[%s8 + $0x88] sm:$0xff]
    %v3965 = vsel %vm1945, %v3944, 0
    %3967 = vmatprep.subr.mxu0 0.0
    %3968 = vmatpush1.msra.mxu0 %v3961
    %3969 = vmatprep.subr.mxu0 0.0
    %3970 = vmatpush1.msra.mxu0 %v3960
    %3971 = vmatprep.subr.mxu0 0.0
    %3972 = vmatpush1.msra.mxu0 %v3959
    %3973 = vmatprep.subr.mxu0 0.0
    %3974 = vmatpush1.msra.mxu0 %v3958
    %3975 = vmatprep.subr.mxu0 0.0
    %3976 = vmatpush1.msra.mxu0 %v3957
    %3977 = vmatprep.subr.mxu0 0.0
    %3978 = vmatpush1.msra.mxu0 %v3956
    %3979 = vmatprep.subr.mxu0 0.0
    %3980 = vmatpush1.msra.mxu0 %v3955
    %3981 = vmatprep.subr.mxu0 0.0
    %3982 = vmatpush1.msra.mxu0 %v3954
    %3983 = vmatprep.subr.mxu0 0.0
    %3984 = vmatpush1.msra.mxu0 %v3953
    %3985 = vmatprep.subr.mxu0 0.0
    %3986 = vmatpush1.msra.mxu0 %v3952
    %3987 = vmatprep.subr.mxu0 0.0
    %3988 = vmatpush1.msra.mxu0 %v3951
    %3989 = vmatprep.subr.mxu0 0.0
    %3990 = vmatpush1.msra.mxu0 %v3950
    %3991 = vmatprep.subr.mxu0 0.0
    %3992 = vmatpush1.msra.mxu0 %v3949
    %3993 = vmatprep.subr.mxu0 0.0
    %3994 = vmatpush1.msra.mxu0 %v3948
    %3995 = vmatprep.subr.mxu0 0.0
    %3996 = vmatpush1.msra.mxu0 %v3947
    %3997 = vmatprep.subr.mxu0 0.0
    %3998 = vmatpush1.msra.mxu0 %v3946
    %3999 = vmatprep.subr.mxu0 0.0
    %4000 = vmatpush2.msra.mxu0 0.0
    %4001 = vmatprep.subr.mxu0 0.0
    %4002 = vmatpush2.msra.mxu0 0.0
    %4003 = vmatprep.subr.mxu0 0.0
    %4004 = vmatpush2.msra.mxu0 0.0
    %4005 = vmatprep.subr.mxu0 0.0
    %4006 = vmatpush2.msra.mxu0 0.0
    %4007 = vmatprep.subr.mxu0 0.0
    %4008 = vmatpush2.msra.mxu0 0.0
    %4009 = vmatprep.subr.mxu0 0.0
    %4010 = vmatpush2.msra.mxu0 0.0
    %4011 = vmatprep.subr.mxu0 0.0
    %4012 = vmatpush2.msra.mxu0 0.0
    %4013 = vmatprep.subr.mxu0 0.0
    %4014 = vmatpush2.msra.mxu0 0.0
    %4015 = vmatprep.subr.mxu0 0.0
    %4016 = vmatpush2.msra.mxu0 0.0
    %4017 = vmatprep.subr.mxu0 0.0
    %4018 = vmatpush2.msra.mxu0 0.0
    %4019 = vmatprep.subr.mxu0 0.0
    %4020 = vmatpush2.msra.mxu0 0.0
    %4021 = vmatprep.subr.mxu0 0.0
    %4022 = vmatpush2.msra.mxu0 0.0
    %4023 = vmatprep.subr.mxu0 0.0
    %4024 = vmatpush2.msra.mxu0 0.0
    %4025 = vmatprep.subr.mxu0 0.0
    %4026 = vmatpush2.msra.mxu0 0.0
    %4027 = vmatprep.subr.mxu0 0.0
    %4028 = vmatpush2.msra.mxu0 %v3963
    %4029 = vmatprep.subr.mxu0 0.0
    %4030 = vmatpush2.msra.mxu0 %v3962
    %4031 = vmatprep.mubr.f32.mxu0 %v3965
    %4032 = vmatmul.mubr.f32.gmra.mxu0 %v3942
    %v4033 = vpop.f32.mrf.mxu0
    %v4034 = vadd.f32 0.0, %v4033
    %v4035 = vpop.f32.mrf.mxu0
    %4036 = vdwg.mxu0
    %4037 = vst.msk [vmem:[#allocation5] sm:$0x1f] %vm2019, %v4034
    %v4038 = vld [vmem:[#allocation5] sm:$0x1]
    %4039 = vst.msk [vmem:[#allocation6 + $0x1] sm:$0x1] %vm2022, %v4038
    %v4040 = vld [vmem:[#allocation5 + $0x1] sm:$0x1]
    %v4043 = vunpack.c.l.s4 1983009808
    %v4044 = vunpack.c.0.s8 %v4043
    %v4045 = vlaneseq
    %v4046 = vshrl.u32 %v4045, 7
    %v4047 = vsub.s32 %v4044, %v4046
    %v4048 = vrot.slane %v4040, %v4047
    %4049 = vrot.lane.b32.xlu0 %v4048, 80
    %v4050 = vpop.permute.xlu0 %4049
    %v4051 = vrot.slane %v4050, 6
    %v4052 = vsel %vm2036, %v4051, %v4050
    %4054 = vst.msk [vmem:[#allocation6 + $0x1] sm:$0x5] %vm2041, %v4052
    %v4055 = vld [vmem:[#allocation5 + $0x2] sm:$0x1]
    %v4058 = vunpack.c.l.s4 1983009808
    %v4059 = vunpack.c.0.s8 %v4058
    %v4060 = vlaneseq
    %v4061 = vshrl.u32 %v4060, 7
    %v4062 = vsub.s32 %v4059, %v4061
    %v4063 = vrot.slane %v4055, %v4062
    %4064 = vrot.lane.b32.xlu0 %v4063, 32
    %v4065 = vpop.permute.xlu0 %4064
    %4067 = vst.msk [vmem:[#allocation6 + $0x3] sm:$0x1] %vm2055, %v4065
    %v4068 = vld [vmem:[#allocation5 + $0x3] sm:$0x1]
    %v4071 = vunpack.c.l.s4 1983009808
    %v4072 = vunpack.c.0.s8 %v4071
    %v4073 = vlaneseq
    %v4074 = vshrl.u32 %v4073, 7
    %v4075 = vsub.s32 %v4072, %v4074
    %v4076 = vrot.slane %v4068, %v4075
    %4077 = vrot.lane.b32.xlu0 %v4076, 112
    %v4078 = vpop.permute.xlu0 %4077
    %v4079 = vrot.slane %v4078, 6
    %v4080 = vsel %vm1789, %v4079, %v4078
    %4082 = vst.msk [vmem:[#allocation6 + $0x3] sm:$0x5] %vm2073, %v4080
    %v4083 = vld [vmem:[#allocation5 + $0x4] sm:$0x1]
    %v4086 = vunpack.c.l.s4 1983009808
    %v4087 = vunpack.c.0.s8 %v4086
    %v4088 = vlaneseq
    %v4089 = vshrl.u32 %v4088, 7
    %v4090 = vsub.s32 %v4087, %v4089
    %v4091 = vrot.slane %v4083, %v4090
    %4092 = vrot.lane.b32.xlu0 %v4091, 64
    %v4093 = vpop.permute.xlu0 %4092
    %v4094 = vrot.slane %v4093, 6
    %v4095 = vsel %vm2087, %v4094, %v4093
    %4097 = vst.msk [vmem:[#allocation6 + $0x5] sm:$0x5] %vm2092, %v4095
    %v4098 = vld [vmem:[#allocation6] sm:$0xff]
    %v4100 = vcombine.high %v4098, %v4098
    %v4102 = vunpack.c.l.s4 1983009808
    %v4103 = vunpack.c.0.s8 %v4102
    %v4104 = vlaneseq
    %v4105 = vshrl.u32 %v4104, 7
    %v4106 = vsub.s32 %v4103, %v4105
    %v4107 = vrot.slane %v4098, %v4106
    %v4109 = vunpack.c.l.s4 1983009808
    %v4110 = vunpack.c.0.s8 %v4109
    %v4111 = vlaneseq
    %v4112 = vshrl.u32 %v4111, 7
    %v4113 = vsub.s32 %v4110, %v4112
    %v4114 = vrot.slane %v4100, %v4113
    %v4115 = vcombine.high %v4107, %v4107
    %v4116 = vcombine.high %v4114, %v4114
    %v4121 = vpack.c.bf16 %v4107, %v4107
    %v4122 = vpack.c.bf16 %v4115, %v4115
    %v4123 = vpack.c.bf16 %v4114, %v4114
    %v4124 = vpack.c.bf16 %v4116, %v4116
    %v4125 = vld [vmem:[%s9] sm:$0xf]
    %v4126 = vld [vmem:[%s9 + $0x4] sm:$0xf]
    %v4127 = vld [vmem:[%s9 + $0x8] sm:$0xf]
    %v4128 = vld [vmem:[%s9 + $0xc] sm:$0xf]
    %v4129 = vld [vmem:[%s9 + $0x10] sm:$0xf]
    %v4130 = vld [vmem:[%s9 + $0x14] sm:$0xf]
    %v4131 = vld [vmem:[%s9 + $0x18] sm:$0xf]
    %v4132 = vld [vmem:[%s9 + $0x1c] sm:$0xf]
    %v4133 = vld [vmem:[%s9 + $0x20] sm:$0xf]
    %v4134 = vld [vmem:[%s9 + $0x24] sm:$0xf]
    %v4135 = vld [vmem:[%s9 + $0x28] sm:$0xf]
    %v4136 = vld [vmem:[%s9 + $0x2c] sm:$0xf]
    %v4137 = vld [vmem:[%s9 + $0x30] sm:$0xf]
    %v4138 = vld [vmem:[%s9 + $0x34] sm:$0xf]
    %v4139 = vld [vmem:[%s9 + $0x38] sm:$0xf]
    %v4140 = vld [vmem:[%s9 + $0x3c] sm:$0xf]
    %v4141 = vld [vmem:[%s9 + $0x40] sm:$0xf]
    %v4142 = vld [vmem:[%s9 + $0x44] sm:$0xf]
    %v4143 = vld [vmem:[%s9 + $0x48] sm:$0xf]
    %v4144 = vld [vmem:[%s9 + $0x4c] sm:$0xf]
    %v4145 = vld [vmem:[%s9 + $0x50] sm:$0xf]
    %v4146 = vld [vmem:[%s9 + $0x54] sm:$0xf]
    %v4147 = vld [vmem:[%s9 + $0x58] sm:$0xf]
    %v4148 = vld [vmem:[%s9 + $0x5c] sm:$0xf]
    %v4149 = vld [vmem:[%s9 + $0x60] sm:$0xf]
    %v4150 = vld [vmem:[%s9 + $0x64] sm:$0xf]
    %v4151 = vld [vmem:[%s9 + $0x68] sm:$0xf]
    %v4152 = vld [vmem:[%s9 + $0x6c] sm:$0xf]
    %v4153 = vld [vmem:[%s9 + $0x70] sm:$0xf]
    %v4154 = vld [vmem:[%s9 + $0x74] sm:$0xf]
    %v4155 = vld [vmem:[%s9 + $0x78] sm:$0xf]
    %v4156 = vld [vmem:[%s9 + $0x7c] sm:$0xf]
    %v4157 = vld [vmem:[%s9 + $0x80] sm:$0xf]
    %v4158 = vld [vmem:[%s9 + $0x84] sm:$0xf]
    %v4159 = vld [vmem:[%s9 + $0x88] sm:$0xf]
    %v4160 = vld [vmem:[%s9 + $0x8c] sm:$0xf]
    %v4161 = vld [vmem:[%s9 + $0x90] sm:$0xf]
    %v4162 = vld [vmem:[%s9 + $0x94] sm:$0xf]
    %v4163 = vld [vmem:[%s9 + $0x98] sm:$0xf]
    %v4164 = vld [vmem:[%s9 + $0x9c] sm:$0xf]
    %v4165 = vld [vmem:[%s9 + $0xa0] sm:$0xf]
    %v4166 = vld [vmem:[%s9 + $0xa4] sm:$0xf]
    %v4167 = vld [vmem:[%s9 + $0xa8] sm:$0xf]
    %v4168 = vld [vmem:[%s9 + $0xac] sm:$0xf]
    %v4169 = vld [vmem:[%s9 + $0xb0] sm:$0xf]
    %v4170 = vld [vmem:[%s9 + $0xb4] sm:$0xf]
    %v4171 = vld [vmem:[%s9 + $0xb8] sm:$0xf]
    %v4172 = vld [vmem:[%s9 + $0xbc] sm:$0xf]
    %v4173 = vld [vmem:[%s9 + $0xc0] sm:$0xf]
    %v4174 = vld [vmem:[%s9 + $0xc4] sm:$0xf]
    %v4175 = vld [vmem:[%s10] sm:$0x1]
    %v4177 = vlaneseq
    %v4178 = vshrl.u32 %v4177, 7
    %v4179 = vsub.s32 0, %v4178
    %v4180 = vrot.slane %v4175, %v4179
    %v4232 = vunpack.c.l.b16 %v4125
    %v4233 = vunpack.c.l.b16 %v4126
    %v4234 = vunpack.c.l.b16 %v4127
    %v4235 = vunpack.c.l.b16 %v4128
    %v4236 = vunpack.c.l.b16 %v4129
    %v4237 = vunpack.c.l.b16 %v4130
    %v4238 = vunpack.c.l.b16 %v4131
    %v4239 = vunpack.c.l.b16 %v4132
    %v4240 = vunpack.c.l.b16 %v4133
    %v4241 = vunpack.c.l.b16 %v4134
    %v4242 = vunpack.c.l.b16 %v4135
    %v4243 = vunpack.c.l.b16 %v4136
    %v4244 = vunpack.c.l.b16 %v4137
    %v4245 = vunpack.c.l.b16 %v4138
    %v4246 = vunpack.c.l.b16 %v4139
    %v4247 = vunpack.c.l.b16 %v4140
    %v4248 = vunpack.c.l.b16 %v4141
    %v4249 = vunpack.c.l.b16 %v4142
    %v4250 = vunpack.c.l.b16 %v4143
    %v4251 = vunpack.c.l.b16 %v4144
    %v4252 = vunpack.c.l.b16 %v4145
    %v4253 = vunpack.c.l.b16 %v4146
    %v4254 = vunpack.c.l.b16 %v4147
    %v4255 = vunpack.c.l.b16 %v4148
    %v4256 = vunpack.c.l.b16 %v4149
    %v4257 = vunpack.c.l.b16 %v4150
    %v4258 = vunpack.c.l.b16 %v4151
    %v4259 = vunpack.c.l.b16 %v4152
    %v4260 = vunpack.c.l.b16 %v4153
    %v4261 = vunpack.c.l.b16 %v4154
    %v4262 = vunpack.c.l.b16 %v4155
    %v4263 = vunpack.c.l.b16 %v4156
    %v4264 = vunpack.c.l.b16 %v4157
    %v4265 = vunpack.c.l.b16 %v4158
    %v4266 = vunpack.c.l.b16 %v4159
    %v4267 = vunpack.c.l.b16 %v4160
    %v4268 = vunpack.c.l.b16 %v4161
    %v4269 = vunpack.c.l.b16 %v4162
    %v4270 = vunpack.c.l.b16 %v4163
    %v4271 = vunpack.c.l.b16 %v4164
    %v4272 = vunpack.c.l.b16 %v4165
    %v4273 = vunpack.c.l.b16 %v4166
    %v4274 = vunpack.c.l.b16 %v4167
    %v4275 = vunpack.c.l.b16 %v4168
    %v4276 = vunpack.c.l.b16 %v4169
    %v4277 = vunpack.c.l.b16 %v4170
    %v4278 = vunpack.c.l.b16 %v4171
    %v4279 = vunpack.c.l.b16 %v4172
    %v4280 = vunpack.c.l.b16 %v4173
    %v4281 = vunpack.c.l.b16 %v4174
    %v4282 = vpack.c.b16 %v4233, %v4232
    %v4283 = vpack.c.b16 %v4235, %v4234
    %v4284 = vpack.c.b16 %v4237, %v4236
    %v4285 = vpack.c.b16 %v4239, %v4238
    %v4286 = vpack.c.b16 %v4241, %v4240
    %v4287 = vpack.c.b16 %v4243, %v4242
    %v4288 = vpack.c.b16 %v4245, %v4244
    %v4289 = vpack.c.b16 %v4247, %v4246
    %v4290 = vpack.c.b16 %v4249, %v4248
    %v4291 = vpack.c.b16 %v4251, %v4250
    %v4292 = vpack.c.b16 %v4253, %v4252
    %v4293 = vpack.c.b16 %v4255, %v4254
    %v4294 = vpack.c.b16 %v4257, %v4256
    %v4295 = vpack.c.b16 %v4259, %v4258
    %v4296 = vpack.c.b16 %v4261, %v4260
    %v4297 = vpack.c.b16 %v4263, %v4262
    %v4298 = vpack.c.b16 %v4265, %v4264
    %v4299 = vpack.c.b16 %v4267, %v4266
    %v4300 = vpack.c.b16 %v4269, %v4268
    %v4301 = vpack.c.b16 %v4271, %v4270
    %v4302 = vpack.c.b16 %v4273, %v4272
    %v4303 = vpack.c.b16 %v4275, %v4274
    %v4304 = vpack.c.b16 %v4277, %v4276
    %v4305 = vpack.c.b16 %v4279, %v4278
    %v4306 = vpack.c.b16 %v4281, %v4280
    %v4333 = vsel %vm1945, %v4124, 0
    %4335 = vmatprep.subr.bf16.mxu0 0
    %4336 = vmatpush1.bf16.msra.mxu0 %v4289
    %4337 = vmatprep.subr.bf16.mxu0 0
    %4338 = vmatpush1.bf16.msra.mxu0 %v4288
    %4339 = vmatprep.subr.bf16.mxu0 0
    %4340 = vmatpush1.bf16.msra.mxu0 %v4287
    %4341 = vmatprep.subr.bf16.mxu0 0
    %4342 = vmatpush1.bf16.msra.mxu0 %v4286
    %4343 = vmatprep.subr.bf16.mxu0 0
    %4344 = vmatpush1.bf16.msra.mxu0 %v4285
    %4345 = vmatprep.subr.bf16.mxu0 0
    %4346 = vmatpush1.bf16.msra.mxu0 %v4284
    %4347 = vmatprep.subr.bf16.mxu0 0
    %4348 = vmatpush1.bf16.msra.mxu0 %v4283
    %4349 = vmatprep.subr.bf16.mxu0 0
    %4350 = vmatpush1.bf16.msra.mxu0 %v4282
    %4351 = vmatprep.subr.bf16.mxu0 0
    %4352 = vmatpush2.bf16.msra.mxu0 %v4297
    %4353 = vmatprep.subr.bf16.mxu0 0
    %4354 = vmatpush2.bf16.msra.mxu0 %v4296
    %4355 = vmatprep.subr.bf16.mxu0 0
    %4356 = vmatpush2.bf16.msra.mxu0 %v4295
    %4357 = vmatprep.subr.bf16.mxu0 0
    %4358 = vmatpush2.bf16.msra.mxu0 %v4294
    %4359 = vmatprep.subr.bf16.mxu0 0
    %4360 = vmatpush2.bf16.msra.mxu0 %v4293
    %4361 = vmatprep.subr.bf16.mxu0 0
    %4362 = vmatpush2.bf16.msra.mxu0 %v4292
    %4363 = vmatprep.subr.bf16.mxu0 0
    %4364 = vmatpush2.bf16.msra.mxu0 %v4291
    %4365 = vmatprep.subr.bf16.mxu0 0
    %4366 = vmatpush2.bf16.msra.mxu0 %v4290
    %4367 = vmatprep.mubr.bf16.mxu0 %v4122
    %4368 = vmatmul.mubr.bf16.gmra.mxu0 %v4121
    %v4369 = vpop.f32.mrf.mxu0
    %v4370 = vadd.f32 %v4180, %v4369
    %v4371 = vpop.f32.mrf.mxu0
    %v4372 = vpop.f32.mrf.mxu0
    %v4373 = vpop.f32.mrf.mxu0
    %4374 = vdwg.mxu0
    %4375 = vmatprep.subr.bf16.mxu0 0
    %4376 = vmatpush1.bf16.msra.mxu0 %v4305
    %4377 = vmatprep.subr.bf16.mxu0 0
    %4378 = vmatpush1.bf16.msra.mxu0 %v4304
    %4379 = vmatprep.subr.bf16.mxu0 0
    %4380 = vmatpush1.bf16.msra.mxu0 %v4303
    %4381 = vmatprep.subr.bf16.mxu0 0
    %4382 = vmatpush1.bf16.msra.mxu0 %v4302
    %4383 = vmatprep.subr.bf16.mxu0 0
    %4384 = vmatpush1.bf16.msra.mxu0 %v4301
    %4385 = vmatprep.subr.bf16.mxu0 0
    %4386 = vmatpush1.bf16.msra.mxu0 %v4300
    %4387 = vmatprep.subr.bf16.mxu0 0
    %4388 = vmatpush1.bf16.msra.mxu0 %v4299
    %4389 = vmatprep.subr.bf16.mxu0 0
    %4390 = vmatpush1.bf16.msra.mxu0 %v4298
    %4391 = vmatprep.subr.bf16.mxu0 0
    %4392 = vmatpush2.bf16.msra.mxu0 0
    %4393 = vmatprep.subr.bf16.mxu0 0
    %4394 = vmatpush2.bf16.msra.mxu0 0
    %4395 = vmatprep.subr.bf16.mxu0 0
    %4396 = vmatpush2.bf16.msra.mxu0 0
    %4397 = vmatprep.subr.bf16.mxu0 0
    %4398 = vmatpush2.bf16.msra.mxu0 0
    %4399 = vmatprep.subr.bf16.mxu0 0
    %4400 = vmatpush2.bf16.msra.mxu0 0
    %4401 = vmatprep.subr.bf16.mxu0 0
    %4402 = vmatpush2.bf16.msra.mxu0 0
    %4403 = vmatprep.subr.bf16.mxu0 0
    %4404 = vmatpush2.bf16.msra.mxu0 0
    %4405 = vmatprep.subr.bf16.mxu0 0
    %4406 = vmatpush2.bf16.msra.mxu0 %v4306
    %4407 = vmatprep.mubr.bf16.mxu0 %v4333
    %4408 = vmatmul.mubr.bf16.gmra.mxu0 %v4123
    %v4409 = vpop.f32.mrf.mxu0
    %v4410 = vadd.f32 %v4370, %v4409
    %v4411 = vpop.f32.mrf.mxu0
    %v4412 = vpop.f32.mrf.mxu0
    %v4413 = vpop.f32.mrf.mxu0
    %4414 = vdwg.mxu0
    %v4415 = vmax.f32 %v4410, 0.0
    %v4416 = vpack.c.bf16 %v4415, %v4415
    %v4417 = vld [vmem:[%s11] sm:$0xf]
    %v4418 = vld [vmem:[%s11 + $0x4] sm:$0xf]
    %v4419 = vld [vmem:[%s11 + $0x8] sm:$0xf]
    %v4420 = vld [vmem:[%s11 + $0xc] sm:$0xf]
    %v4421 = vld [vmem:[%s11 + $0x10] sm:$0xf]
    %v4422 = vld [vmem:[%s11 + $0x14] sm:$0xf]
    %v4423 = vld [vmem:[%s11 + $0x18] sm:$0xf]
    %v4424 = vld [vmem:[%s11 + $0x1c] sm:$0xf]
    %v4425 = vld [vmem:[%s11 + $0x20] sm:$0xf]
    %v4426 = vld [vmem:[%s11 + $0x24] sm:$0xf]
    %v4427 = vld [vmem:[%s11 + $0x28] sm:$0xf]
    %v4428 = vld [vmem:[%s11 + $0x2c] sm:$0xf]
    %v4429 = vld [vmem:[%s11 + $0x30] sm:$0xf]
    %v4430 = vld [vmem:[%s11 + $0x34] sm:$0xf]
    %v4431 = vld [vmem:[%s11 + $0x38] sm:$0xf]
    %v4432 = vld [vmem:[%s12] sm:$0x1]
    %v4434 = vlaneseq
    %v4435 = vshrl.u32 %v4434, 7
    %v4436 = vsub.s32 0, %v4435
    %v4437 = vrot.slane %v4432, %v4436
    %v4454 = vunpack.c.l.b16 %v4417
    %v4455 = vunpack.c.l.b16 %v4418
    %v4456 = vunpack.c.l.b16 %v4419
    %v4457 = vunpack.c.l.b16 %v4420
    %v4458 = vunpack.c.l.b16 %v4421
    %v4459 = vunpack.c.l.b16 %v4422
    %v4460 = vunpack.c.l.b16 %v4423
    %v4461 = vunpack.c.l.b16 %v4424
    %v4462 = vunpack.c.l.b16 %v4425
    %v4463 = vunpack.c.l.b16 %v4426
    %v4464 = vunpack.c.l.b16 %v4427
    %v4465 = vunpack.c.l.b16 %v4428
    %v4466 = vunpack.c.l.b16 %v4429
    %v4467 = vunpack.c.l.b16 %v4430
    %v4468 = vunpack.c.l.b16 %v4431
    %v4469 = vpack.c.b16 %v4455, %v4454
    %v4470 = vpack.c.b16 %v4457, %v4456
    %v4471 = vpack.c.b16 %v4459, %v4458
    %v4472 = vpack.c.b16 %v4461, %v4460
    %v4473 = vpack.c.b16 %v4463, %v4462
    %v4474 = vpack.c.b16 %v4465, %v4464
    %v4475 = vpack.c.b16 %v4467, %v4466
    %v4476 = vpack.c.b16 %v4468, %v4468
    %vm4484 = vcmask 982016
    %v4486 = vsel %vm4484, %v4416, 0
    %vm4488 = vcmask 1043456
    %v4490 = vsel %vm4488, %v4476, 0
    %4492 = vmatprep.subr.bf16.mxu0 0
    %4493 = vmatpush1.bf16.msra.mxu0 %v4490
    %4494 = vmatprep.subr.bf16.mxu0 0
    %4495 = vmatpush1.bf16.msra.mxu0 %v4475
    %4496 = vmatprep.subr.bf16.mxu0 0
    %4497 = vmatpush1.bf16.msra.mxu0 %v4474
    %4498 = vmatprep.subr.bf16.mxu0 0
    %4499 = vmatpush1.bf16.msra.mxu0 %v4473
    %4500 = vmatprep.subr.bf16.mxu0 0
    %4501 = vmatpush1.bf16.msra.mxu0 %v4472
    %4502 = vmatprep.subr.bf16.mxu0 0
    %4503 = vmatpush1.bf16.msra.mxu0 %v4471
    %4504 = vmatprep.subr.bf16.mxu0 0
    %4505 = vmatpush1.bf16.msra.mxu0 %v4470
    %4506 = vmatprep.subr.bf16.mxu0 0
    %4507 = vmatpush1.bf16.msra.mxu0 %v4469
    %4508 = vmatprep.subr.bf16.mxu0 0
    %4509 = vmatpush2.bf16.msra.mxu0 0
    %4510 = vmatprep.subr.bf16.mxu0 0
    %4511 = vmatpush2.bf16.msra.mxu0 0
    %4512 = vmatprep.subr.bf16.mxu0 0
    %4513 = vmatpush2.bf16.msra.mxu0 0
    %4514 = vmatprep.subr.bf16.mxu0 0
    %4515 = vmatpush2.bf16.msra.mxu0 0
    %4516 = vmatprep.subr.bf16.mxu0 0
    %4517 = vmatpush2.bf16.msra.mxu0 0
    %4518 = vmatprep.subr.bf16.mxu0 0
    %4519 = vmatpush2.bf16.msra.mxu0 0
    %4520 = vmatprep.subr.bf16.mxu0 0
    %4521 = vmatpush2.bf16.msra.mxu0 0
    %4522 = vmatprep.subr.bf16.mxu0 0
    %4523 = vmatpush2.bf16.msra.mxu0 0
    %4524 = vmatprep.mubr.bf16.mxu0 0
    %4525 = vmatmul.mubr.bf16.gmra.mxu0 %v4486
    %v4526 = vpop.f32.mrf.mxu0
    %v4527 = vadd.f32 %v4437, %v4526
    %v4528 = vpop.f32.mrf.mxu0
    %v4529 = vpop.f32.mrf.mxu0
    %v4530 = vpop.f32.mrf.mxu0
    %4531 = vdwg.mxu0
    %v4532 = vmax.f32 %v4527, 0.0
    %v4533 = vpack.c.bf16 %v4532, %v4532
    %v4534 = vld [vmem:[%s13] sm:$0xf]
    %v4535 = vld [vmem:[%s13 + $0x4] sm:$0xf]
    %v4536 = vld [vmem:[%s13 + $0x8] sm:$0xf]
    %v4537 = vld [vmem:[%s13 + $0xc] sm:$0xf]
    %v4538 = vld [vmem:[%s13 + $0x10] sm:$0xf]
    %v4539 = vld [vmem:[%s13 + $0x14] sm:$0xf]
    %v4540 = vld [vmem:[%s13 + $0x18] sm:$0xf]
    %v4541 = vld [vmem:[%s13 + $0x1c] sm:$0xf]
    %v4542 = vld [vmem:[%s13 + $0x20] sm:$0xf]
    %v4543 = vld [vmem:[%s13 + $0x24] sm:$0xf]
    %v4544 = vld [vmem:[%s13 + $0x28] sm:$0x3]
    %v4545 = vld [vmem:[%s14] sm:$0x1]
    %v4547 = vlaneseq
    %v4548 = vshrl.u32 %v4547, 7
    %v4549 = vsub.s32 0, %v4548
    %v4550 = vrot.slane %v4545, %v4549
    %v4563 = vunpack.c.l.b16 %v4534
    %v4564 = vunpack.c.l.b16 %v4535
    %v4565 = vunpack.c.l.b16 %v4536
    %v4566 = vunpack.c.l.b16 %v4537
    %v4567 = vunpack.c.l.b16 %v4538
    %v4568 = vunpack.c.l.b16 %v4539
    %v4569 = vunpack.c.l.b16 %v4540
    %v4570 = vunpack.c.l.b16 %v4541
    %v4571 = vunpack.c.l.b16 %v4542
    %v4572 = vunpack.c.l.b16 %v4543
    %v4573 = vunpack.c.l.b16 %v4544
    %v4574 = vpack.c.b16 %v4564, %v4563
    %v4575 = vpack.c.b16 %v4566, %v4565
    %v4576 = vpack.c.b16 %v4568, %v4567
    %v4577 = vpack.c.b16 %v4570, %v4569
    %v4578 = vpack.c.b16 %v4572, %v4571
    %v4579 = vpack.c.b16 %v4573, %v4573
    %v4586 = vsel %vm1122, %v4533, 0
    %v4589 = vsel %vm1043, %v4579, 0
    %4591 = vmatprep.subr.bf16.mxu0 0
    %4592 = vmatpush1.bf16.msra.mxu0 0
    %4593 = vmatprep.subr.bf16.mxu0 0
    %4594 = vmatpush1.bf16.msra.mxu0 0
    %4595 = vmatprep.subr.bf16.mxu0 0
    %4596 = vmatpush1.bf16.msra.mxu0 %v4589
    %4597 = vmatprep.subr.bf16.mxu0 0
    %4598 = vmatpush1.bf16.msra.mxu0 %v4578
    %4599 = vmatprep.subr.bf16.mxu0 0
    %4600 = vmatpush1.bf16.msra.mxu0 %v4577
    %4601 = vmatprep.subr.bf16.mxu0 0
    %4602 = vmatpush1.bf16.msra.mxu0 %v4576
    %4603 = vmatprep.subr.bf16.mxu0 0
    %4604 = vmatpush1.bf16.msra.mxu0 %v4575
    %4605 = vmatprep.subr.bf16.mxu0 0
    %4606 = vmatpush1.bf16.msra.mxu0 %v4574
    %4607 = vmatprep.subr.bf16.mxu0 0
    %4608 = vmatpush2.bf16.msra.mxu0 0
    %4609 = vmatprep.subr.bf16.mxu0 0
    %4610 = vmatpush2.bf16.msra.mxu0 0
    %4611 = vmatprep.subr.bf16.mxu0 0
    %4612 = vmatpush2.bf16.msra.mxu0 0
    %4613 = vmatprep.subr.bf16.mxu0 0
    %4614 = vmatpush2.bf16.msra.mxu0 0
    %4615 = vmatprep.subr.bf16.mxu0 0
    %4616 = vmatpush2.bf16.msra.mxu0 0
    %4617 = vmatprep.subr.bf16.mxu0 0
    %4618 = vmatpush2.bf16.msra.mxu0 0
    %4619 = vmatprep.subr.bf16.mxu0 0
    %4620 = vmatpush2.bf16.msra.mxu0 0
    %4621 = vmatprep.subr.bf16.mxu0 0
    %4622 = vmatpush2.bf16.msra.mxu0 0
    %4623 = vmatprep.mubr.bf16.mxu0 0
    %4624 = vmatmul.mubr.bf16.gmra.mxu0 %v4586
    %v4625 = vpop.f32.mrf.mxu0
    %v4626 = vadd.f32 %v4550, %v4625
    %v4627 = vpop.f32.mrf.mxu0
    %v4628 = vpop.f32.mrf.mxu0
    %v4629 = vpop.f32.mrf.mxu0
    %4630 = vdwg.mxu0
    %vm4631 = vcmask 74752
    %4632 = vst.msk [vmem:[#allocation7] sm:$0x3] %vm4631, %v4626
    // Predicated region
    $region62: #{net_forward.1} parent=1 // pred_check
      _
    $region63: #{net_forward.1} parent=1 // pred_check_branch
      %4634 = sbr.rel (0) target = $region65
    $region64: #{net_forward.1} parent=1 // pred_region
      %s4636 = ssub.s32 32, 32
      %4637 = vsyncadd [#allocation8], %s4636
      %s4639 = sshll.u32 [#allocation7], 4
      %s4640 = int_to_ptr.vmem [resolvable:$true] %s4639
      %4642 = dma.vmem_to_hbm [thread:$0]  %s4640, 32, %s15, [#allocation8]
    $region65: #{net_forward.1} parent=1 // pred_fallthru
      _
    // Predicated region
    $region66: #{net_forward.1} parent=1 // pred_check
      _
    $region67: #{net_forward.1} parent=1 // pred_check_branch
      %4644 = sbr.rel (0) target = $region69
    $region68: #{net_forward.1} parent=1 // pred_region
      %4645 = dma.done [#allocation8], 32
    $region69: #{net_forward.1} parent=1 // pred_fallthru
      _
    %4646 = vsyncpa [#allocation8], 1

</llo_original>
